<compile_context>
chip_gen: v7x
topology: tpu7x:2x2x1
jax: 0.10.0
libtpu: 0.0.40
codegen_flags: <defaults>
</compile_context>

<pallas_src>
import functools

import jax
import jax.numpy as jnp
import numpy as np
from jax import lax
from jax.experimental import pallas as pl
from jax.experimental.pallas import tpu as pltpu


def _round_up(n, m):
    return (n + m - 1) // m * m


def _sigmoid(x):
    # tanh-based sigmoid: one EUP transcendental per element (vs exp + recip).
    return 0.5 * jnp.tanh(0.5 * x) + 0.5


def rnn_kernel(T, Tc, TB, H, G, n_layer, x_ref, *args):
    """Multi-layer LSTM + classifier on one batch tile.

    args: per-layer (wih, whh, bias) refs, wc, bc, out_ref, then scratch:
      proj_sc  (Tc, TB, G) f32  -- hoisted x @ W_ih + b for one time chunk
      gates_sc (TB, G)     f32  -- per-step pre-activations staged in VMEM
      h_sc     (TB, H)     f32  -- hidden state
      c_sc     (TB, H)     f32  -- cell state
      seq_sc   (T, TB, H)  bf16 -- layer output sequence (only if n_layer > 1)
    """
    n_w = 3 * n_layer
    layer_refs = [tuple(args[3 * l:3 * l + 3]) for l in range(n_layer)]
    wc_ref, bc_ref, out_ref = args[n_w], args[n_w + 1], args[n_w + 2]
    proj_sc, gates_sc, h_sc, c_sc = args[n_w + 3:n_w + 7]
    seq_sc = args[n_w + 7] if n_layer > 1 else None

    n_chunks = T // Tc
    unroll = Tc if Tc <= 8 else 4

    for l, (wih_ref, whh_ref, b_ref) in enumerate(layer_refs):
        is_last = l == n_layer - 1
        h_sc[...] = jnp.zeros_like(h_sc)
        c_sc[...] = jnp.zeros_like(c_sc)

        def chunk_body(ci, carry, wih_ref=wih_ref, whh_ref=whh_ref,
                       b_ref=b_ref, l=l, is_last=is_last):
            # ---- hoisted input projection for Tc timesteps: one large MXU
            # matmul, combined bias folded in once (not per step) ----
            if n_chunks == 1:
                t0 = 0
                xin = x_ref[...] if l == 0 else seq_sc[...]
            else:
                t0 = pl.multiple_of(ci * Tc, Tc)
                src = x_ref if l == 0 else seq_sc
                xin = src[pl.ds(t0, Tc)]
            d_in = xin.shape[-1]
            proj = jnp.dot(xin.reshape(Tc * TB, d_in), wih_ref[...],
                           preferred_element_type=jnp.float32)
            proj_sc[...] = (proj + b_ref[...]).reshape(Tc, TB, G)

            # ---- serial recurrence: only the h-path matmul + gate math ----
            def step(tt, inner_carry):
                gates = jnp.dot(h_sc[...].astype(jnp.bfloat16), whh_ref[...],
                                preferred_element_type=jnp.float32)
                # Stage pre-activations in VMEM; gate slices are consumed one
                # at a time (fused into the c/h update) so vreg pressure stays
                # ~O(TB*H) even at TB=128/256.
                gates_sc[...] = gates + proj_sc[tt]
                # torch gate order (i, f, g, o), contiguous stride H
                i_g = _sigmoid(gates_sc[:, 0 * H:1 * H])
                f_g = _sigmoid(gates_sc[:, 1 * H:2 * H])
                g_g = jnp.tanh(gates_sc[:, 2 * H:3 * H])
                c_new = f_g * c_sc[...] + i_g * g_g
                c_sc[...] = c_new
                o_g = _sigmoid(gates_sc[:, 3 * H:4 * H])
                h_new = o_g * jnp.tanh(c_new)
                h_sc[...] = h_new
                if not is_last:         # top layer: classifier only needs h_T
                    seq_sc[t0 + tt] = h_new.astype(jnp.bfloat16)
                return inner_carry

            lax.fori_loop(0, Tc, step, None, unroll=unroll)
            return carry

        if n_chunks == 1:
            chunk_body(0, None)
        else:
            lax.fori_loop(0, n_chunks, chunk_body, None)

    # classifier on the final hidden state, into a lane-dense padded block
    out_ref[...] = (jnp.dot(h_sc[...].astype(jnp.bfloat16), wc_ref[...],
                            preferred_element_type=jnp.float32) + bc_ref[...])


def _pad_cols(m, cols):
    return jnp.pad(m, ((0, 0), (0, cols - m.shape[1])))


def _pick_batch_tile(B, cap=256):
    """Largest sublane-friendly divisor of B up to `cap`; prefer an even batch
    grid (2 TensorCores on v7x) when it keeps the tile MXU-sized (>= 64)."""
    if B <= cap:
        tb = B
    else:
        cands = [d for d in range(cap, 0, -1) if B % d == 0 and d % 8 == 0]
        tb = cands[0] if cands else B
    if (B // tb) % 2 == 1 and tb % 16 == 0 and tb // 2 >= 64:
        tb //= 2
    return tb


def _pick_time_chunk(T, cap=64):
    return next(d for d in range(min(T, cap), 0, -1) if T % d == 0)


def rnn_forward(x, params, *, batch_tile=None, time_chunk=None):
    """x: (B, T, D) float32 batch-first. Returns (B, n_class) float32."""
    B, T, D = x.shape
    L = len(params["wih_t"])
    H = params["whh_t"][0].shape[0]
    C = params["bc"].shape[-1]
    G = _round_up(4 * H, 128)      # gate axis padded to a lane multiple only
    Cp = _round_up(C, 128)         # lane-dense classifier output

    TB = batch_tile if batch_tile is not None else _pick_batch_tile(B)
    assert B % TB == 0
    Tc = time_chunk if time_chunk is not None else _pick_time_chunk(T)
    assert T % Tc == 0

    # time-major bf16 input so the kernel fetches whole timesteps with ref[t]
    x_tm = jnp.transpose(x, (1, 0, 2)).astype(jnp.bfloat16)

    inputs = [x_tm]
    in_specs = [pl.BlockSpec((T, TB, D), lambda i: (0, i, 0))]
    for l in range(L):
        wih = _pad_cols(params["wih_t"][l], G).astype(jnp.bfloat16)   # (d_in, G)
        whh = _pad_cols(params["whh_t"][l], G).astype(jnp.bfloat16)   # (H, G)
        b = _pad_cols(params["b"][l], G).astype(jnp.float32)          # (1, G)
        inputs += [wih, whh, b]
        d_in = wih.shape[0]
        in_specs += [pl.BlockSpec((d_in, G), lambda i: (0, 0)),
                     pl.BlockSpec((H, G), lambda i: (0, 0)),
                     pl.BlockSpec((1, G), lambda i: (0, 0))]
    wc = _pad_cols(params["wc_t"], Cp).astype(jnp.bfloat16)           # (H, Cp)
    bc = _pad_cols(params["bc"], Cp).astype(jnp.float32)              # (1, Cp)
    inputs += [wc, bc]
    in_specs += [pl.BlockSpec((H, Cp), lambda i: (0, 0)),
                 pl.BlockSpec((1, Cp), lambda i: (0, 0))]

    # ---- generation-aware VMEM budget ----
    try:
        vmem_cap = int(pltpu.get_tpu_info().vmem_capacity_bytes)
    except Exception:   # unknown runtime / interpret mode: assume v7x's 64 MiB
        vmem_cap = 64 * 2 ** 20
    budget = int(0.9 * vmem_cap)
    w_bytes = sum(int(np.prod(a.shape)) * a.dtype.itemsize for a in inputs[1:])

    def vmem_need(tc):
        x_blk = T * TB * D * 2                       # bf16 input block
        out_blk = TB * Cp * 4                        # f32 output block
        scratch = (4 * tc * TB * G                   # proj_sc (f32)
                   + 4 * TB * G                      # gates_sc (f32)
                   + 2 * 4 * TB * H                  # h_sc, c_sc (f32)
                   + (2 * T * TB * H if L > 1 else 0))   # seq_sc (bf16)
        # inputs/outputs are double-buffered by the pipeliner, scratch is not
        return 2 * x_blk + 2 * w_bytes + 2 * out_blk + scratch

    while vmem_need(Tc) > budget and Tc % 2 == 0 and Tc > 1:
        Tc //= 2                                     # shrink proj chunk to fit
    vmem_limit = int(min(budget, max(32 * 2 ** 20, int(1.2 * vmem_need(Tc)))))

    scratch_shapes = [
        pltpu.VMEM((Tc, TB, G), jnp.float32),    # proj_sc
        pltpu.VMEM((TB, G), jnp.float32),        # gates_sc
        pltpu.VMEM((TB, H), jnp.float32),        # h_sc
        pltpu.VMEM((TB, H), jnp.float32),        # c_sc
    ]
    if L > 1:
        scratch_shapes.append(pltpu.VMEM((T, TB, H), jnp.bfloat16))   # seq_sc

    out_pad = pl.pallas_call(
        functools.partial(rnn_kernel, T, Tc, TB, H, G, L),
        out_shape=jax.ShapeDtypeStruct((B, Cp), jnp.float32),
        grid_spec=pltpu.PrefetchScalarGridSpec(
            num_scalar_prefetch=0,
            grid=(B // TB,),                         # batch tiles
            in_specs=in_specs,
            out_specs=pl.BlockSpec((TB, Cp), lambda i: (i, 0)),
            scratch_shapes=scratch_shapes),
        compiler_params=pltpu.CompilerParams(
            dimension_semantics=("parallel",),       # batch shards across TCs
            vmem_limit_bytes=vmem_limit),
    )(*inputs)
    return out_pad[:, :C]


def init_params(key, in_dim, hidden_dim, n_layer, n_class):
    """PyTorch-style LSTM/Linear parameters (fp32, torch gate order i,f,g,o)."""
    k = 1.0 / np.sqrt(hidden_dim)
    params = {"wih_t": [], "whh_t": [], "b": []}
    for l in range(n_layer):
        d_in = in_dim if l == 0 else hidden_dim
        key, k1, k2, k3, k4 = jax.random.split(key, 5)
        w_ih = jax.random.uniform(k1, (4 * hidden_dim, d_in), jnp.float32, -k, k)
        w_hh = jax.random.uniform(k2, (4 * hidden_dim, hidden_dim), jnp.float32, -k, k)
        b_ih = jax.random.uniform(k3, (4 * hidden_dim,), jnp.float32, -k, k)
        b_hh = jax.random.uniform(k4, (4 * hidden_dim,), jnp.float32, -k, k)
        params["wih_t"].append(w_ih.T)                      # (d_in, 4H)
        params["whh_t"].append(w_hh.T)                      # (H, 4H)
        params["b"].append((b_ih + b_hh).reshape(1, -1))    # (1, 4H)
    key, k1, k2 = jax.random.split(key, 3)
    w_c = jax.random.uniform(k1, (n_class, hidden_dim), jnp.float32, -k, k)
    b_c = jax.random.uniform(k2, (n_class,), jnp.float32, -k, k)
    params["wc_t"] = w_c.T                                  # (H, C)
    params["bc"] = b_c.reshape(1, -1)                       # (1, C)
    return params


def rnn_reference(x, params):
    """Pure-JAX reference of the same forward pass, mirroring the kernel's
    mixed-precision policy (bf16 matmul operands, fp32 accumulation/state)."""
    B, T, _ = x.shape
    L = len(params["wih_t"])
    H = params["whh_t"][0].shape[0]
    seq = x
    for l in range(L):
        wih = params["wih_t"][l].astype(jnp.bfloat16)
        whh = params["whh_t"][l].astype(jnp.bfloat16)
        bias = params["b"][l]
        h = jnp.zeros((B, H), jnp.float32)
        c = jnp.zeros((B, H), jnp.float32)
        outs = []
        for t in range(T):
            gates = (jnp.dot(seq[:, t, :].astype(jnp.bfloat16), wih,
                             preferred_element_type=jnp.float32)
                     + jnp.dot(h.astype(jnp.bfloat16), whh,
                               preferred_element_type=jnp.float32)
                     + bias)
            i = _sigmoid(gates[:, 0 * H:1 * H])
            f = _sigmoid(gates[:, 1 * H:2 * H])
            g = jnp.tanh(gates[:, 2 * H:3 * H])
            o = _sigmoid(gates[:, 3 * H:4 * H])
            c = f * c + i * g
            h = o * jnp.tanh(c)
            outs.append(h)
        seq = jnp.stack(outs, axis=1)
    return (jnp.dot(seq[:, -1, :].astype(jnp.bfloat16),
                    params["wc_t"].astype(jnp.bfloat16),
                    preferred_element_type=jnp.float32) + params["bc"])


if __name__ == "__main__":
    # x: (batch, seq_len, in_dim); LSTM(in_dim, hidden_dim, n_layer); Linear -> n_class
    B, T, D, H, L, C = 16, 8, 16, 32, 2, 10

    key = jax.random.PRNGKey(0)
    key, kx = jax.random.split(key)
    x = jax.random.normal(kx, (B, T, D), jnp.float32)
    params = init_params(key, D, H, L, C)

    out = jax.block_until_ready(rnn_forward(x, params))
    ref = jax.block_until_ready(rnn_reference(x, params))

    assert out.shape == (B, C), out.shape
    np.testing.assert_allclose(np.asarray(out), np.asarray(ref),
                               atol=2e-3, rtol=2e-3)
    print("KERNEL_OK")
</pallas_src>

<mosaic_0001>
module attributes {stable_mosaic.version = 11 : i64} {
  func.func @rnn_kernel(%arg0: i32, %arg1: memref<8x16x16xbf16, #tpu.memory_space<vmem>>, %arg2: memref<16x128xbf16, #tpu.memory_space<vmem>>, %arg3: memref<32x128xbf16, #tpu.memory_space<vmem>>, %arg4: memref<1x128xf32, #tpu.memory_space<vmem>>, %arg5: memref<32x128xbf16, #tpu.memory_space<vmem>>, %arg6: memref<32x128xbf16, #tpu.memory_space<vmem>>, %arg7: memref<1x128xf32, #tpu.memory_space<vmem>>, %arg8: memref<32x128xbf16, #tpu.memory_space<vmem>>, %arg9: memref<1x128xf32, #tpu.memory_space<vmem>>, %arg10: memref<16x128xf32, #tpu.memory_space<vmem>>, %arg11: memref<8x16x128xf32, #tpu.memory_space<vmem>>, %arg12: memref<16x128xf32, #tpu.memory_space<vmem>>, %arg13: memref<16x32xf32, #tpu.memory_space<vmem>>, %arg14: memref<16x32xf32, #tpu.memory_space<vmem>>, %arg15: memref<8x16x32xbf16, #tpu.memory_space<vmem>>) attributes {dimension_semantics = [#tpu.dimension_semantics<parallel>], iteration_bounds = array<i64: 1>, scalar_prefetch = 0 : i64, scratch_operands = 5 : i64, tpu.core_type = #tpu.core_type<tc>, window_params = [{transform_indices = @transform_0, window_bounds = array<i64: 8, 16, 16>}, {pipeline_mode = #tpu.pipeline_mode<synchronous>, transform_indices = @transform_1, window_bounds = array<i64: 16, 128>}, {pipeline_mode = #tpu.pipeline_mode<synchronous>, transform_indices = @transform_2, window_bounds = array<i64: 32, 128>}, {pipeline_mode = #tpu.pipeline_mode<synchronous>, transform_indices = @transform_3, window_bounds = array<i64: 1, 128>}, {pipeline_mode = #tpu.pipeline_mode<synchronous>, transform_indices = @transform_4, window_bounds = array<i64: 32, 128>}, {pipeline_mode = #tpu.pipeline_mode<synchronous>, transform_indices = @transform_5, window_bounds = array<i64: 32, 128>}, {pipeline_mode = #tpu.pipeline_mode<synchronous>, transform_indices = @transform_6, window_bounds = array<i64: 1, 128>}, {pipeline_mode = #tpu.pipeline_mode<synchronous>, transform_indices = @transform_7, window_bounds = array<i64: 32, 128>}, {pipeline_mode = #tpu.pipeline_mode<synchronous>, transform_indices = @transform_8, window_bounds = array<i64: 1, 128>}, {transform_indices = @transform_9, window_bounds = array<i64: 16, 128>}]} {
    %cst = arith.constant 0.000000e+00 : f32
    %0 = vector.broadcast %cst : f32 to vector<16x32xf32>
    %c0 = arith.constant 0 : index
    %c0_0 = arith.constant 0 : index
    %1 = vector.load %arg13[%c0, %c0_0] : memref<16x32xf32, #tpu.memory_space<vmem>>, vector<16x32xf32>
    tpu.vector_store %arg13[%c0, %c0_0], %0 {strides = array<i32>} : memref<16x32xf32, #tpu.memory_space<vmem>>, vector<16x32xf32>,
    %cst_1 = arith.constant 0.000000e+00 : f32
    %2 = vector.broadcast %cst_1 : f32 to vector<16x32xf32>
    %c0_2 = arith.constant 0 : index
    %c0_3 = arith.constant 0 : index
    %3 = vector.load %arg14[%c0_2, %c0_3] : memref<16x32xf32, #tpu.memory_space<vmem>>, vector<16x32xf32>
    tpu.vector_store %arg14[%c0_2, %c0_3], %2 {strides = array<i32>} : memref<16x32xf32, #tpu.memory_space<vmem>>, vector<16x32xf32>,
    %c0_4 = arith.constant 0 : index
    %c0_5 = arith.constant 0 : index
    %c0_6 = arith.constant 0 : index
    %4 = vector.load %arg1[%c0_4, %c0_5, %c0_6] : memref<8x16x16xbf16, #tpu.memory_space<vmem>>, vector<8x16x16xbf16>
    %5 = vector.shape_cast %4 : vector<8x16x16xbf16> to vector<128x16xbf16>
    %c0_7 = arith.constant 0 : index
    %c0_8 = arith.constant 0 : index
    %6 = vector.load %arg2[%c0_7, %c0_8] : memref<16x128xbf16, #tpu.memory_space<vmem>>, vector<16x128xbf16>
    %cst_9 = arith.constant dense<0.000000e+00> : vector<128x128xf32>
    %7 = tpu.matmul %5, %6, %cst_9 {dimension_numbers = #tpu.dot_dimension_numbers<[1], [0], [0], [1], [0, 0, 1, 1], [], []>} : vector<128x16xbf16>, vector<16x128xbf16>, vector<128x128xf32> -> vector<128x128xf32>
    %c0_10 = arith.constant 0 : index
    %c0_11 = arith.constant 0 : index
    %8 = vector.load %arg4[%c0_10, %c0_11] : memref<1x128xf32, #tpu.memory_space<vmem>>, vector<1x128xf32>
    %9 = vector.broadcast %8 : vector<1x128xf32> to vector<128x128xf32>
    %10 = arith.addf %7, %9 : vector<128x128xf32>
    %11 = vector.shape_cast %10 : vector<128x128xf32> to vector<8x16x128xf32>
    %c0_12 = arith.constant 0 : index
    %c0_13 = arith.constant 0 : index
    %c0_14 = arith.constant 0 : index
    %12 = vector.load %arg11[%c0_12, %c0_13, %c0_14] : memref<8x16x128xf32, #tpu.memory_space<vmem>>, vector<8x16x128xf32>
    tpu.vector_store %arg11[%c0_12, %c0_13, %c0_14], %11 {strides = array<i32>} : memref<8x16x128xf32, #tpu.memory_space<vmem>>, vector<8x16x128xf32>,
    %c0_i32 = arith.constant 0 : i32
    %c0_15 = arith.constant 0 : index
    %c0_16 = arith.constant 0 : index
    %13 = vector.load %arg13[%c0_15, %c0_16] : memref<16x32xf32, #tpu.memory_space<vmem>>, vector<16x32xf32>
    %14 = arith.truncf %13 : vector<16x32xf32> to vector<16x32xbf16>
    %c0_17 = arith.constant 0 : index
    %c0_18 = arith.constant 0 : index
    %15 = vector.load %arg3[%c0_17, %c0_18] : memref<32x128xbf16, #tpu.memory_space<vmem>>, vector<32x128xbf16>
    %cst_19 = arith.constant dense<0.000000e+00> : vector<16x128xf32>
    %16 = tpu.matmul %14, %15, %cst_19 {dimension_numbers = #tpu.dot_dimension_numbers<[1], [0], [0], [1], [0, 0, 1, 1], [], []>} : vector<16x32xbf16>, vector<32x128xbf16>, vector<16x128xf32> -> vector<16x128xf32>
    %17 = arith.index_cast %c0_i32 : i32 to index
    %c0_20 = arith.constant 0 : index
    %c0_21 = arith.constant 0 : index
    %18 = vector.load %arg11[%17, %c0_20, %c0_21] : memref<8x16x128xf32, #tpu.memory_space<vmem>>, vector<1x16x128xf32>
    %19 = vector.shape_cast %18 : vector<1x16x128xf32> to vector<16x128xf32>
    %20 = arith.addf %16, %19 : vector<16x128xf32>
    %c0_22 = arith.constant 0 : index
    %c0_23 = arith.constant 0 : index
    %21 = vector.load %arg12[%c0_22, %c0_23] : memref<16x128xf32, #tpu.memory_space<vmem>>, vector<16x128xf32>
    tpu.vector_store %arg12[%c0_22, %c0_23], %20 {strides = array<i32>} : memref<16x128xf32, #tpu.memory_space<vmem>>, vector<16x128xf32>,
    %c0_24 = arith.constant 0 : index
    %c0_25 = arith.constant 0 : index
    %22 = vector.load %arg12[%c0_24, %c0_25] : memref<16x128xf32, #tpu.memory_space<vmem>>, vector<16x32xf32>
    %cst_26 = arith.constant 5.000000e-01 : f32
    %23 = vector.broadcast %cst_26 : f32 to vector<16x32xf32>
    %24 = arith.mulf %23, %22 : vector<16x32xf32>
    %25 = math.tanh %24 : vector<16x32xf32>
    %cst_27 = arith.constant 5.000000e-01 : f32
    %26 = vector.broadcast %cst_27 : f32 to vector<16x32xf32>
    %27 = arith.mulf %26, %25 : vector<16x32xf32>
    %cst_28 = arith.constant 5.000000e-01 : f32
    %28 = vector.broadcast %cst_28 : f32 to vector<16x32xf32>
    %29 = arith.addf %27, %28 : vector<16x32xf32>
    %c0_29 = arith.constant 0 : index
    %c32 = arith.constant 32 : index
    %30 = vector.load %arg12[%c0_29, %c32] : memref<16x128xf32, #tpu.memory_space<vmem>>, vector<16x32xf32>
    %cst_30 = arith.constant 5.000000e-01 : f32
    %31 = vector.broadcast %cst_30 : f32 to vector<16x32xf32>
    %32 = arith.mulf %31, %30 : vector<16x32xf32>
    %33 = math.tanh %32 : vector<16x32xf32>
    %cst_31 = arith.constant 5.000000e-01 : f32
    %34 = vector.broadcast %cst_31 : f32 to vector<16x32xf32>
    %35 = arith.mulf %34, %33 : vector<16x32xf32>
    %cst_32 = arith.constant 5.000000e-01 : f32
    %36 = vector.broadcast %cst_32 : f32 to vector<16x32xf32>
    %37 = arith.addf %35, %36 : vector<16x32xf32>
    %c0_33 = arith.constant 0 : index
    %c64 = arith.constant 64 : index
    %38 = vector.load %arg12[%c0_33, %c64] : memref<16x128xf32, #tpu.memory_space<vmem>>, vector<16x32xf32>
    %39 = math.tanh %38 : vector<16x32xf32>
    %c0_34 = arith.constant 0 : index
    %c0_35 = arith.constant 0 : index
    %40 = vector.load %arg14[%c0_34, %c0_35] : memref<16x32xf32, #tpu.memory_space<vmem>>, vector<16x32xf32>
    %41 = arith.mulf %37, %40 : vector<16x32xf32>
    %42 = arith.mulf %29, %39 : vector<16x32xf32>
    %43 = arith.addf %41, %42 : vector<16x32xf32>
    %c0_36 = arith.constant 0 : index
    %c0_37 = arith.constant 0 : index
    %44 = vector.load %arg14[%c0_36, %c0_37] : memref<16x32xf32, #tpu.memory_space<vmem>>, vector<16x32xf32>
    tpu.vector_store %arg14[%c0_36, %c0_37], %43 {strides = array<i32>} : memref<16x32xf32, #tpu.memory_space<vmem>>, vector<16x32xf32>,
    %c0_38 = arith.constant 0 : index
    %c96 = arith.constant 96 : index
    %45 = vector.load %arg12[%c0_38, %c96] : memref<16x128xf32, #tpu.memory_space<vmem>>, vector<16x32xf32>
    %cst_39 = arith.constant 5.000000e-01 : f32
    %46 = vector.broadcast %cst_39 : f32 to vector<16x32xf32>
    %47 = arith.mulf %46, %45 : vector<16x32xf32>
    %48 = math.tanh %47 : vector<16x32xf32>
    %cst_40 = arith.constant 5.000000e-01 : f32
    %49 = vector.broadcast %cst_40 : f32 to vector<16x32xf32>
    %50 = arith.mulf %49, %48 : vector<16x32xf32>
    %cst_41 = arith.constant 5.000000e-01 : f32
    %51 = vector.broadcast %cst_41 : f32 to vector<16x32xf32>
    %52 = arith.addf %50, %51 : vector<16x32xf32>
    %53 = math.tanh %43 : vector<16x32xf32>
    %54 = arith.mulf %52, %53 : vector<16x32xf32>
    %c0_42 = arith.constant 0 : index
    %c0_43 = arith.constant 0 : index
    %55 = vector.load %arg13[%c0_42, %c0_43] : memref<16x32xf32, #tpu.memory_space<vmem>>, vector<16x32xf32>
    tpu.vector_store %arg13[%c0_42, %c0_43], %54 {strides = array<i32>} : memref<16x32xf32, #tpu.memory_space<vmem>>, vector<16x32xf32>,
    %56 = arith.truncf %54 : vector<16x32xf32> to vector<16x32xbf16>
    %c0_i32_44 = arith.constant 0 : i32
    %57 = arith.addi %c0_i32_44, %c0_i32 : i32
    %58 = arith.index_cast %57 : i32 to index
    %c0_45 = arith.constant 0 : index
    %c0_46 = arith.constant 0 : index
    %59 = vector.load %arg15[%58, %c0_45, %c0_46] : memref<8x16x32xbf16, #tpu.memory_space<vmem>>, vector<1x16x32xbf16>
    %60 = vector.shape_cast %59 : vector<1x16x32xbf16> to vector<16x32xbf16>
    %61 = vector.shape_cast %56 : vector<16x32xbf16> to vector<1x16x32xbf16>
    tpu.vector_store %arg15[%58, %c0_45, %c0_46], %61 {strides = array<i32>} : memref<8x16x32xbf16, #tpu.memory_space<vmem>>, vector<1x16x32xbf16>,
    %c1_i32 = arith.constant 1 : i32
    %c0_47 = arith.constant 0 : index
    %c0_48 = arith.constant 0 : index
    %62 = vector.load %arg13[%c0_47, %c0_48] : memref<16x32xf32, #tpu.memory_space<vmem>>, vector<16x32xf32>
    %63 = arith.truncf %62 : vector<16x32xf32> to vector<16x32xbf16>
    %c0_49 = arith.constant 0 : index
    %c0_50 = arith.constant 0 : index
    %64 = vector.load %arg3[%c0_49, %c0_50] : memref<32x128xbf16, #tpu.memory_space<vmem>>, vector<32x128xbf16>
    %cst_51 = arith.constant dense<0.000000e+00> : vector<16x128xf32>
    %65 = tpu.matmul %63, %64, %cst_51 {dimension_numbers = #tpu.dot_dimension_numbers<[1], [0], [0], [1], [0, 0, 1, 1], [], []>} : vector<16x32xbf16>, vector<32x128xbf16>, vector<16x128xf32> -> vector<16x128xf32>
    %66 = arith.index_cast %c1_i32 : i32 to index
    %c0_52 = arith.constant 0 : index
    %c0_53 = arith.constant 0 : index
    %67 = vector.load %arg11[%66, %c0_52, %c0_53] : memref<8x16x128xf32, #tpu.memory_space<vmem>>, vector<1x16x128xf32>
    %68 = vector.shape_cast %67 : vector<1x16x128xf32> to vector<16x128xf32>
    %69 = arith.addf %65, %68 : vector<16x128xf32>
    %c0_54 = arith.constant 0 : index
    %c0_55 = arith.constant 0 : index
    %70 = vector.load %arg12[%c0_54, %c0_55] : memref<16x128xf32, #tpu.memory_space<vmem>>, vector<16x128xf32>
    tpu.vector_store %arg12[%c0_54, %c0_55], %69 {strides = array<i32>} : memref<16x128xf32, #tpu.memory_space<vmem>>, vector<16x128xf32>,
    %c0_56 = arith.constant 0 : index
    %c0_57 = arith.constant 0 : index
    %71 = vector.load %arg12[%c0_56, %c0_57] : memref<16x128xf32, #tpu.memory_space<vmem>>, vector<16x32xf32>
    %cst_58 = arith.constant 5.000000e-01 : f32
    %72 = vector.broadcast %cst_58 : f32 to vector<16x32xf32>
    %73 = arith.mulf %72, %71 : vector<16x32xf32>
    %74 = math.tanh %73 : vector<16x32xf32>
    %cst_59 = arith.constant 5.000000e-01 : f32
    %75 = vector.broadcast %cst_59 : f32 to vector<16x32xf32>
    %76 = arith.mulf %75, %74 : vector<16x32xf32>
    %cst_60 = arith.constant 5.000000e-01 : f32
    %77 = vector.broadcast %cst_60 : f32 to vector<16x32xf32>
    %78 = arith.addf %76, %77 : vector<16x32xf32>
    %c0_61 = arith.constant 0 : index
    %c32_62 = arith.constant 32 : index
    %79 = vector.load %arg12[%c0_61, %c32_62] : memref<16x128xf32, #tpu.memory_space<vmem>>, vector<16x32xf32>
    %cst_63 = arith.constant 5.000000e-01 : f32
    %80 = vector.broadcast %cst_63 : f32 to vector<16x32xf32>
    %81 = arith.mulf %80, %79 : vector<16x32xf32>
    %82 = math.tanh %81 : vector<16x32xf32>
    %cst_64 = arith.constant 5.000000e-01 : f32
    %83 = vector.broadcast %cst_64 : f32 to vector<16x32xf32>
    %84 = arith.mulf %83, %82 : vector<16x32xf32>
    %cst_65 = arith.constant 5.000000e-01 : f32
    %85 = vector.broadcast %cst_65 : f32 to vector<16x32xf32>
    %86 = arith.addf %84, %85 : vector<16x32xf32>
    %c0_66 = arith.constant 0 : index
    %c64_67 = arith.constant 64 : index
    %87 = vector.load %arg12[%c0_66, %c64_67] : memref<16x128xf32, #tpu.memory_space<vmem>>, vector<16x32xf32>
    %88 = math.tanh %87 : vector<16x32xf32>
    %c0_68 = arith.constant 0 : index
    %c0_69 = arith.constant 0 : index
    %89 = vector.load %arg14[%c0_68, %c0_69] : memref<16x32xf32, #tpu.memory_space<vmem>>, vector<16x32xf32>
    %90 = arith.mulf %86, %89 : vector<16x32xf32>
    %91 = arith.mulf %78, %88 : vector<16x32xf32>
    %92 = arith.addf %90, %91 : vector<16x32xf32>
    %c0_70 = arith.constant 0 : index
    %c0_71 = arith.constant 0 : index
    %93 = vector.load %arg14[%c0_70, %c0_71] : memref<16x32xf32, #tpu.memory_space<vmem>>, vector<16x32xf32>
    tpu.vector_store %arg14[%c0_70, %c0_71], %92 {strides = array<i32>} : memref<16x32xf32, #tpu.memory_space<vmem>>, vector<16x32xf32>,
    %c0_72 = arith.constant 0 : index
    %c96_73 = arith.constant 96 : index
    %94 = vector.load %arg12[%c0_72, %c96_73] : memref<16x128xf32, #tpu.memory_space<vmem>>, vector<16x32xf32>
    %cst_74 = arith.constant 5.000000e-01 : f32
    %95 = vector.broadcast %cst_74 : f32 to vector<16x32xf32>
    %96 = arith.mulf %95, %94 : vector<16x32xf32>
    %97 = math.tanh %96 : vector<16x32xf32>
    %cst_75 = arith.constant 5.000000e-01 : f32
    %98 = vector.broadcast %cst_75 : f32 to vector<16x32xf32>
    %99 = arith.mulf %98, %97 : vector<16x32xf32>
    %cst_76 = arith.constant 5.000000e-01 : f32
    %100 = vector.broadcast %cst_76 : f32 to vector<16x32xf32>
    %101 = arith.addf %99, %100 : vector<16x32xf32>
    %102 = math.tanh %92 : vector<16x32xf32>
    %103 = arith.mulf %101, %102 : vector<16x32xf32>
    %c0_77 = arith.constant 0 : index
    %c0_78 = arith.constant 0 : index
    %104 = vector.load %arg13[%c0_77, %c0_78] : memref<16x32xf32, #tpu.memory_space<vmem>>, vector<16x32xf32>
    tpu.vector_store %arg13[%c0_77, %c0_78], %103 {strides = array<i32>} : memref<16x32xf32, #tpu.memory_space<vmem>>, vector<16x32xf32>,
    %105 = arith.truncf %103 : vector<16x32xf32> to vector<16x32xbf16>
    %c0_i32_79 = arith.constant 0 : i32
    %106 = arith.addi %c0_i32_79, %c1_i32 : i32
    %107 = arith.index_cast %106 : i32 to index
    %c0_80 = arith.constant 0 : index
    %c0_81 = arith.constant 0 : index
    %108 = vector.load %arg15[%107, %c0_80, %c0_81] : memref<8x16x32xbf16, #tpu.memory_space<vmem>>, vector<1x16x32xbf16>
    %109 = vector.shape_cast %108 : vector<1x16x32xbf16> to vector<16x32xbf16>
    %110 = vector.shape_cast %105 : vector<16x32xbf16> to vector<1x16x32xbf16>
    tpu.vector_store %arg15[%107, %c0_80, %c0_81], %110 {strides = array<i32>} : memref<8x16x32xbf16, #tpu.memory_space<vmem>>, vector<1x16x32xbf16>,
    %c2_i32 = arith.constant 2 : i32
    %c0_82 = arith.constant 0 : index
    %c0_83 = arith.constant 0 : index
    %111 = vector.load %arg13[%c0_82, %c0_83] : memref<16x32xf32, #tpu.memory_space<vmem>>, vector<16x32xf32>
    %112 = arith.truncf %111 : vector<16x32xf32> to vector<16x32xbf16>
    %c0_84 = arith.constant 0 : index
    %c0_85 = arith.constant 0 : index
    %113 = vector.load %arg3[%c0_84, %c0_85] : memref<32x128xbf16, #tpu.memory_space<vmem>>, vector<32x128xbf16>
    %cst_86 = arith.constant dense<0.000000e+00> : vector<16x128xf32>
    %114 = tpu.matmul %112, %113, %cst_86 {dimension_numbers = #tpu.dot_dimension_numbers<[1], [0], [0], [1], [0, 0, 1, 1], [], []>} : vector<16x32xbf16>, vector<32x128xbf16>, vector<16x128xf32> -> vector<16x128xf32>
    %115 = arith.index_cast %c2_i32 : i32 to index
    %c0_87 = arith.constant 0 : index
    %c0_88 = arith.constant 0 : index
    %116 = vector.load %arg11[%115, %c0_87, %c0_88] : memref<8x16x128xf32, #tpu.memory_space<vmem>>, vector<1x16x128xf32>
    %117 = vector.shape_cast %116 : vector<1x16x128xf32> to vector<16x128xf32>
    %118 = arith.addf %114, %117 : vector<16x128xf32>
    %c0_89 = arith.constant 0 : index
    %c0_90 = arith.constant 0 : index
    %119 = vector.load %arg12[%c0_89, %c0_90] : memref<16x128xf32, #tpu.memory_space<vmem>>, vector<16x128xf32>
    tpu.vector_store %arg12[%c0_89, %c0_90], %118 {strides = array<i32>} : memref<16x128xf32, #tpu.memory_space<vmem>>, vector<16x128xf32>,
    %c0_91 = arith.constant 0 : index
    %c0_92 = arith.constant 0 : index
    %120 = vector.load %arg12[%c0_91, %c0_92] : memref<16x128xf32, #tpu.memory_space<vmem>>, vector<16x32xf32>
    %cst_93 = arith.constant 5.000000e-01 : f32
    %121 = vector.broadcast %cst_93 : f32 to vector<16x32xf32>
    %122 = arith.mulf %121, %120 : vector<16x32xf32>
    %123 = math.tanh %122 : vector<16x32xf32>
    %cst_94 = arith.constant 5.000000e-01 : f32
    %124 = vector.broadcast %cst_94 : f32 to vector<16x32xf32>
    %125 = arith.mulf %124, %123 : vector<16x32xf32>
    %cst_95 = arith.constant 5.000000e-01 : f32
    %126 = vector.broadcast %cst_95 : f32 to vector<16x32xf32>
    %127 = arith.addf %125, %126 : vector<16x32xf32>
    %c0_96 = arith.constant 0 : index
    %c32_97 = arith.constant 32 : index
    %128 = vector.load %arg12[%c0_96, %c32_97] : memref<16x128xf32, #tpu.memory_space<vmem>>, vector<16x32xf32>
    %cst_98 = arith.constant 5.000000e-01 : f32
    %129 = vector.broadcast %cst_98 : f32 to vector<16x32xf32>
    %130 = arith.mulf %129, %128 : vector<16x32xf32>
    %131 = math.tanh %130 : vector<16x32xf32>
    %cst_99 = arith.constant 5.000000e-01 : f32
    %132 = vector.broadcast %cst_99 : f32 to vector<16x32xf32>
    %133 = arith.mulf %132, %131 : vector<16x32xf32>
    %cst_100 = arith.constant 5.000000e-01 : f32
    %134 = vector.broadcast %cst_100 : f32 to vector<16x32xf32>
    %135 = arith.addf %133, %134 : vector<16x32xf32>
    %c0_101 = arith.constant 0 : index
    %c64_102 = arith.constant 64 : index
    %136 = vector.load %arg12[%c0_101, %c64_102] : memref<16x128xf32, #tpu.memory_space<vmem>>, vector<16x32xf32>
    %137 = math.tanh %136 : vector<16x32xf32>
    %c0_103 = arith.constant 0 : index
    %c0_104 = arith.constant 0 : index
    %138 = vector.load %arg14[%c0_103, %c0_104] : memref<16x32xf32, #tpu.memory_space<vmem>>, vector<16x32xf32>
    %139 = arith.mulf %135, %138 : vector<16x32xf32>
    %140 = arith.mulf %127, %137 : vector<16x32xf32>
    %141 = arith.addf %139, %140 : vector<16x32xf32>
    %c0_105 = arith.constant 0 : index
    %c0_106 = arith.constant 0 : index
    %142 = vector.load %arg14[%c0_105, %c0_106] : memref<16x32xf32, #tpu.memory_space<vmem>>, vector<16x32xf32>
    tpu.vector_store %arg14[%c0_105, %c0_106], %141 {strides = array<i32>} : memref<16x32xf32, #tpu.memory_space<vmem>>, vector<16x32xf32>,
    %c0_107 = arith.constant 0 : index
    %c96_108 = arith.constant 96 : index
    %143 = vector.load %arg12[%c0_107, %c96_108] : memref<16x128xf32, #tpu.memory_space<vmem>>, vector<16x32xf32>
    %cst_109 = arith.constant 5.000000e-01 : f32
    %144 = vector.broadcast %cst_109 : f32 to vector<16x32xf32>
    %145 = arith.mulf %144, %143 : vector<16x32xf32>
    %146 = math.tanh %145 : vector<16x32xf32>
    %cst_110 = arith.constant 5.000000e-01 : f32
    %147 = vector.broadcast %cst_110 : f32 to vector<16x32xf32>
    %148 = arith.mulf %147, %146 : vector<16x32xf32>
    %cst_111 = arith.constant 5.000000e-01 : f32
    %149 = vector.broadcast %cst_111 : f32 to vector<16x32xf32>
    %150 = arith.addf %148, %149 : vector<16x32xf32>
    %151 = math.tanh %141 : vector<16x32xf32>
    %152 = arith.mulf %150, %151 : vector<16x32xf32>
    %c0_112 = arith.constant 0 : index
    %c0_113 = arith.constant 0 : index
    %153 = vector.load %arg13[%c0_112, %c0_113] : memref<16x32xf32, #tpu.memory_space<vmem>>, vector<16x32xf32>
    tpu.vector_store %arg13[%c0_112, %c0_113], %152 {strides = array<i32>} : memref<16x32xf32, #tpu.memory_space<vmem>>, vector<16x32xf32>,
    %154 = arith.truncf %152 : vector<16x32xf32> to vector<16x32xbf16>
    %c0_i32_114 = arith.constant 0 : i32
    %155 = arith.addi %c0_i32_114, %c2_i32 : i32
    %156 = arith.index_cast %155 : i32 to index
    %c0_115 = arith.constant 0 : index
    %c0_116 = arith.constant 0 : index
    %157 = vector.load %arg15[%156, %c0_115, %c0_116] : memref<8x16x32xbf16, #tpu.memory_space<vmem>>, vector<1x16x32xbf16>
    %158 = vector.shape_cast %157 : vector<1x16x32xbf16> to vector<16x32xbf16>
    %159 = vector.shape_cast %154 : vector<16x32xbf16> to vector<1x16x32xbf16>
    tpu.vector_store %arg15[%156, %c0_115, %c0_116], %159 {strides = array<i32>} : memref<8x16x32xbf16, #tpu.memory_space<vmem>>, vector<1x16x32xbf16>,
    %c3_i32 = arith.constant 3 : i32
    %c0_117 = arith.constant 0 : index
    %c0_118 = arith.constant 0 : index
    %160 = vector.load %arg13[%c0_117, %c0_118] : memref<16x32xf32, #tpu.memory_space<vmem>>, vector<16x32xf32>
    %161 = arith.truncf %160 : vector<16x32xf32> to vector<16x32xbf16>
    %c0_119 = arith.constant 0 : index
    %c0_120 = arith.constant 0 : index
    %162 = vector.load %arg3[%c0_119, %c0_120] : memref<32x128xbf16, #tpu.memory_space<vmem>>, vector<32x128xbf16>
    %cst_121 = arith.constant dense<0.000000e+00> : vector<16x128xf32>
    %163 = tpu.matmul %161, %162, %cst_121 {dimension_numbers = #tpu.dot_dimension_numbers<[1], [0], [0], [1], [0, 0, 1, 1], [], []>} : vector<16x32xbf16>, vector<32x128xbf16>, vector<16x128xf32> -> vector<16x128xf32>
    %164 = arith.index_cast %c3_i32 : i32 to index
    %c0_122 = arith.constant 0 : index
    %c0_123 = arith.constant 0 : index
    %165 = vector.load %arg11[%164, %c0_122, %c0_123] : memref<8x16x128xf32, #tpu.memory_space<vmem>>, vector<1x16x128xf32>
    %166 = vector.shape_cast %165 : vector<1x16x128xf32> to vector<16x128xf32>
    %167 = arith.addf %163, %166 : vector<16x128xf32>
    %c0_124 = arith.constant 0 : index
    %c0_125 = arith.constant 0 : index
    %168 = vector.load %arg12[%c0_124, %c0_125] : memref<16x128xf32, #tpu.memory_space<vmem>>, vector<16x128xf32>
    tpu.vector_store %arg12[%c0_124, %c0_125], %167 {strides = array<i32>} : memref<16x128xf32, #tpu.memory_space<vmem>>, vector<16x128xf32>,
    %c0_126 = arith.constant 0 : index
    %c0_127 = arith.constant 0 : index
    %169 = vector.load %arg12[%c0_126, %c0_127] : memref<16x128xf32, #tpu.memory_space<vmem>>, vector<16x32xf32>
    %cst_128 = arith.constant 5.000000e-01 : f32
    %170 = vector.broadcast %cst_128 : f32 to vector<16x32xf32>
    %171 = arith.mulf %170, %169 : vector<16x32xf32>
    %172 = math.tanh %171 : vector<16x32xf32>
    %cst_129 = arith.constant 5.000000e-01 : f32
    %173 = vector.broadcast %cst_129 : f32 to vector<16x32xf32>
    %174 = arith.mulf %173, %172 : vector<16x32xf32>
    %cst_130 = arith.constant 5.000000e-01 : f32
    %175 = vector.broadcast %cst_130 : f32 to vector<16x32xf32>
    %176 = arith.addf %174, %175 : vector<16x32xf32>
    %c0_131 = arith.constant 0 : index
    %c32_132 = arith.constant 32 : index
    %177 = vector.load %arg12[%c0_131, %c32_132] : memref<16x128xf32, #tpu.memory_space<vmem>>, vector<16x32xf32>
    %cst_133 = arith.constant 5.000000e-01 : f32
    %178 = vector.broadcast %cst_133 : f32 to vector<16x32xf32>
    %179 = arith.mulf %178, %177 : vector<16x32xf32>
    %180 = math.tanh %179 : vector<16x32xf32>
    %cst_134 = arith.constant 5.000000e-01 : f32
    %181 = vector.broadcast %cst_134 : f32 to vector<16x32xf32>
    %182 = arith.mulf %181, %180 : vector<16x32xf32>
    %cst_135 = arith.constant 5.000000e-01 : f32
    %183 = vector.broadcast %cst_135 : f32 to vector<16x32xf32>
    %184 = arith.addf %182, %183 : vector<16x32xf32>
    %c0_136 = arith.constant 0 : index
    %c64_137 = arith.constant 64 : index
    %185 = vector.load %arg12[%c0_136, %c64_137] : memref<16x128xf32, #tpu.memory_space<vmem>>, vector<16x32xf32>
    %186 = math.tanh %185 : vector<16x32xf32>
    %c0_138 = arith.constant 0 : index
    %c0_139 = arith.constant 0 : index
    %187 = vector.load %arg14[%c0_138, %c0_139] : memref<16x32xf32, #tpu.memory_space<vmem>>, vector<16x32xf32>
    %188 = arith.mulf %184, %187 : vector<16x32xf32>
    %189 = arith.mulf %176, %186 : vector<16x32xf32>
    %190 = arith.addf %188, %189 : vector<16x32xf32>
    %c0_140 = arith.constant 0 : index
    %c0_141 = arith.constant 0 : index
    %191 = vector.load %arg14[%c0_140, %c0_141] : memref<16x32xf32, #tpu.memory_space<vmem>>, vector<16x32xf32>
    tpu.vector_store %arg14[%c0_140, %c0_141], %190 {strides = array<i32>} : memref<16x32xf32, #tpu.memory_space<vmem>>, vector<16x32xf32>,
    %c0_142 = arith.constant 0 : index
    %c96_143 = arith.constant 96 : index
    %192 = vector.load %arg12[%c0_142, %c96_143] : memref<16x128xf32, #tpu.memory_space<vmem>>, vector<16x32xf32>
    %cst_144 = arith.constant 5.000000e-01 : f32
    %193 = vector.broadcast %cst_144 : f32 to vector<16x32xf32>
    %194 = arith.mulf %193, %192 : vector<16x32xf32>
    %195 = math.tanh %194 : vector<16x32xf32>
    %cst_145 = arith.constant 5.000000e-01 : f32
    %196 = vector.broadcast %cst_145 : f32 to vector<16x32xf32>
    %197 = arith.mulf %196, %195 : vector<16x32xf32>
    %cst_146 = arith.constant 5.000000e-01 : f32
    %198 = vector.broadcast %cst_146 : f32 to vector<16x32xf32>
    %199 = arith.addf %197, %198 : vector<16x32xf32>
    %200 = math.tanh %190 : vector<16x32xf32>
    %201 = arith.mulf %199, %200 : vector<16x32xf32>
    %c0_147 = arith.constant 0 : index
    %c0_148 = arith.constant 0 : index
    %202 = vector.load %arg13[%c0_147, %c0_148] : memref<16x32xf32, #tpu.memory_space<vmem>>, vector<16x32xf32>
    tpu.vector_store %arg13[%c0_147, %c0_148], %201 {strides = array<i32>} : memref<16x32xf32, #tpu.memory_space<vmem>>, vector<16x32xf32>,
    %203 = arith.truncf %201 : vector<16x32xf32> to vector<16x32xbf16>
    %c0_i32_149 = arith.constant 0 : i32
    %204 = arith.addi %c0_i32_149, %c3_i32 : i32
    %205 = arith.index_cast %204 : i32 to index
    %c0_150 = arith.constant 0 : index
    %c0_151 = arith.constant 0 : index
    %206 = vector.load %arg15[%205, %c0_150, %c0_151] : memref<8x16x32xbf16, #tpu.memory_space<vmem>>, vector<1x16x32xbf16>
    %207 = vector.shape_cast %206 : vector<1x16x32xbf16> to vector<16x32xbf16>
    %208 = vector.shape_cast %203 : vector<16x32xbf16> to vector<1x16x32xbf16>
    tpu.vector_store %arg15[%205, %c0_150, %c0_151], %208 {strides = array<i32>} : memref<8x16x32xbf16, #tpu.memory_space<vmem>>, vector<1x16x32xbf16>,
    %c4_i32 = arith.constant 4 : i32
    %c0_152 = arith.constant 0 : index
    %c0_153 = arith.constant 0 : index
    %209 = vector.load %arg13[%c0_152, %c0_153] : memref<16x32xf32, #tpu.memory_space<vmem>>, vector<16x32xf32>
    %210 = arith.truncf %209 : vector<16x32xf32> to vector<16x32xbf16>
    %c0_154 = arith.constant 0 : index
    %c0_155 = arith.constant 0 : index
    %211 = vector.load %arg3[%c0_154, %c0_155] : memref<32x128xbf16, #tpu.memory_space<vmem>>, vector<32x128xbf16>
    %cst_156 = arith.constant dense<0.000000e+00> : vector<16x128xf32>
    %212 = tpu.matmul %210, %211, %cst_156 {dimension_numbers = #tpu.dot_dimension_numbers<[1], [0], [0], [1], [0, 0, 1, 1], [], []>} : vector<16x32xbf16>, vector<32x128xbf16>, vector<16x128xf32> -> vector<16x128xf32>
    %213 = arith.index_cast %c4_i32 : i32 to index
    %c0_157 = arith.constant 0 : index
    %c0_158 = arith.constant 0 : index
    %214 = vector.load %arg11[%213, %c0_157, %c0_158] : memref<8x16x128xf32, #tpu.memory_space<vmem>>, vector<1x16x128xf32>
    %215 = vector.shape_cast %214 : vector<1x16x128xf32> to vector<16x128xf32>
    %216 = arith.addf %212, %215 : vector<16x128xf32>
    %c0_159 = arith.constant 0 : index
    %c0_160 = arith.constant 0 : index
    %217 = vector.load %arg12[%c0_159, %c0_160] : memref<16x128xf32, #tpu.memory_space<vmem>>, vector<16x128xf32>
    tpu.vector_store %arg12[%c0_159, %c0_160], %216 {strides = array<i32>} : memref<16x128xf32, #tpu.memory_space<vmem>>, vector<16x128xf32>,
    %c0_161 = arith.constant 0 : index
    %c0_162 = arith.constant 0 : index
    %218 = vector.load %arg12[%c0_161, %c0_162] : memref<16x128xf32, #tpu.memory_space<vmem>>, vector<16x32xf32>
    %cst_163 = arith.constant 5.000000e-01 : f32
    %219 = vector.broadcast %cst_163 : f32 to vector<16x32xf32>
    %220 = arith.mulf %219, %218 : vector<16x32xf32>
    %221 = math.tanh %220 : vector<16x32xf32>
    %cst_164 = arith.constant 5.000000e-01 : f32
    %222 = vector.broadcast %cst_164 : f32 to vector<16x32xf32>
    %223 = arith.mulf %222, %221 : vector<16x32xf32>
    %cst_165 = arith.constant 5.000000e-01 : f32
    %224 = vector.broadcast %cst_165 : f32 to vector<16x32xf32>
    %225 = arith.addf %223, %224 : vector<16x32xf32>
    %c0_166 = arith.constant 0 : index
    %c32_167 = arith.constant 32 : index
    %226 = vector.load %arg12[%c0_166, %c32_167] : memref<16x128xf32, #tpu.memory_space<vmem>>, vector<16x32xf32>
    %cst_168 = arith.constant 5.000000e-01 : f32
    %227 = vector.broadcast %cst_168 : f32 to vector<16x32xf32>
    %228 = arith.mulf %227, %226 : vector<16x32xf32>
    %229 = math.tanh %228 : vector<16x32xf32>
    %cst_169 = arith.constant 5.000000e-01 : f32
    %230 = vector.broadcast %cst_169 : f32 to vector<16x32xf32>
    %231 = arith.mulf %230, %229 : vector<16x32xf32>
    %cst_170 = arith.constant 5.000000e-01 : f32
    %232 = vector.broadcast %cst_170 : f32 to vector<16x32xf32>
    %233 = arith.addf %231, %232 : vector<16x32xf32>
    %c0_171 = arith.constant 0 : index
    %c64_172 = arith.constant 64 : index
    %234 = vector.load %arg12[%c0_171, %c64_172] : memref<16x128xf32, #tpu.memory_space<vmem>>, vector<16x32xf32>
    %235 = math.tanh %234 : vector<16x32xf32>
    %c0_173 = arith.constant 0 : index
    %c0_174 = arith.constant 0 : index
    %236 = vector.load %arg14[%c0_173, %c0_174] : memref<16x32xf32, #tpu.memory_space<vmem>>, vector<16x32xf32>
    %237 = arith.mulf %233, %236 : vector<16x32xf32>
    %238 = arith.mulf %225, %235 : vector<16x32xf32>
    %239 = arith.addf %237, %238 : vector<16x32xf32>
    %c0_175 = arith.constant 0 : index
    %c0_176 = arith.constant 0 : index
    %240 = vector.load %arg14[%c0_175, %c0_176] : memref<16x32xf32, #tpu.memory_space<vmem>>, vector<16x32xf32>
    tpu.vector_store %arg14[%c0_175, %c0_176], %239 {strides = array<i32>} : memref<16x32xf32, #tpu.memory_space<vmem>>, vector<16x32xf32>,
    %c0_177 = arith.constant 0 : index
    %c96_178 = arith.constant 96 : index
    %241 = vector.load %arg12[%c0_177, %c96_178] : memref<16x128xf32, #tpu.memory_space<vmem>>, vector<16x32xf32>
    %cst_179 = arith.constant 5.000000e-01 : f32
    %242 = vector.broadcast %cst_179 : f32 to vector<16x32xf32>
    %243 = arith.mulf %242, %241 : vector<16x32xf32>
    %244 = math.tanh %243 : vector<16x32xf32>
    %cst_180 = arith.constant 5.000000e-01 : f32
    %245 = vector.broadcast %cst_180 : f32 to vector<16x32xf32>
    %246 = arith.mulf %245, %244 : vector<16x32xf32>
    %cst_181 = arith.constant 5.000000e-01 : f32
    %247 = vector.broadcast %cst_181 : f32 to vector<16x32xf32>
    %248 = arith.addf %246, %247 : vector<16x32xf32>
    %249 = math.tanh %239 : vector<16x32xf32>
    %250 = arith.mulf %248, %249 : vector<16x32xf32>
    %c0_182 = arith.constant 0 : index
    %c0_183 = arith.constant 0 : index
    %251 = vector.load %arg13[%c0_182, %c0_183] : memref<16x32xf32, #tpu.memory_space<vmem>>, vector<16x32xf32>
    tpu.vector_store %arg13[%c0_182, %c0_183], %250 {strides = array<i32>} : memref<16x32xf32, #tpu.memory_space<vmem>>, vector<16x32xf32>,
    %252 = arith.truncf %250 : vector<16x32xf32> to vector<16x32xbf16>
    %c0_i32_184 = arith.constant 0 : i32
    %253 = arith.addi %c0_i32_184, %c4_i32 : i32
    %254 = arith.index_cast %253 : i32 to index
    %c0_185 = arith.constant 0 : index
    %c0_186 = arith.constant 0 : index
    %255 = vector.load %arg15[%254, %c0_185, %c0_186] : memref<8x16x32xbf16, #tpu.memory_space<vmem>>, vector<1x16x32xbf16>
    %256 = vector.shape_cast %255 : vector<1x16x32xbf16> to vector<16x32xbf16>
    %257 = vector.shape_cast %252 : vector<16x32xbf16> to vector<1x16x32xbf16>
    tpu.vector_store %arg15[%254, %c0_185, %c0_186], %257 {strides = array<i32>} : memref<8x16x32xbf16, #tpu.memory_space<vmem>>, vector<1x16x32xbf16>,
    %c5_i32 = arith.constant 5 : i32
    %c0_187 = arith.constant 0 : index
    %c0_188 = arith.constant 0 : index
    %258 = vector.load %arg13[%c0_187, %c0_188] : memref<16x32xf32, #tpu.memory_space<vmem>>, vector<16x32xf32>
    %259 = arith.truncf %258 : vector<16x32xf32> to vector<16x32xbf16>
    %c0_189 = arith.constant 0 : index
    %c0_190 = arith.constant 0 : index
    %260 = vector.load %arg3[%c0_189, %c0_190] : memref<32x128xbf16, #tpu.memory_space<vmem>>, vector<32x128xbf16>
    %cst_191 = arith.constant dense<0.000000e+00> : vector<16x128xf32>
    %261 = tpu.matmul %259, %260, %cst_191 {dimension_numbers = #tpu.dot_dimension_numbers<[1], [0], [0], [1], [0, 0, 1, 1], [], []>} : vector<16x32xbf16>, vector<32x128xbf16>, vector<16x128xf32> -> vector<16x128xf32>
    %262 = arith.index_cast %c5_i32 : i32 to index
    %c0_192 = arith.constant 0 : index
    %c0_193 = arith.constant 0 : index
    %263 = vector.load %arg11[%262, %c0_192, %c0_193] : memref<8x16x128xf32, #tpu.memory_space<vmem>>, vector<1x16x128xf32>
    %264 = vector.shape_cast %263 : vector<1x16x128xf32> to vector<16x128xf32>
    %265 = arith.addf %261, %264 : vector<16x128xf32>
    %c0_194 = arith.constant 0 : index
    %c0_195 = arith.constant 0 : index
    %266 = vector.load %arg12[%c0_194, %c0_195] : memref<16x128xf32, #tpu.memory_space<vmem>>, vector<16x128xf32>
    tpu.vector_store %arg12[%c0_194, %c0_195], %265 {strides = array<i32>} : memref<16x128xf32, #tpu.memory_space<vmem>>, vector<16x128xf32>,
    %c0_196 = arith.constant 0 : index
    %c0_197 = arith.constant 0 : index
    %267 = vector.load %arg12[%c0_196, %c0_197] : memref<16x128xf32, #tpu.memory_space<vmem>>, vector<16x32xf32>
    %cst_198 = arith.constant 5.000000e-01 : f32
    %268 = vector.broadcast %cst_198 : f32 to vector<16x32xf32>
    %269 = arith.mulf %268, %267 : vector<16x32xf32>
    %270 = math.tanh %269 : vector<16x32xf32>
    %cst_199 = arith.constant 5.000000e-01 : f32
    %271 = vector.broadcast %cst_199 : f32 to vector<16x32xf32>
    %272 = arith.mulf %271, %270 : vector<16x32xf32>
    %cst_200 = arith.constant 5.000000e-01 : f32
    %273 = vector.broadcast %cst_200 : f32 to vector<16x32xf32>
    %274 = arith.addf %272, %273 : vector<16x32xf32>
    %c0_201 = arith.constant 0 : index
    %c32_202 = arith.constant 32 : index
    %275 = vector.load %arg12[%c0_201, %c32_202] : memref<16x128xf32, #tpu.memory_space<vmem>>, vector<16x32xf32>
    %cst_203 = arith.constant 5.000000e-01 : f32
    %276 = vector.broadcast %cst_203 : f32 to vector<16x32xf32>
    %277 = arith.mulf %276, %275 : vector<16x32xf32>
    %278 = math.tanh %277 : vector<16x32xf32>
    %cst_204 = arith.constant 5.000000e-01 : f32
    %279 = vector.broadcast %cst_204 : f32 to vector<16x32xf32>
    %280 = arith.mulf %279, %278 : vector<16x32xf32>
    %cst_205 = arith.constant 5.000000e-01 : f32
    %281 = vector.broadcast %cst_205 : f32 to vector<16x32xf32>
    %282 = arith.addf %280, %281 : vector<16x32xf32>
    %c0_206 = arith.constant 0 : index
    %c64_207 = arith.constant 64 : index
    %283 = vector.load %arg12[%c0_206, %c64_207] : memref<16x128xf32, #tpu.memory_space<vmem>>, vector<16x32xf32>
    %284 = math.tanh %283 : vector<16x32xf32>
    %c0_208 = arith.constant 0 : index
    %c0_209 = arith.constant 0 : index
    %285 = vector.load %arg14[%c0_208, %c0_209] : memref<16x32xf32, #tpu.memory_space<vmem>>, vector<16x32xf32>
    %286 = arith.mulf %282, %285 : vector<16x32xf32>
    %287 = arith.mulf %274, %284 : vector<16x32xf32>
    %288 = arith.addf %286, %287 : vector<16x32xf32>
    %c0_210 = arith.constant 0 : index
    %c0_211 = arith.constant 0 : index
    %289 = vector.load %arg14[%c0_210, %c0_211] : memref<16x32xf32, #tpu.memory_space<vmem>>, vector<16x32xf32>
    tpu.vector_store %arg14[%c0_210, %c0_211], %288 {strides = array<i32>} : memref<16x32xf32, #tpu.memory_space<vmem>>, vector<16x32xf32>,
    %c0_212 = arith.constant 0 : index
    %c96_213 = arith.constant 96 : index
    %290 = vector.load %arg12[%c0_212, %c96_213] : memref<16x128xf32, #tpu.memory_space<vmem>>, vector<16x32xf32>
    %cst_214 = arith.constant 5.000000e-01 : f32
    %291 = vector.broadcast %cst_214 : f32 to vector<16x32xf32>
    %292 = arith.mulf %291, %290 : vector<16x32xf32>
    %293 = math.tanh %292 : vector<16x32xf32>
    %cst_215 = arith.constant 5.000000e-01 : f32
    %294 = vector.broadcast %cst_215 : f32 to vector<16x32xf32>
    %295 = arith.mulf %294, %293 : vector<16x32xf32>
    %cst_216 = arith.constant 5.000000e-01 : f32
    %296 = vector.broadcast %cst_216 : f32 to vector<16x32xf32>
    %297 = arith.addf %295, %296 : vector<16x32xf32>
    %298 = math.tanh %288 : vector<16x32xf32>
    %299 = arith.mulf %297, %298 : vector<16x32xf32>
    %c0_217 = arith.constant 0 : index
    %c0_218 = arith.constant 0 : index
    %300 = vector.load %arg13[%c0_217, %c0_218] : memref<16x32xf32, #tpu.memory_space<vmem>>, vector<16x32xf32>
    tpu.vector_store %arg13[%c0_217, %c0_218], %299 {strides = array<i32>} : memref<16x32xf32, #tpu.memory_space<vmem>>, vector<16x32xf32>,
    %301 = arith.truncf %299 : vector<16x32xf32> to vector<16x32xbf16>
    %c0_i32_219 = arith.constant 0 : i32
    %302 = arith.addi %c0_i32_219, %c5_i32 : i32
    %303 = arith.index_cast %302 : i32 to index
    %c0_220 = arith.constant 0 : index
    %c0_221 = arith.constant 0 : index
    %304 = vector.load %arg15[%303, %c0_220, %c0_221] : memref<8x16x32xbf16, #tpu.memory_space<vmem>>, vector<1x16x32xbf16>
    %305 = vector.shape_cast %304 : vector<1x16x32xbf16> to vector<16x32xbf16>
    %306 = vector.shape_cast %301 : vector<16x32xbf16> to vector<1x16x32xbf16>
    tpu.vector_store %arg15[%303, %c0_220, %c0_221], %306 {strides = array<i32>} : memref<8x16x32xbf16, #tpu.memory_space<vmem>>, vector<1x16x32xbf16>,
    %c6_i32 = arith.constant 6 : i32
    %c0_222 = arith.constant 0 : index
    %c0_223 = arith.constant 0 : index
    %307 = vector.load %arg13[%c0_222, %c0_223] : memref<16x32xf32, #tpu.memory_space<vmem>>, vector<16x32xf32>
    %308 = arith.truncf %307 : vector<16x32xf32> to vector<16x32xbf16>
    %c0_224 = arith.constant 0 : index
    %c0_225 = arith.constant 0 : index
    %309 = vector.load %arg3[%c0_224, %c0_225] : memref<32x128xbf16, #tpu.memory_space<vmem>>, vector<32x128xbf16>
    %cst_226 = arith.constant dense<0.000000e+00> : vector<16x128xf32>
    %310 = tpu.matmul %308, %309, %cst_226 {dimension_numbers = #tpu.dot_dimension_numbers<[1], [0], [0], [1], [0, 0, 1, 1], [], []>} : vector<16x32xbf16>, vector<32x128xbf16>, vector<16x128xf32> -> vector<16x128xf32>
    %311 = arith.index_cast %c6_i32 : i32 to index
    %c0_227 = arith.constant 0 : index
    %c0_228 = arith.constant 0 : index
    %312 = vector.load %arg11[%311, %c0_227, %c0_228] : memref<8x16x128xf32, #tpu.memory_space<vmem>>, vector<1x16x128xf32>
    %313 = vector.shape_cast %312 : vector<1x16x128xf32> to vector<16x128xf32>
    %314 = arith.addf %310, %313 : vector<16x128xf32>
    %c0_229 = arith.constant 0 : index
    %c0_230 = arith.constant 0 : index
    %315 = vector.load %arg12[%c0_229, %c0_230] : memref<16x128xf32, #tpu.memory_space<vmem>>, vector<16x128xf32>
    tpu.vector_store %arg12[%c0_229, %c0_230], %314 {strides = array<i32>} : memref<16x128xf32, #tpu.memory_space<vmem>>, vector<16x128xf32>,
    %c0_231 = arith.constant 0 : index
    %c0_232 = arith.constant 0 : index
    %316 = vector.load %arg12[%c0_231, %c0_232] : memref<16x128xf32, #tpu.memory_space<vmem>>, vector<16x32xf32>
    %cst_233 = arith.constant 5.000000e-01 : f32
    %317 = vector.broadcast %cst_233 : f32 to vector<16x32xf32>
    %318 = arith.mulf %317, %316 : vector<16x32xf32>
    %319 = math.tanh %318 : vector<16x32xf32>
    %cst_234 = arith.constant 5.000000e-01 : f32
    %320 = vector.broadcast %cst_234 : f32 to vector<16x32xf32>
    %321 = arith.mulf %320, %319 : vector<16x32xf32>
    %cst_235 = arith.constant 5.000000e-01 : f32
    %322 = vector.broadcast %cst_235 : f32 to vector<16x32xf32>
    %323 = arith.addf %321, %322 : vector<16x32xf32>
    %c0_236 = arith.constant 0 : index
    %c32_237 = arith.constant 32 : index
    %324 = vector.load %arg12[%c0_236, %c32_237] : memref<16x128xf32, #tpu.memory_space<vmem>>, vector<16x32xf32>
    %cst_238 = arith.constant 5.000000e-01 : f32
    %325 = vector.broadcast %cst_238 : f32 to vector<16x32xf32>
    %326 = arith.mulf %325, %324 : vector<16x32xf32>
    %327 = math.tanh %326 : vector<16x32xf32>
    %cst_239 = arith.constant 5.000000e-01 : f32
    %328 = vector.broadcast %cst_239 : f32 to vector<16x32xf32>
    %329 = arith.mulf %328, %327 : vector<16x32xf32>
    %cst_240 = arith.constant 5.000000e-01 : f32
    %330 = vector.broadcast %cst_240 : f32 to vector<16x32xf32>
    %331 = arith.addf %329, %330 : vector<16x32xf32>
    %c0_241 = arith.constant 0 : index
    %c64_242 = arith.constant 64 : index
    %332 = vector.load %arg12[%c0_241, %c64_242] : memref<16x128xf32, #tpu.memory_space<vmem>>, vector<16x32xf32>
    %333 = math.tanh %332 : vector<16x32xf32>
    %c0_243 = arith.constant 0 : index
    %c0_244 = arith.constant 0 : index
    %334 = vector.load %arg14[%c0_243, %c0_244] : memref<16x32xf32, #tpu.memory_space<vmem>>, vector<16x32xf32>
    %335 = arith.mulf %331, %334 : vector<16x32xf32>
    %336 = arith.mulf %323, %333 : vector<16x32xf32>
    %337 = arith.addf %335, %336 : vector<16x32xf32>
    %c0_245 = arith.constant 0 : index
    %c0_246 = arith.constant 0 : index
    %338 = vector.load %arg14[%c0_245, %c0_246] : memref<16x32xf32, #tpu.memory_space<vmem>>, vector<16x32xf32>
    tpu.vector_store %arg14[%c0_245, %c0_246], %337 {strides = array<i32>} : memref<16x32xf32, #tpu.memory_space<vmem>>, vector<16x32xf32>,
    %c0_247 = arith.constant 0 : index
    %c96_248 = arith.constant 96 : index
    %339 = vector.load %arg12[%c0_247, %c96_248] : memref<16x128xf32, #tpu.memory_space<vmem>>, vector<16x32xf32>
    %cst_249 = arith.constant 5.000000e-01 : f32
    %340 = vector.broadcast %cst_249 : f32 to vector<16x32xf32>
    %341 = arith.mulf %340, %339 : vector<16x32xf32>
    %342 = math.tanh %341 : vector<16x32xf32>
    %cst_250 = arith.constant 5.000000e-01 : f32
    %343 = vector.broadcast %cst_250 : f32 to vector<16x32xf32>
    %344 = arith.mulf %343, %342 : vector<16x32xf32>
    %cst_251 = arith.constant 5.000000e-01 : f32
    %345 = vector.broadcast %cst_251 : f32 to vector<16x32xf32>
    %346 = arith.addf %344, %345 : vector<16x32xf32>
    %347 = math.tanh %337 : vector<16x32xf32>
    %348 = arith.mulf %346, %347 : vector<16x32xf32>
    %c0_252 = arith.constant 0 : index
    %c0_253 = arith.constant 0 : index
    %349 = vector.load %arg13[%c0_252, %c0_253] : memref<16x32xf32, #tpu.memory_space<vmem>>, vector<16x32xf32>
    tpu.vector_store %arg13[%c0_252, %c0_253], %348 {strides = array<i32>} : memref<16x32xf32, #tpu.memory_space<vmem>>, vector<16x32xf32>,
    %350 = arith.truncf %348 : vector<16x32xf32> to vector<16x32xbf16>
    %c0_i32_254 = arith.constant 0 : i32
    %351 = arith.addi %c0_i32_254, %c6_i32 : i32
    %352 = arith.index_cast %351 : i32 to index
    %c0_255 = arith.constant 0 : index
    %c0_256 = arith.constant 0 : index
    %353 = vector.load %arg15[%352, %c0_255, %c0_256] : memref<8x16x32xbf16, #tpu.memory_space<vmem>>, vector<1x16x32xbf16>
    %354 = vector.shape_cast %353 : vector<1x16x32xbf16> to vector<16x32xbf16>
    %355 = vector.shape_cast %350 : vector<16x32xbf16> to vector<1x16x32xbf16>
    tpu.vector_store %arg15[%352, %c0_255, %c0_256], %355 {strides = array<i32>} : memref<8x16x32xbf16, #tpu.memory_space<vmem>>, vector<1x16x32xbf16>,
    %c7_i32 = arith.constant 7 : i32
    %c0_257 = arith.constant 0 : index
    %c0_258 = arith.constant 0 : index
    %356 = vector.load %arg13[%c0_257, %c0_258] : memref<16x32xf32, #tpu.memory_space<vmem>>, vector<16x32xf32>
    %357 = arith.truncf %356 : vector<16x32xf32> to vector<16x32xbf16>
    %c0_259 = arith.constant 0 : index
    %c0_260 = arith.constant 0 : index
    %358 = vector.load %arg3[%c0_259, %c0_260] : memref<32x128xbf16, #tpu.memory_space<vmem>>, vector<32x128xbf16>
    %cst_261 = arith.constant dense<0.000000e+00> : vector<16x128xf32>
    %359 = tpu.matmul %357, %358, %cst_261 {dimension_numbers = #tpu.dot_dimension_numbers<[1], [0], [0], [1], [0, 0, 1, 1], [], []>} : vector<16x32xbf16>, vector<32x128xbf16>, vector<16x128xf32> -> vector<16x128xf32>
    %360 = arith.index_cast %c7_i32 : i32 to index
    %c0_262 = arith.constant 0 : index
    %c0_263 = arith.constant 0 : index
    %361 = vector.load %arg11[%360, %c0_262, %c0_263] : memref<8x16x128xf32, #tpu.memory_space<vmem>>, vector<1x16x128xf32>
    %362 = vector.shape_cast %361 : vector<1x16x128xf32> to vector<16x128xf32>
    %363 = arith.addf %359, %362 : vector<16x128xf32>
    %c0_264 = arith.constant 0 : index
    %c0_265 = arith.constant 0 : index
    %364 = vector.load %arg12[%c0_264, %c0_265] : memref<16x128xf32, #tpu.memory_space<vmem>>, vector<16x128xf32>
    tpu.vector_store %arg12[%c0_264, %c0_265], %363 {strides = array<i32>} : memref<16x128xf32, #tpu.memory_space<vmem>>, vector<16x128xf32>,
    %c0_266 = arith.constant 0 : index
    %c0_267 = arith.constant 0 : index
    %365 = vector.load %arg12[%c0_266, %c0_267] : memref<16x128xf32, #tpu.memory_space<vmem>>, vector<16x32xf32>
    %cst_268 = arith.constant 5.000000e-01 : f32
    %366 = vector.broadcast %cst_268 : f32 to vector<16x32xf32>
    %367 = arith.mulf %366, %365 : vector<16x32xf32>
    %368 = math.tanh %367 : vector<16x32xf32>
    %cst_269 = arith.constant 5.000000e-01 : f32
    %369 = vector.broadcast %cst_269 : f32 to vector<16x32xf32>
    %370 = arith.mulf %369, %368 : vector<16x32xf32>
    %cst_270 = arith.constant 5.000000e-01 : f32
    %371 = vector.broadcast %cst_270 : f32 to vector<16x32xf32>
    %372 = arith.addf %370, %371 : vector<16x32xf32>
    %c0_271 = arith.constant 0 : index
    %c32_272 = arith.constant 32 : index
    %373 = vector.load %arg12[%c0_271, %c32_272] : memref<16x128xf32, #tpu.memory_space<vmem>>, vector<16x32xf32>
    %cst_273 = arith.constant 5.000000e-01 : f32
    %374 = vector.broadcast %cst_273 : f32 to vector<16x32xf32>
    %375 = arith.mulf %374, %373 : vector<16x32xf32>
    %376 = math.tanh %375 : vector<16x32xf32>
    %cst_274 = arith.constant 5.000000e-01 : f32
    %377 = vector.broadcast %cst_274 : f32 to vector<16x32xf32>
    %378 = arith.mulf %377, %376 : vector<16x32xf32>
    %cst_275 = arith.constant 5.000000e-01 : f32
    %379 = vector.broadcast %cst_275 : f32 to vector<16x32xf32>
    %380 = arith.addf %378, %379 : vector<16x32xf32>
    %c0_276 = arith.constant 0 : index
    %c64_277 = arith.constant 64 : index
    %381 = vector.load %arg12[%c0_276, %c64_277] : memref<16x128xf32, #tpu.memory_space<vmem>>, vector<16x32xf32>
    %382 = math.tanh %381 : vector<16x32xf32>
    %c0_278 = arith.constant 0 : index
    %c0_279 = arith.constant 0 : index
    %383 = vector.load %arg14[%c0_278, %c0_279] : memref<16x32xf32, #tpu.memory_space<vmem>>, vector<16x32xf32>
    %384 = arith.mulf %380, %383 : vector<16x32xf32>
    %385 = arith.mulf %372, %382 : vector<16x32xf32>
    %386 = arith.addf %384, %385 : vector<16x32xf32>
    %c0_280 = arith.constant 0 : index
    %c0_281 = arith.constant 0 : index
    %387 = vector.load %arg14[%c0_280, %c0_281] : memref<16x32xf32, #tpu.memory_space<vmem>>, vector<16x32xf32>
    tpu.vector_store %arg14[%c0_280, %c0_281], %386 {strides = array<i32>} : memref<16x32xf32, #tpu.memory_space<vmem>>, vector<16x32xf32>,
    %c0_282 = arith.constant 0 : index
    %c96_283 = arith.constant 96 : index
    %388 = vector.load %arg12[%c0_282, %c96_283] : memref<16x128xf32, #tpu.memory_space<vmem>>, vector<16x32xf32>
    %cst_284 = arith.constant 5.000000e-01 : f32
    %389 = vector.broadcast %cst_284 : f32 to vector<16x32xf32>
    %390 = arith.mulf %389, %388 : vector<16x32xf32>
    %391 = math.tanh %390 : vector<16x32xf32>
    %cst_285 = arith.constant 5.000000e-01 : f32
    %392 = vector.broadcast %cst_285 : f32 to vector<16x32xf32>
    %393 = arith.mulf %392, %391 : vector<16x32xf32>
    %cst_286 = arith.constant 5.000000e-01 : f32
    %394 = vector.broadcast %cst_286 : f32 to vector<16x32xf32>
    %395 = arith.addf %393, %394 : vector<16x32xf32>
    %396 = math.tanh %386 : vector<16x32xf32>
    %397 = arith.mulf %395, %396 : vector<16x32xf32>
    %c0_287 = arith.constant 0 : index
    %c0_288 = arith.constant 0 : index
    %398 = vector.load %arg13[%c0_287, %c0_288] : memref<16x32xf32, #tpu.memory_space<vmem>>, vector<16x32xf32>
    tpu.vector_store %arg13[%c0_287, %c0_288], %397 {strides = array<i32>} : memref<16x32xf32, #tpu.memory_space<vmem>>, vector<16x32xf32>,
    %399 = arith.truncf %397 : vector<16x32xf32> to vector<16x32xbf16>
    %c0_i32_289 = arith.constant 0 : i32
    %400 = arith.addi %c0_i32_289, %c7_i32 : i32
    %401 = arith.index_cast %400 : i32 to index
    %c0_290 = arith.constant 0 : index
    %c0_291 = arith.constant 0 : index
    %402 = vector.load %arg15[%401, %c0_290, %c0_291] : memref<8x16x32xbf16, #tpu.memory_space<vmem>>, vector<1x16x32xbf16>
    %403 = vector.shape_cast %402 : vector<1x16x32xbf16> to vector<16x32xbf16>
    %404 = vector.shape_cast %399 : vector<16x32xbf16> to vector<1x16x32xbf16>
    tpu.vector_store %arg15[%401, %c0_290, %c0_291], %404 {strides = array<i32>} : memref<8x16x32xbf16, #tpu.memory_space<vmem>>, vector<1x16x32xbf16>,
    %c8_i32 = arith.constant 8 : i32
    %cst_292 = arith.constant 0.000000e+00 : f32
    %405 = vector.broadcast %cst_292 : f32 to vector<16x32xf32>
    %c0_293 = arith.constant 0 : index
    %c0_294 = arith.constant 0 : index
    %406 = vector.load %arg13[%c0_293, %c0_294] : memref<16x32xf32, #tpu.memory_space<vmem>>, vector<16x32xf32>
    tpu.vector_store %arg13[%c0_293, %c0_294], %405 {strides = array<i32>} : memref<16x32xf32, #tpu.memory_space<vmem>>, vector<16x32xf32>,
    %cst_295 = arith.constant 0.000000e+00 : f32
    %407 = vector.broadcast %cst_295 : f32 to vector<16x32xf32>
    %c0_296 = arith.constant 0 : index
    %c0_297 = arith.constant 0 : index
    %408 = vector.load %arg14[%c0_296, %c0_297] : memref<16x32xf32, #tpu.memory_space<vmem>>, vector<16x32xf32>
    tpu.vector_store %arg14[%c0_296, %c0_297], %407 {strides = array<i32>} : memref<16x32xf32, #tpu.memory_space<vmem>>, vector<16x32xf32>,
    %c0_298 = arith.constant 0 : index
    %c0_299 = arith.constant 0 : index
    %c0_300 = arith.constant 0 : index
    %409 = vector.load %arg15[%c0_298, %c0_299, %c0_300] : memref<8x16x32xbf16, #tpu.memory_space<vmem>>, vector<8x16x32xbf16>
    %410 = vector.shape_cast %409 : vector<8x16x32xbf16> to vector<128x32xbf16>
    %c0_301 = arith.constant 0 : index
    %c0_302 = arith.constant 0 : index
    %411 = vector.load %arg5[%c0_301, %c0_302] : memref<32x128xbf16, #tpu.memory_space<vmem>>, vector<32x128xbf16>
    %cst_303 = arith.constant dense<0.000000e+00> : vector<128x128xf32>
    %412 = tpu.matmul %410, %411, %cst_303 {dimension_numbers = #tpu.dot_dimension_numbers<[1], [0], [0], [1], [0, 0, 1, 1], [], []>} : vector<128x32xbf16>, vector<32x128xbf16>, vector<128x128xf32> -> vector<128x128xf32>
    %c0_304 = arith.constant 0 : index
    %c0_305 = arith.constant 0 : index
    %413 = vector.load %arg7[%c0_304, %c0_305] : memref<1x128xf32, #tpu.memory_space<vmem>>, vector<1x128xf32>
    %414 = vector.broadcast %413 : vector<1x128xf32> to vector<128x128xf32>
    %415 = arith.addf %412, %414 : vector<128x128xf32>
    %416 = vector.shape_cast %415 : vector<128x128xf32> to vector<8x16x128xf32>
    %c0_306 = arith.constant 0 : index
    %c0_307 = arith.constant 0 : index
    %c0_308 = arith.constant 0 : index
    %417 = vector.load %arg11[%c0_306, %c0_307, %c0_308] : memref<8x16x128xf32, #tpu.memory_space<vmem>>, vector<8x16x128xf32>
    tpu.vector_store %arg11[%c0_306, %c0_307, %c0_308], %416 {strides = array<i32>} : memref<8x16x128xf32, #tpu.memory_space<vmem>>, vector<8x16x128xf32>,
    %c0_i32_309 = arith.constant 0 : i32
    %c0_310 = arith.constant 0 : index
    %c0_311 = arith.constant 0 : index
    %418 = vector.load %arg13[%c0_310, %c0_311] : memref<16x32xf32, #tpu.memory_space<vmem>>, vector<16x32xf32>
    %419 = arith.truncf %418 : vector<16x32xf32> to vector<16x32xbf16>
    %c0_312 = arith.constant 0 : index
    %c0_313 = arith.constant 0 : index
    %420 = vector.load %arg6[%c0_312, %c0_313] : memref<32x128xbf16, #tpu.memory_space<vmem>>, vector<32x128xbf16>
    %cst_314 = arith.constant dense<0.000000e+00> : vector<16x128xf32>
    %421 = tpu.matmul %419, %420, %cst_314 {dimension_numbers = #tpu.dot_dimension_numbers<[1], [0], [0], [1], [0, 0, 1, 1], [], []>} : vector<16x32xbf16>, vector<32x128xbf16>, vector<16x128xf32> -> vector<16x128xf32>
    %422 = arith.index_cast %c0_i32_309 : i32 to index
    %c0_315 = arith.constant 0 : index
    %c0_316 = arith.constant 0 : index
    %423 = vector.load %arg11[%422, %c0_315, %c0_316] : memref<8x16x128xf32, #tpu.memory_space<vmem>>, vector<1x16x128xf32>
    %424 = vector.shape_cast %423 : vector<1x16x128xf32> to vector<16x128xf32>
    %425 = arith.addf %421, %424 : vector<16x128xf32>
    %c0_317 = arith.constant 0 : index
    %c0_318 = arith.constant 0 : index
    %426 = vector.load %arg12[%c0_317, %c0_318] : memref<16x128xf32, #tpu.memory_space<vmem>>, vector<16x128xf32>
    tpu.vector_store %arg12[%c0_317, %c0_318], %425 {strides = array<i32>} : memref<16x128xf32, #tpu.memory_space<vmem>>, vector<16x128xf32>,
    %c0_319 = arith.constant 0 : index
    %c0_320 = arith.constant 0 : index
    %427 = vector.load %arg12[%c0_319, %c0_320] : memref<16x128xf32, #tpu.memory_space<vmem>>, vector<16x32xf32>
    %cst_321 = arith.constant 5.000000e-01 : f32
    %428 = vector.broadcast %cst_321 : f32 to vector<16x32xf32>
    %429 = arith.mulf %428, %427 : vector<16x32xf32>
    %430 = math.tanh %429 : vector<16x32xf32>
    %cst_322 = arith.constant 5.000000e-01 : f32
    %431 = vector.broadcast %cst_322 : f32 to vector<16x32xf32>
    %432 = arith.mulf %431, %430 : vector<16x32xf32>
    %cst_323 = arith.constant 5.000000e-01 : f32
    %433 = vector.broadcast %cst_323 : f32 to vector<16x32xf32>
    %434 = arith.addf %432, %433 : vector<16x32xf32>
    %c0_324 = arith.constant 0 : index
    %c32_325 = arith.constant 32 : index
    %435 = vector.load %arg12[%c0_324, %c32_325] : memref<16x128xf32, #tpu.memory_space<vmem>>, vector<16x32xf32>
    %cst_326 = arith.constant 5.000000e-01 : f32
    %436 = vector.broadcast %cst_326 : f32 to vector<16x32xf32>
    %437 = arith.mulf %436, %435 : vector<16x32xf32>
    %438 = math.tanh %437 : vector<16x32xf32>
    %cst_327 = arith.constant 5.000000e-01 : f32
    %439 = vector.broadcast %cst_327 : f32 to vector<16x32xf32>
    %440 = arith.mulf %439, %438 : vector<16x32xf32>
    %cst_328 = arith.constant 5.000000e-01 : f32
    %441 = vector.broadcast %cst_328 : f32 to vector<16x32xf32>
    %442 = arith.addf %440, %441 : vector<16x32xf32>
    %c0_329 = arith.constant 0 : index
    %c64_330 = arith.constant 64 : index
    %443 = vector.load %arg12[%c0_329, %c64_330] : memref<16x128xf32, #tpu.memory_space<vmem>>, vector<16x32xf32>
    %444 = math.tanh %443 : vector<16x32xf32>
    %c0_331 = arith.constant 0 : index
    %c0_332 = arith.constant 0 : index
    %445 = vector.load %arg14[%c0_331, %c0_332] : memref<16x32xf32, #tpu.memory_space<vmem>>, vector<16x32xf32>
    %446 = arith.mulf %442, %445 : vector<16x32xf32>
    %447 = arith.mulf %434, %444 : vector<16x32xf32>
    %448 = arith.addf %446, %447 : vector<16x32xf32>
    %c0_333 = arith.constant 0 : index
    %c0_334 = arith.constant 0 : index
    %449 = vector.load %arg14[%c0_333, %c0_334] : memref<16x32xf32, #tpu.memory_space<vmem>>, vector<16x32xf32>
    tpu.vector_store %arg14[%c0_333, %c0_334], %448 {strides = array<i32>} : memref<16x32xf32, #tpu.memory_space<vmem>>, vector<16x32xf32>,
    %c0_335 = arith.constant 0 : index
    %c96_336 = arith.constant 96 : index
    %450 = vector.load %arg12[%c0_335, %c96_336] : memref<16x128xf32, #tpu.memory_space<vmem>>, vector<16x32xf32>
    %cst_337 = arith.constant 5.000000e-01 : f32
    %451 = vector.broadcast %cst_337 : f32 to vector<16x32xf32>
    %452 = arith.mulf %451, %450 : vector<16x32xf32>
    %453 = math.tanh %452 : vector<16x32xf32>
    %cst_338 = arith.constant 5.000000e-01 : f32
    %454 = vector.broadcast %cst_338 : f32 to vector<16x32xf32>
    %455 = arith.mulf %454, %453 : vector<16x32xf32>
    %cst_339 = arith.constant 5.000000e-01 : f32
    %456 = vector.broadcast %cst_339 : f32 to vector<16x32xf32>
    %457 = arith.addf %455, %456 : vector<16x32xf32>
    %458 = math.tanh %448 : vector<16x32xf32>
    %459 = arith.mulf %457, %458 : vector<16x32xf32>
    %c0_340 = arith.constant 0 : index
    %c0_341 = arith.constant 0 : index
    %460 = vector.load %arg13[%c0_340, %c0_341] : memref<16x32xf32, #tpu.memory_space<vmem>>, vector<16x32xf32>
    tpu.vector_store %arg13[%c0_340, %c0_341], %459 {strides = array<i32>} : memref<16x32xf32, #tpu.memory_space<vmem>>, vector<16x32xf32>,
    %c1_i32_342 = arith.constant 1 : i32
    %c0_343 = arith.constant 0 : index
    %c0_344 = arith.constant 0 : index
    %461 = vector.load %arg13[%c0_343, %c0_344] : memref<16x32xf32, #tpu.memory_space<vmem>>, vector<16x32xf32>
    %462 = arith.truncf %461 : vector<16x32xf32> to vector<16x32xbf16>
    %c0_345 = arith.constant 0 : index
    %c0_346 = arith.constant 0 : index
    %463 = vector.load %arg6[%c0_345, %c0_346] : memref<32x128xbf16, #tpu.memory_space<vmem>>, vector<32x128xbf16>
    %cst_347 = arith.constant dense<0.000000e+00> : vector<16x128xf32>
    %464 = tpu.matmul %462, %463, %cst_347 {dimension_numbers = #tpu.dot_dimension_numbers<[1], [0], [0], [1], [0, 0, 1, 1], [], []>} : vector<16x32xbf16>, vector<32x128xbf16>, vector<16x128xf32> -> vector<16x128xf32>
    %465 = arith.index_cast %c1_i32_342 : i32 to index
    %c0_348 = arith.constant 0 : index
    %c0_349 = arith.constant 0 : index
    %466 = vector.load %arg11[%465, %c0_348, %c0_349] : memref<8x16x128xf32, #tpu.memory_space<vmem>>, vector<1x16x128xf32>
    %467 = vector.shape_cast %466 : vector<1x16x128xf32> to vector<16x128xf32>
    %468 = arith.addf %464, %467 : vector<16x128xf32>
    %c0_350 = arith.constant 0 : index
    %c0_351 = arith.constant 0 : index
    %469 = vector.load %arg12[%c0_350, %c0_351] : memref<16x128xf32, #tpu.memory_space<vmem>>, vector<16x128xf32>
    tpu.vector_store %arg12[%c0_350, %c0_351], %468 {strides = array<i32>} : memref<16x128xf32, #tpu.memory_space<vmem>>, vector<16x128xf32>,
    %c0_352 = arith.constant 0 : index
    %c0_353 = arith.constant 0 : index
    %470 = vector.load %arg12[%c0_352, %c0_353] : memref<16x128xf32, #tpu.memory_space<vmem>>, vector<16x32xf32>
    %cst_354 = arith.constant 5.000000e-01 : f32
    %471 = vector.broadcast %cst_354 : f32 to vector<16x32xf32>
    %472 = arith.mulf %471, %470 : vector<16x32xf32>
    %473 = math.tanh %472 : vector<16x32xf32>
    %cst_355 = arith.constant 5.000000e-01 : f32
    %474 = vector.broadcast %cst_355 : f32 to vector<16x32xf32>
    %475 = arith.mulf %474, %473 : vector<16x32xf32>
    %cst_356 = arith.constant 5.000000e-01 : f32
    %476 = vector.broadcast %cst_356 : f32 to vector<16x32xf32>
    %477 = arith.addf %475, %476 : vector<16x32xf32>
    %c0_357 = arith.constant 0 : index
    %c32_358 = arith.constant 32 : index
    %478 = vector.load %arg12[%c0_357, %c32_358] : memref<16x128xf32, #tpu.memory_space<vmem>>, vector<16x32xf32>
    %cst_359 = arith.constant 5.000000e-01 : f32
    %479 = vector.broadcast %cst_359 : f32 to vector<16x32xf32>
    %480 = arith.mulf %479, %478 : vector<16x32xf32>
    %481 = math.tanh %480 : vector<16x32xf32>
    %cst_360 = arith.constant 5.000000e-01 : f32
    %482 = vector.broadcast %cst_360 : f32 to vector<16x32xf32>
    %483 = arith.mulf %482, %481 : vector<16x32xf32>
    %cst_361 = arith.constant 5.000000e-01 : f32
    %484 = vector.broadcast %cst_361 : f32 to vector<16x32xf32>
    %485 = arith.addf %483, %484 : vector<16x32xf32>
    %c0_362 = arith.constant 0 : index
    %c64_363 = arith.constant 64 : index
    %486 = vector.load %arg12[%c0_362, %c64_363] : memref<16x128xf32, #tpu.memory_space<vmem>>, vector<16x32xf32>
    %487 = math.tanh %486 : vector<16x32xf32>
    %c0_364 = arith.constant 0 : index
    %c0_365 = arith.constant 0 : index
    %488 = vector.load %arg14[%c0_364, %c0_365] : memref<16x32xf32, #tpu.memory_space<vmem>>, vector<16x32xf32>
    %489 = arith.mulf %485, %488 : vector<16x32xf32>
    %490 = arith.mulf %477, %487 : vector<16x32xf32>
    %491 = arith.addf %489, %490 : vector<16x32xf32>
    %c0_366 = arith.constant 0 : index
    %c0_367 = arith.constant 0 : index
    %492 = vector.load %arg14[%c0_366, %c0_367] : memref<16x32xf32, #tpu.memory_space<vmem>>, vector<16x32xf32>
    tpu.vector_store %arg14[%c0_366, %c0_367], %491 {strides = array<i32>} : memref<16x32xf32, #tpu.memory_space<vmem>>, vector<16x32xf32>,
    %c0_368 = arith.constant 0 : index
    %c96_369 = arith.constant 96 : index
    %493 = vector.load %arg12[%c0_368, %c96_369] : memref<16x128xf32, #tpu.memory_space<vmem>>, vector<16x32xf32>
    %cst_370 = arith.constant 5.000000e-01 : f32
    %494 = vector.broadcast %cst_370 : f32 to vector<16x32xf32>
    %495 = arith.mulf %494, %493 : vector<16x32xf32>
    %496 = math.tanh %495 : vector<16x32xf32>
    %cst_371 = arith.constant 5.000000e-01 : f32
    %497 = vector.broadcast %cst_371 : f32 to vector<16x32xf32>
    %498 = arith.mulf %497, %496 : vector<16x32xf32>
    %cst_372 = arith.constant 5.000000e-01 : f32
    %499 = vector.broadcast %cst_372 : f32 to vector<16x32xf32>
    %500 = arith.addf %498, %499 : vector<16x32xf32>
    %501 = math.tanh %491 : vector<16x32xf32>
    %502 = arith.mulf %500, %501 : vector<16x32xf32>
    %c0_373 = arith.constant 0 : index
    %c0_374 = arith.constant 0 : index
    %503 = vector.load %arg13[%c0_373, %c0_374] : memref<16x32xf32, #tpu.memory_space<vmem>>, vector<16x32xf32>
    tpu.vector_store %arg13[%c0_373, %c0_374], %502 {strides = array<i32>} : memref<16x32xf32, #tpu.memory_space<vmem>>, vector<16x32xf32>,
    %c2_i32_375 = arith.constant 2 : i32
    %c0_376 = arith.constant 0 : index
    %c0_377 = arith.constant 0 : index
    %504 = vector.load %arg13[%c0_376, %c0_377] : memref<16x32xf32, #tpu.memory_space<vmem>>, vector<16x32xf32>
    %505 = arith.truncf %504 : vector<16x32xf32> to vector<16x32xbf16>
    %c0_378 = arith.constant 0 : index
    %c0_379 = arith.constant 0 : index
    %506 = vector.load %arg6[%c0_378, %c0_379] : memref<32x128xbf16, #tpu.memory_space<vmem>>, vector<32x128xbf16>
    %cst_380 = arith.constant dense<0.000000e+00> : vector<16x128xf32>
    %507 = tpu.matmul %505, %506, %cst_380 {dimension_numbers = #tpu.dot_dimension_numbers<[1], [0], [0], [1], [0, 0, 1, 1], [], []>} : vector<16x32xbf16>, vector<32x128xbf16>, vector<16x128xf32> -> vector<16x128xf32>
    %508 = arith.index_cast %c2_i32_375 : i32 to index
    %c0_381 = arith.constant 0 : index
    %c0_382 = arith.constant 0 : index
    %509 = vector.load %arg11[%508, %c0_381, %c0_382] : memref<8x16x128xf32, #tpu.memory_space<vmem>>, vector<1x16x128xf32>
    %510 = vector.shape_cast %509 : vector<1x16x128xf32> to vector<16x128xf32>
    %511 = arith.addf %507, %510 : vector<16x128xf32>
    %c0_383 = arith.constant 0 : index
    %c0_384 = arith.constant 0 : index
    %512 = vector.load %arg12[%c0_383, %c0_384] : memref<16x128xf32, #tpu.memory_space<vmem>>, vector<16x128xf32>
    tpu.vector_store %arg12[%c0_383, %c0_384], %511 {strides = array<i32>} : memref<16x128xf32, #tpu.memory_space<vmem>>, vector<16x128xf32>,
    %c0_385 = arith.constant 0 : index
    %c0_386 = arith.constant 0 : index
    %513 = vector.load %arg12[%c0_385, %c0_386] : memref<16x128xf32, #tpu.memory_space<vmem>>, vector<16x32xf32>
    %cst_387 = arith.constant 5.000000e-01 : f32
    %514 = vector.broadcast %cst_387 : f32 to vector<16x32xf32>
    %515 = arith.mulf %514, %513 : vector<16x32xf32>
    %516 = math.tanh %515 : vector<16x32xf32>
    %cst_388 = arith.constant 5.000000e-01 : f32
    %517 = vector.broadcast %cst_388 : f32 to vector<16x32xf32>
    %518 = arith.mulf %517, %516 : vector<16x32xf32>
    %cst_389 = arith.constant 5.000000e-01 : f32
    %519 = vector.broadcast %cst_389 : f32 to vector<16x32xf32>
    %520 = arith.addf %518, %519 : vector<16x32xf32>
    %c0_390 = arith.constant 0 : index
    %c32_391 = arith.constant 32 : index
    %521 = vector.load %arg12[%c0_390, %c32_391] : memref<16x128xf32, #tpu.memory_space<vmem>>, vector<16x32xf32>
    %cst_392 = arith.constant 5.000000e-01 : f32
    %522 = vector.broadcast %cst_392 : f32 to vector<16x32xf32>
    %523 = arith.mulf %522, %521 : vector<16x32xf32>
    %524 = math.tanh %523 : vector<16x32xf32>
    %cst_393 = arith.constant 5.000000e-01 : f32
    %525 = vector.broadcast %cst_393 : f32 to vector<16x32xf32>
    %526 = arith.mulf %525, %524 : vector<16x32xf32>
    %cst_394 = arith.constant 5.000000e-01 : f32
    %527 = vector.broadcast %cst_394 : f32 to vector<16x32xf32>
    %528 = arith.addf %526, %527 : vector<16x32xf32>
    %c0_395 = arith.constant 0 : index
    %c64_396 = arith.constant 64 : index
    %529 = vector.load %arg12[%c0_395, %c64_396] : memref<16x128xf32, #tpu.memory_space<vmem>>, vector<16x32xf32>
    %530 = math.tanh %529 : vector<16x32xf32>
    %c0_397 = arith.constant 0 : index
    %c0_398 = arith.constant 0 : index
    %531 = vector.load %arg14[%c0_397, %c0_398] : memref<16x32xf32, #tpu.memory_space<vmem>>, vector<16x32xf32>
    %532 = arith.mulf %528, %531 : vector<16x32xf32>
    %533 = arith.mulf %520, %530 : vector<16x32xf32>
    %534 = arith.addf %532, %533 : vector<16x32xf32>
    %c0_399 = arith.constant 0 : index
    %c0_400 = arith.constant 0 : index
    %535 = vector.load %arg14[%c0_399, %c0_400] : memref<16x32xf32, #tpu.memory_space<vmem>>, vector<16x32xf32>
    tpu.vector_store %arg14[%c0_399, %c0_400], %534 {strides = array<i32>} : memref<16x32xf32, #tpu.memory_space<vmem>>, vector<16x32xf32>,
    %c0_401 = arith.constant 0 : index
    %c96_402 = arith.constant 96 : index
    %536 = vector.load %arg12[%c0_401, %c96_402] : memref<16x128xf32, #tpu.memory_space<vmem>>, vector<16x32xf32>
    %cst_403 = arith.constant 5.000000e-01 : f32
    %537 = vector.broadcast %cst_403 : f32 to vector<16x32xf32>
    %538 = arith.mulf %537, %536 : vector<16x32xf32>
    %539 = math.tanh %538 : vector<16x32xf32>
    %cst_404 = arith.constant 5.000000e-01 : f32
    %540 = vector.broadcast %cst_404 : f32 to vector<16x32xf32>
    %541 = arith.mulf %540, %539 : vector<16x32xf32>
    %cst_405 = arith.constant 5.000000e-01 : f32
    %542 = vector.broadcast %cst_405 : f32 to vector<16x32xf32>
    %543 = arith.addf %541, %542 : vector<16x32xf32>
    %544 = math.tanh %534 : vector<16x32xf32>
    %545 = arith.mulf %543, %544 : vector<16x32xf32>
    %c0_406 = arith.constant 0 : index
    %c0_407 = arith.constant 0 : index
    %546 = vector.load %arg13[%c0_406, %c0_407] : memref<16x32xf32, #tpu.memory_space<vmem>>, vector<16x32xf32>
    tpu.vector_store %arg13[%c0_406, %c0_407], %545 {strides = array<i32>} : memref<16x32xf32, #tpu.memory_space<vmem>>, vector<16x32xf32>,
    %c3_i32_408 = arith.constant 3 : i32
    %c0_409 = arith.constant 0 : index
    %c0_410 = arith.constant 0 : index
    %547 = vector.load %arg13[%c0_409, %c0_410] : memref<16x32xf32, #tpu.memory_space<vmem>>, vector<16x32xf32>
    %548 = arith.truncf %547 : vector<16x32xf32> to vector<16x32xbf16>
    %c0_411 = arith.constant 0 : index
    %c0_412 = arith.constant 0 : index
    %549 = vector.load %arg6[%c0_411, %c0_412] : memref<32x128xbf16, #tpu.memory_space<vmem>>, vector<32x128xbf16>
    %cst_413 = arith.constant dense<0.000000e+00> : vector<16x128xf32>
    %550 = tpu.matmul %548, %549, %cst_413 {dimension_numbers = #tpu.dot_dimension_numbers<[1], [0], [0], [1], [0, 0, 1, 1], [], []>} : vector<16x32xbf16>, vector<32x128xbf16>, vector<16x128xf32> -> vector<16x128xf32>
    %551 = arith.index_cast %c3_i32_408 : i32 to index
    %c0_414 = arith.constant 0 : index
    %c0_415 = arith.constant 0 : index
    %552 = vector.load %arg11[%551, %c0_414, %c0_415] : memref<8x16x128xf32, #tpu.memory_space<vmem>>, vector<1x16x128xf32>
    %553 = vector.shape_cast %552 : vector<1x16x128xf32> to vector<16x128xf32>
    %554 = arith.addf %550, %553 : vector<16x128xf32>
    %c0_416 = arith.constant 0 : index
    %c0_417 = arith.constant 0 : index
    %555 = vector.load %arg12[%c0_416, %c0_417] : memref<16x128xf32, #tpu.memory_space<vmem>>, vector<16x128xf32>
    tpu.vector_store %arg12[%c0_416, %c0_417], %554 {strides = array<i32>} : memref<16x128xf32, #tpu.memory_space<vmem>>, vector<16x128xf32>,
    %c0_418 = arith.constant 0 : index
    %c0_419 = arith.constant 0 : index
    %556 = vector.load %arg12[%c0_418, %c0_419] : memref<16x128xf32, #tpu.memory_space<vmem>>, vector<16x32xf32>
    %cst_420 = arith.constant 5.000000e-01 : f32
    %557 = vector.broadcast %cst_420 : f32 to vector<16x32xf32>
    %558 = arith.mulf %557, %556 : vector<16x32xf32>
    %559 = math.tanh %558 : vector<16x32xf32>
    %cst_421 = arith.constant 5.000000e-01 : f32
    %560 = vector.broadcast %cst_421 : f32 to vector<16x32xf32>
    %561 = arith.mulf %560, %559 : vector<16x32xf32>
    %cst_422 = arith.constant 5.000000e-01 : f32
    %562 = vector.broadcast %cst_422 : f32 to vector<16x32xf32>
    %563 = arith.addf %561, %562 : vector<16x32xf32>
    %c0_423 = arith.constant 0 : index
    %c32_424 = arith.constant 32 : index
    %564 = vector.load %arg12[%c0_423, %c32_424] : memref<16x128xf32, #tpu.memory_space<vmem>>, vector<16x32xf32>
    %cst_425 = arith.constant 5.000000e-01 : f32
    %565 = vector.broadcast %cst_425 : f32 to vector<16x32xf32>
    %566 = arith.mulf %565, %564 : vector<16x32xf32>
    %567 = math.tanh %566 : vector<16x32xf32>
    %cst_426 = arith.constant 5.000000e-01 : f32
    %568 = vector.broadcast %cst_426 : f32 to vector<16x32xf32>
    %569 = arith.mulf %568, %567 : vector<16x32xf32>
    %cst_427 = arith.constant 5.000000e-01 : f32
    %570 = vector.broadcast %cst_427 : f32 to vector<16x32xf32>
    %571 = arith.addf %569, %570 : vector<16x32xf32>
    %c0_428 = arith.constant 0 : index
    %c64_429 = arith.constant 64 : index
    %572 = vector.load %arg12[%c0_428, %c64_429] : memref<16x128xf32, #tpu.memory_space<vmem>>, vector<16x32xf32>
    %573 = math.tanh %572 : vector<16x32xf32>
    %c0_430 = arith.constant 0 : index
    %c0_431 = arith.constant 0 : index
    %574 = vector.load %arg14[%c0_430, %c0_431] : memref<16x32xf32, #tpu.memory_space<vmem>>, vector<16x32xf32>
    %575 = arith.mulf %571, %574 : vector<16x32xf32>
    %576 = arith.mulf %563, %573 : vector<16x32xf32>
    %577 = arith.addf %575, %576 : vector<16x32xf32>
    %c0_432 = arith.constant 0 : index
    %c0_433 = arith.constant 0 : index
    %578 = vector.load %arg14[%c0_432, %c0_433] : memref<16x32xf32, #tpu.memory_space<vmem>>, vector<16x32xf32>
    tpu.vector_store %arg14[%c0_432, %c0_433], %577 {strides = array<i32>} : memref<16x32xf32, #tpu.memory_space<vmem>>, vector<16x32xf32>,
    %c0_434 = arith.constant 0 : index
    %c96_435 = arith.constant 96 : index
    %579 = vector.load %arg12[%c0_434, %c96_435] : memref<16x128xf32, #tpu.memory_space<vmem>>, vector<16x32xf32>
    %cst_436 = arith.constant 5.000000e-01 : f32
    %580 = vector.broadcast %cst_436 : f32 to vector<16x32xf32>
    %581 = arith.mulf %580, %579 : vector<16x32xf32>
    %582 = math.tanh %581 : vector<16x32xf32>
    %cst_437 = arith.constant 5.000000e-01 : f32
    %583 = vector.broadcast %cst_437 : f32 to vector<16x32xf32>
    %584 = arith.mulf %583, %582 : vector<16x32xf32>
    %cst_438 = arith.constant 5.000000e-01 : f32
    %585 = vector.broadcast %cst_438 : f32 to vector<16x32xf32>
    %586 = arith.addf %584, %585 : vector<16x32xf32>
    %587 = math.tanh %577 : vector<16x32xf32>
    %588 = arith.mulf %586, %587 : vector<16x32xf32>
    %c0_439 = arith.constant 0 : index
    %c0_440 = arith.constant 0 : index
    %589 = vector.load %arg13[%c0_439, %c0_440] : memref<16x32xf32, #tpu.memory_space<vmem>>, vector<16x32xf32>
    tpu.vector_store %arg13[%c0_439, %c0_440], %588 {strides = array<i32>} : memref<16x32xf32, #tpu.memory_space<vmem>>, vector<16x32xf32>,
    %c4_i32_441 = arith.constant 4 : i32
    %c0_442 = arith.constant 0 : index
    %c0_443 = arith.constant 0 : index
    %590 = vector.load %arg13[%c0_442, %c0_443] : memref<16x32xf32, #tpu.memory_space<vmem>>, vector<16x32xf32>
    %591 = arith.truncf %590 : vector<16x32xf32> to vector<16x32xbf16>
    %c0_444 = arith.constant 0 : index
    %c0_445 = arith.constant 0 : index
    %592 = vector.load %arg6[%c0_444, %c0_445] : memref<32x128xbf16, #tpu.memory_space<vmem>>, vector<32x128xbf16>
    %cst_446 = arith.constant dense<0.000000e+00> : vector<16x128xf32>
    %593 = tpu.matmul %591, %592, %cst_446 {dimension_numbers = #tpu.dot_dimension_numbers<[1], [0], [0], [1], [0, 0, 1, 1], [], []>} : vector<16x32xbf16>, vector<32x128xbf16>, vector<16x128xf32> -> vector<16x128xf32>
    %594 = arith.index_cast %c4_i32_441 : i32 to index
    %c0_447 = arith.constant 0 : index
    %c0_448 = arith.constant 0 : index
    %595 = vector.load %arg11[%594, %c0_447, %c0_448] : memref<8x16x128xf32, #tpu.memory_space<vmem>>, vector<1x16x128xf32>
    %596 = vector.shape_cast %595 : vector<1x16x128xf32> to vector<16x128xf32>
    %597 = arith.addf %593, %596 : vector<16x128xf32>
    %c0_449 = arith.constant 0 : index
    %c0_450 = arith.constant 0 : index
    %598 = vector.load %arg12[%c0_449, %c0_450] : memref<16x128xf32, #tpu.memory_space<vmem>>, vector<16x128xf32>
    tpu.vector_store %arg12[%c0_449, %c0_450], %597 {strides = array<i32>} : memref<16x128xf32, #tpu.memory_space<vmem>>, vector<16x128xf32>,
    %c0_451 = arith.constant 0 : index
    %c0_452 = arith.constant 0 : index
    %599 = vector.load %arg12[%c0_451, %c0_452] : memref<16x128xf32, #tpu.memory_space<vmem>>, vector<16x32xf32>
    %cst_453 = arith.constant 5.000000e-01 : f32
    %600 = vector.broadcast %cst_453 : f32 to vector<16x32xf32>
    %601 = arith.mulf %600, %599 : vector<16x32xf32>
    %602 = math.tanh %601 : vector<16x32xf32>
    %cst_454 = arith.constant 5.000000e-01 : f32
    %603 = vector.broadcast %cst_454 : f32 to vector<16x32xf32>
    %604 = arith.mulf %603, %602 : vector<16x32xf32>
    %cst_455 = arith.constant 5.000000e-01 : f32
    %605 = vector.broadcast %cst_455 : f32 to vector<16x32xf32>
    %606 = arith.addf %604, %605 : vector<16x32xf32>
    %c0_456 = arith.constant 0 : index
    %c32_457 = arith.constant 32 : index
    %607 = vector.load %arg12[%c0_456, %c32_457] : memref<16x128xf32, #tpu.memory_space<vmem>>, vector<16x32xf32>
    %cst_458 = arith.constant 5.000000e-01 : f32
    %608 = vector.broadcast %cst_458 : f32 to vector<16x32xf32>
    %609 = arith.mulf %608, %607 : vector<16x32xf32>
    %610 = math.tanh %609 : vector<16x32xf32>
    %cst_459 = arith.constant 5.000000e-01 : f32
    %611 = vector.broadcast %cst_459 : f32 to vector<16x32xf32>
    %612 = arith.mulf %611, %610 : vector<16x32xf32>
    %cst_460 = arith.constant 5.000000e-01 : f32
    %613 = vector.broadcast %cst_460 : f32 to vector<16x32xf32>
    %614 = arith.addf %612, %613 : vector<16x32xf32>
    %c0_461 = arith.constant 0 : index
    %c64_462 = arith.constant 64 : index
    %615 = vector.load %arg12[%c0_461, %c64_462] : memref<16x128xf32, #tpu.memory_space<vmem>>, vector<16x32xf32>
    %616 = math.tanh %615 : vector<16x32xf32>
    %c0_463 = arith.constant 0 : index
    %c0_464 = arith.constant 0 : index
    %617 = vector.load %arg14[%c0_463, %c0_464] : memref<16x32xf32, #tpu.memory_space<vmem>>, vector<16x32xf32>
    %618 = arith.mulf %614, %617 : vector<16x32xf32>
    %619 = arith.mulf %606, %616 : vector<16x32xf32>
    %620 = arith.addf %618, %619 : vector<16x32xf32>
    %c0_465 = arith.constant 0 : index
    %c0_466 = arith.constant 0 : index
    %621 = vector.load %arg14[%c0_465, %c0_466] : memref<16x32xf32, #tpu.memory_space<vmem>>, vector<16x32xf32>
    tpu.vector_store %arg14[%c0_465, %c0_466], %620 {strides = array<i32>} : memref<16x32xf32, #tpu.memory_space<vmem>>, vector<16x32xf32>,
    %c0_467 = arith.constant 0 : index
    %c96_468 = arith.constant 96 : index
    %622 = vector.load %arg12[%c0_467, %c96_468] : memref<16x128xf32, #tpu.memory_space<vmem>>, vector<16x32xf32>
    %cst_469 = arith.constant 5.000000e-01 : f32
    %623 = vector.broadcast %cst_469 : f32 to vector<16x32xf32>
    %624 = arith.mulf %623, %622 : vector<16x32xf32>
    %625 = math.tanh %624 : vector<16x32xf32>
    %cst_470 = arith.constant 5.000000e-01 : f32
    %626 = vector.broadcast %cst_470 : f32 to vector<16x32xf32>
    %627 = arith.mulf %626, %625 : vector<16x32xf32>
    %cst_471 = arith.constant 5.000000e-01 : f32
    %628 = vector.broadcast %cst_471 : f32 to vector<16x32xf32>
    %629 = arith.addf %627, %628 : vector<16x32xf32>
    %630 = math.tanh %620 : vector<16x32xf32>
    %631 = arith.mulf %629, %630 : vector<16x32xf32>
    %c0_472 = arith.constant 0 : index
    %c0_473 = arith.constant 0 : index
    %632 = vector.load %arg13[%c0_472, %c0_473] : memref<16x32xf32, #tpu.memory_space<vmem>>, vector<16x32xf32>
    tpu.vector_store %arg13[%c0_472, %c0_473], %631 {strides = array<i32>} : memref<16x32xf32, #tpu.memory_space<vmem>>, vector<16x32xf32>,
    %c5_i32_474 = arith.constant 5 : i32
    %c0_475 = arith.constant 0 : index
    %c0_476 = arith.constant 0 : index
    %633 = vector.load %arg13[%c0_475, %c0_476] : memref<16x32xf32, #tpu.memory_space<vmem>>, vector<16x32xf32>
    %634 = arith.truncf %633 : vector<16x32xf32> to vector<16x32xbf16>
    %c0_477 = arith.constant 0 : index
    %c0_478 = arith.constant 0 : index
    %635 = vector.load %arg6[%c0_477, %c0_478] : memref<32x128xbf16, #tpu.memory_space<vmem>>, vector<32x128xbf16>
    %cst_479 = arith.constant dense<0.000000e+00> : vector<16x128xf32>
    %636 = tpu.matmul %634, %635, %cst_479 {dimension_numbers = #tpu.dot_dimension_numbers<[1], [0], [0], [1], [0, 0, 1, 1], [], []>} : vector<16x32xbf16>, vector<32x128xbf16>, vector<16x128xf32> -> vector<16x128xf32>
    %637 = arith.index_cast %c5_i32_474 : i32 to index
    %c0_480 = arith.constant 0 : index
    %c0_481 = arith.constant 0 : index
    %638 = vector.load %arg11[%637, %c0_480, %c0_481] : memref<8x16x128xf32, #tpu.memory_space<vmem>>, vector<1x16x128xf32>
    %639 = vector.shape_cast %638 : vector<1x16x128xf32> to vector<16x128xf32>
    %640 = arith.addf %636, %639 : vector<16x128xf32>
    %c0_482 = arith.constant 0 : index
    %c0_483 = arith.constant 0 : index
    %641 = vector.load %arg12[%c0_482, %c0_483] : memref<16x128xf32, #tpu.memory_space<vmem>>, vector<16x128xf32>
    tpu.vector_store %arg12[%c0_482, %c0_483], %640 {strides = array<i32>} : memref<16x128xf32, #tpu.memory_space<vmem>>, vector<16x128xf32>,
    %c0_484 = arith.constant 0 : index
    %c0_485 = arith.constant 0 : index
    %642 = vector.load %arg12[%c0_484, %c0_485] : memref<16x128xf32, #tpu.memory_space<vmem>>, vector<16x32xf32>
    %cst_486 = arith.constant 5.000000e-01 : f32
    %643 = vector.broadcast %cst_486 : f32 to vector<16x32xf32>
    %644 = arith.mulf %643, %642 : vector<16x32xf32>
    %645 = math.tanh %644 : vector<16x32xf32>
    %cst_487 = arith.constant 5.000000e-01 : f32
    %646 = vector.broadcast %cst_487 : f32 to vector<16x32xf32>
    %647 = arith.mulf %646, %645 : vector<16x32xf32>
    %cst_488 = arith.constant 5.000000e-01 : f32
    %648 = vector.broadcast %cst_488 : f32 to vector<16x32xf32>
    %649 = arith.addf %647, %648 : vector<16x32xf32>
    %c0_489 = arith.constant 0 : index
    %c32_490 = arith.constant 32 : index
    %650 = vector.load %arg12[%c0_489, %c32_490] : memref<16x128xf32, #tpu.memory_space<vmem>>, vector<16x32xf32>
    %cst_491 = arith.constant 5.000000e-01 : f32
    %651 = vector.broadcast %cst_491 : f32 to vector<16x32xf32>
    %652 = arith.mulf %651, %650 : vector<16x32xf32>
    %653 = math.tanh %652 : vector<16x32xf32>
    %cst_492 = arith.constant 5.000000e-01 : f32
    %654 = vector.broadcast %cst_492 : f32 to vector<16x32xf32>
    %655 = arith.mulf %654, %653 : vector<16x32xf32>
    %cst_493 = arith.constant 5.000000e-01 : f32
    %656 = vector.broadcast %cst_493 : f32 to vector<16x32xf32>
    %657 = arith.addf %655, %656 : vector<16x32xf32>
    %c0_494 = arith.constant 0 : index
    %c64_495 = arith.constant 64 : index
    %658 = vector.load %arg12[%c0_494, %c64_495] : memref<16x128xf32, #tpu.memory_space<vmem>>, vector<16x32xf32>
    %659 = math.tanh %658 : vector<16x32xf32>
    %c0_496 = arith.constant 0 : index
    %c0_497 = arith.constant 0 : index
    %660 = vector.load %arg14[%c0_496, %c0_497] : memref<16x32xf32, #tpu.memory_space<vmem>>, vector<16x32xf32>
    %661 = arith.mulf %657, %660 : vector<16x32xf32>
    %662 = arith.mulf %649, %659 : vector<16x32xf32>
    %663 = arith.addf %661, %662 : vector<16x32xf32>
    %c0_498 = arith.constant 0 : index
    %c0_499 = arith.constant 0 : index
    %664 = vector.load %arg14[%c0_498, %c0_499] : memref<16x32xf32, #tpu.memory_space<vmem>>, vector<16x32xf32>
    tpu.vector_store %arg14[%c0_498, %c0_499], %663 {strides = array<i32>} : memref<16x32xf32, #tpu.memory_space<vmem>>, vector<16x32xf32>,
    %c0_500 = arith.constant 0 : index
    %c96_501 = arith.constant 96 : index
    %665 = vector.load %arg12[%c0_500, %c96_501] : memref<16x128xf32, #tpu.memory_space<vmem>>, vector<16x32xf32>
    %cst_502 = arith.constant 5.000000e-01 : f32
    %666 = vector.broadcast %cst_502 : f32 to vector<16x32xf32>
    %667 = arith.mulf %666, %665 : vector<16x32xf32>
    %668 = math.tanh %667 : vector<16x32xf32>
    %cst_503 = arith.constant 5.000000e-01 : f32
    %669 = vector.broadcast %cst_503 : f32 to vector<16x32xf32>
    %670 = arith.mulf %669, %668 : vector<16x32xf32>
    %cst_504 = arith.constant 5.000000e-01 : f32
    %671 = vector.broadcast %cst_504 : f32 to vector<16x32xf32>
    %672 = arith.addf %670, %671 : vector<16x32xf32>
    %673 = math.tanh %663 : vector<16x32xf32>
    %674 = arith.mulf %672, %673 : vector<16x32xf32>
    %c0_505 = arith.constant 0 : index
    %c0_506 = arith.constant 0 : index
    %675 = vector.load %arg13[%c0_505, %c0_506] : memref<16x32xf32, #tpu.memory_space<vmem>>, vector<16x32xf32>
    tpu.vector_store %arg13[%c0_505, %c0_506], %674 {strides = array<i32>} : memref<16x32xf32, #tpu.memory_space<vmem>>, vector<16x32xf32>,
    %c6_i32_507 = arith.constant 6 : i32
    %c0_508 = arith.constant 0 : index
    %c0_509 = arith.constant 0 : index
    %676 = vector.load %arg13[%c0_508, %c0_509] : memref<16x32xf32, #tpu.memory_space<vmem>>, vector<16x32xf32>
    %677 = arith.truncf %676 : vector<16x32xf32> to vector<16x32xbf16>
    %c0_510 = arith.constant 0 : index
    %c0_511 = arith.constant 0 : index
    %678 = vector.load %arg6[%c0_510, %c0_511] : memref<32x128xbf16, #tpu.memory_space<vmem>>, vector<32x128xbf16>
    %cst_512 = arith.constant dense<0.000000e+00> : vector<16x128xf32>
    %679 = tpu.matmul %677, %678, %cst_512 {dimension_numbers = #tpu.dot_dimension_numbers<[1], [0], [0], [1], [0, 0, 1, 1], [], []>} : vector<16x32xbf16>, vector<32x128xbf16>, vector<16x128xf32> -> vector<16x128xf32>
    %680 = arith.index_cast %c6_i32_507 : i32 to index
    %c0_513 = arith.constant 0 : index
    %c0_514 = arith.constant 0 : index
    %681 = vector.load %arg11[%680, %c0_513, %c0_514] : memref<8x16x128xf32, #tpu.memory_space<vmem>>, vector<1x16x128xf32>
    %682 = vector.shape_cast %681 : vector<1x16x128xf32> to vector<16x128xf32>
    %683 = arith.addf %679, %682 : vector<16x128xf32>
    %c0_515 = arith.constant 0 : index
    %c0_516 = arith.constant 0 : index
    %684 = vector.load %arg12[%c0_515, %c0_516] : memref<16x128xf32, #tpu.memory_space<vmem>>, vector<16x128xf32>
    tpu.vector_store %arg12[%c0_515, %c0_516], %683 {strides = array<i32>} : memref<16x128xf32, #tpu.memory_space<vmem>>, vector<16x128xf32>,
    %c0_517 = arith.constant 0 : index
    %c0_518 = arith.constant 0 : index
    %685 = vector.load %arg12[%c0_517, %c0_518] : memref<16x128xf32, #tpu.memory_space<vmem>>, vector<16x32xf32>
    %cst_519 = arith.constant 5.000000e-01 : f32
    %686 = vector.broadcast %cst_519 : f32 to vector<16x32xf32>
    %687 = arith.mulf %686, %685 : vector<16x32xf32>
    %688 = math.tanh %687 : vector<16x32xf32>
    %cst_520 = arith.constant 5.000000e-01 : f32
    %689 = vector.broadcast %cst_520 : f32 to vector<16x32xf32>
    %690 = arith.mulf %689, %688 : vector<16x32xf32>
    %cst_521 = arith.constant 5.000000e-01 : f32
    %691 = vector.broadcast %cst_521 : f32 to vector<16x32xf32>
    %692 = arith.addf %690, %691 : vector<16x32xf32>
    %c0_522 = arith.constant 0 : index
    %c32_523 = arith.constant 32 : index
    %693 = vector.load %arg12[%c0_522, %c32_523] : memref<16x128xf32, #tpu.memory_space<vmem>>, vector<16x32xf32>
    %cst_524 = arith.constant 5.000000e-01 : f32
    %694 = vector.broadcast %cst_524 : f32 to vector<16x32xf32>
    %695 = arith.mulf %694, %693 : vector<16x32xf32>
    %696 = math.tanh %695 : vector<16x32xf32>
    %cst_525 = arith.constant 5.000000e-01 : f32
    %697 = vector.broadcast %cst_525 : f32 to vector<16x32xf32>
    %698 = arith.mulf %697, %696 : vector<16x32xf32>
    %cst_526 = arith.constant 5.000000e-01 : f32
    %699 = vector.broadcast %cst_526 : f32 to vector<16x32xf32>
    %700 = arith.addf %698, %699 : vector<16x32xf32>
    %c0_527 = arith.constant 0 : index
    %c64_528 = arith.constant 64 : index
    %701 = vector.load %arg12[%c0_527, %c64_528] : memref<16x128xf32, #tpu.memory_space<vmem>>, vector<16x32xf32>
    %702 = math.tanh %701 : vector<16x32xf32>
    %c0_529 = arith.constant 0 : index
    %c0_530 = arith.constant 0 : index
    %703 = vector.load %arg14[%c0_529, %c0_530] : memref<16x32xf32, #tpu.memory_space<vmem>>, vector<16x32xf32>
    %704 = arith.mulf %700, %703 : vector<16x32xf32>
    %705 = arith.mulf %692, %702 : vector<16x32xf32>
    %706 = arith.addf %704, %705 : vector<16x32xf32>
    %c0_531 = arith.constant 0 : index
    %c0_532 = arith.constant 0 : index
    %707 = vector.load %arg14[%c0_531, %c0_532] : memref<16x32xf32, #tpu.memory_space<vmem>>, vector<16x32xf32>
    tpu.vector_store %arg14[%c0_531, %c0_532], %706 {strides = array<i32>} : memref<16x32xf32, #tpu.memory_space<vmem>>, vector<16x32xf32>,
    %c0_533 = arith.constant 0 : index
    %c96_534 = arith.constant 96 : index
    %708 = vector.load %arg12[%c0_533, %c96_534] : memref<16x128xf32, #tpu.memory_space<vmem>>, vector<16x32xf32>
    %cst_535 = arith.constant 5.000000e-01 : f32
    %709 = vector.broadcast %cst_535 : f32 to vector<16x32xf32>
    %710 = arith.mulf %709, %708 : vector<16x32xf32>
    %711 = math.tanh %710 : vector<16x32xf32>
    %cst_536 = arith.constant 5.000000e-01 : f32
    %712 = vector.broadcast %cst_536 : f32 to vector<16x32xf32>
    %713 = arith.mulf %712, %711 : vector<16x32xf32>
    %cst_537 = arith.constant 5.000000e-01 : f32
    %714 = vector.broadcast %cst_537 : f32 to vector<16x32xf32>
    %715 = arith.addf %713, %714 : vector<16x32xf32>
    %716 = math.tanh %706 : vector<16x32xf32>
    %717 = arith.mulf %715, %716 : vector<16x32xf32>
    %c0_538 = arith.constant 0 : index
    %c0_539 = arith.constant 0 : index
    %718 = vector.load %arg13[%c0_538, %c0_539] : memref<16x32xf32, #tpu.memory_space<vmem>>, vector<16x32xf32>
    tpu.vector_store %arg13[%c0_538, %c0_539], %717 {strides = array<i32>} : memref<16x32xf32, #tpu.memory_space<vmem>>, vector<16x32xf32>,
    %c7_i32_540 = arith.constant 7 : i32
    %c0_541 = arith.constant 0 : index
    %c0_542 = arith.constant 0 : index
    %719 = vector.load %arg13[%c0_541, %c0_542] : memref<16x32xf32, #tpu.memory_space<vmem>>, vector<16x32xf32>
    %720 = arith.truncf %719 : vector<16x32xf32> to vector<16x32xbf16>
    %c0_543 = arith.constant 0 : index
    %c0_544 = arith.constant 0 : index
    %721 = vector.load %arg6[%c0_543, %c0_544] : memref<32x128xbf16, #tpu.memory_space<vmem>>, vector<32x128xbf16>
    %cst_545 = arith.constant dense<0.000000e+00> : vector<16x128xf32>
    %722 = tpu.matmul %720, %721, %cst_545 {dimension_numbers = #tpu.dot_dimension_numbers<[1], [0], [0], [1], [0, 0, 1, 1], [], []>} : vector<16x32xbf16>, vector<32x128xbf16>, vector<16x128xf32> -> vector<16x128xf32>
    %723 = arith.index_cast %c7_i32_540 : i32 to index
    %c0_546 = arith.constant 0 : index
    %c0_547 = arith.constant 0 : index
    %724 = vector.load %arg11[%723, %c0_546, %c0_547] : memref<8x16x128xf32, #tpu.memory_space<vmem>>, vector<1x16x128xf32>
    %725 = vector.shape_cast %724 : vector<1x16x128xf32> to vector<16x128xf32>
    %726 = arith.addf %722, %725 : vector<16x128xf32>
    %c0_548 = arith.constant 0 : index
    %c0_549 = arith.constant 0 : index
    %727 = vector.load %arg12[%c0_548, %c0_549] : memref<16x128xf32, #tpu.memory_space<vmem>>, vector<16x128xf32>
    tpu.vector_store %arg12[%c0_548, %c0_549], %726 {strides = array<i32>} : memref<16x128xf32, #tpu.memory_space<vmem>>, vector<16x128xf32>,
    %c0_550 = arith.constant 0 : index
    %c0_551 = arith.constant 0 : index
    %728 = vector.load %arg12[%c0_550, %c0_551] : memref<16x128xf32, #tpu.memory_space<vmem>>, vector<16x32xf32>
    %cst_552 = arith.constant 5.000000e-01 : f32
    %729 = vector.broadcast %cst_552 : f32 to vector<16x32xf32>
    %730 = arith.mulf %729, %728 : vector<16x32xf32>
    %731 = math.tanh %730 : vector<16x32xf32>
    %cst_553 = arith.constant 5.000000e-01 : f32
    %732 = vector.broadcast %cst_553 : f32 to vector<16x32xf32>
    %733 = arith.mulf %732, %731 : vector<16x32xf32>
    %cst_554 = arith.constant 5.000000e-01 : f32
    %734 = vector.broadcast %cst_554 : f32 to vector<16x32xf32>
    %735 = arith.addf %733, %734 : vector<16x32xf32>
    %c0_555 = arith.constant 0 : index
    %c32_556 = arith.constant 32 : index
    %736 = vector.load %arg12[%c0_555, %c32_556] : memref<16x128xf32, #tpu.memory_space<vmem>>, vector<16x32xf32>
    %cst_557 = arith.constant 5.000000e-01 : f32
    %737 = vector.broadcast %cst_557 : f32 to vector<16x32xf32>
    %738 = arith.mulf %737, %736 : vector<16x32xf32>
    %739 = math.tanh %738 : vector<16x32xf32>
    %cst_558 = arith.constant 5.000000e-01 : f32
    %740 = vector.broadcast %cst_558 : f32 to vector<16x32xf32>
    %741 = arith.mulf %740, %739 : vector<16x32xf32>
    %cst_559 = arith.constant 5.000000e-01 : f32
    %742 = vector.broadcast %cst_559 : f32 to vector<16x32xf32>
    %743 = arith.addf %741, %742 : vector<16x32xf32>
    %c0_560 = arith.constant 0 : index
    %c64_561 = arith.constant 64 : index
    %744 = vector.load %arg12[%c0_560, %c64_561] : memref<16x128xf32, #tpu.memory_space<vmem>>, vector<16x32xf32>
    %745 = math.tanh %744 : vector<16x32xf32>
    %c0_562 = arith.constant 0 : index
    %c0_563 = arith.constant 0 : index
    %746 = vector.load %arg14[%c0_562, %c0_563] : memref<16x32xf32, #tpu.memory_space<vmem>>, vector<16x32xf32>
    %747 = arith.mulf %743, %746 : vector<16x32xf32>
    %748 = arith.mulf %735, %745 : vector<16x32xf32>
    %749 = arith.addf %747, %748 : vector<16x32xf32>
    %c0_564 = arith.constant 0 : index
    %c0_565 = arith.constant 0 : index
    %750 = vector.load %arg14[%c0_564, %c0_565] : memref<16x32xf32, #tpu.memory_space<vmem>>, vector<16x32xf32>
    tpu.vector_store %arg14[%c0_564, %c0_565], %749 {strides = array<i32>} : memref<16x32xf32, #tpu.memory_space<vmem>>, vector<16x32xf32>,
    %c0_566 = arith.constant 0 : index
    %c96_567 = arith.constant 96 : index
    %751 = vector.load %arg12[%c0_566, %c96_567] : memref<16x128xf32, #tpu.memory_space<vmem>>, vector<16x32xf32>
    %cst_568 = arith.constant 5.000000e-01 : f32
    %752 = vector.broadcast %cst_568 : f32 to vector<16x32xf32>
    %753 = arith.mulf %752, %751 : vector<16x32xf32>
    %754 = math.tanh %753 : vector<16x32xf32>
    %cst_569 = arith.constant 5.000000e-01 : f32
    %755 = vector.broadcast %cst_569 : f32 to vector<16x32xf32>
    %756 = arith.mulf %755, %754 : vector<16x32xf32>
    %cst_570 = arith.constant 5.000000e-01 : f32
    %757 = vector.broadcast %cst_570 : f32 to vector<16x32xf32>
    %758 = arith.addf %756, %757 : vector<16x32xf32>
    %759 = math.tanh %749 : vector<16x32xf32>
    %760 = arith.mulf %758, %759 : vector<16x32xf32>
    %c0_571 = arith.constant 0 : index
    %c0_572 = arith.constant 0 : index
    %761 = vector.load %arg13[%c0_571, %c0_572] : memref<16x32xf32, #tpu.memory_space<vmem>>, vector<16x32xf32>
    tpu.vector_store %arg13[%c0_571, %c0_572], %760 {strides = array<i32>} : memref<16x32xf32, #tpu.memory_space<vmem>>, vector<16x32xf32>,
    %c8_i32_573 = arith.constant 8 : i32
    %c0_574 = arith.constant 0 : index
    %c0_575 = arith.constant 0 : index
    %762 = vector.load %arg13[%c0_574, %c0_575] : memref<16x32xf32, #tpu.memory_space<vmem>>, vector<16x32xf32>
    %763 = arith.truncf %762 : vector<16x32xf32> to vector<16x32xbf16>
    %c0_576 = arith.constant 0 : index
    %c0_577 = arith.constant 0 : index
    %764 = vector.load %arg8[%c0_576, %c0_577] : memref<32x128xbf16, #tpu.memory_space<vmem>>, vector<32x128xbf16>
    %cst_578 = arith.constant dense<0.000000e+00> : vector<16x128xf32>
    %765 = tpu.matmul %763, %764, %cst_578 {dimension_numbers = #tpu.dot_dimension_numbers<[1], [0], [0], [1], [0, 0, 1, 1], [], []>} : vector<16x32xbf16>, vector<32x128xbf16>, vector<16x128xf32> -> vector<16x128xf32>
    %c0_579 = arith.constant 0 : index
    %c0_580 = arith.constant 0 : index
    %766 = vector.load %arg9[%c0_579, %c0_580] : memref<1x128xf32, #tpu.memory_space<vmem>>, vector<1x128xf32>
    %767 = vector.broadcast %766 : vector<1x128xf32> to vector<16x128xf32>
    %768 = arith.addf %765, %767 : vector<16x128xf32>
    %c0_581 = arith.constant 0 : index
    %c0_582 = arith.constant 0 : index
    %769 = vector.load %arg10[%c0_581, %c0_582] : memref<16x128xf32, #tpu.memory_space<vmem>>, vector<16x128xf32>
    tpu.vector_store %arg10[%c0_581, %c0_582], %768 {strides = array<i32>} : memref<16x128xf32, #tpu.memory_space<vmem>>, vector<16x128xf32>,
    return
  }
  func.func @transform_0(%arg0: i32) -> (i32, i32, i32) {
    %c0_i32 = arith.constant 0 : i32
    %c0_i32_0 = arith.constant 0 : i32
    %c0_i32_1 = arith.constant 0 : i32
    return %c0_i32, %arg0, %c0_i32_0 : i32, i32, i32
  }
  func.func @transform_1(%arg0: i32) -> (i32, i32) {
    %c0_i32 = arith.constant 0 : i32
    %c0_i32_0 = arith.constant 0 : i32
    %c0_i32_1 = arith.constant 0 : i32
    return %c0_i32, %c0_i32_0 : i32, i32
  }
  func.func @transform_2(%arg0: i32) -> (i32, i32) {
    %c0_i32 = arith.constant 0 : i32
    %c0_i32_0 = arith.constant 0 : i32
    %c0_i32_1 = arith.constant 0 : i32
    return %c0_i32, %c0_i32_0 : i32, i32
  }
  func.func @transform_3(%arg0: i32) -> (i32, i32) {
    %c0_i32 = arith.constant 0 : i32
    %c0_i32_0 = arith.constant 0 : i32
    %c0_i32_1 = arith.constant 0 : i32
    return %c0_i32, %c0_i32_0 : i32, i32
  }
  func.func @transform_4(%arg0: i32) -> (i32, i32) {
    %c0_i32 = arith.constant 0 : i32
    %c0_i32_0 = arith.constant 0 : i32
    %c0_i32_1 = arith.constant 0 : i32
    return %c0_i32, %c0_i32_0 : i32, i32
  }
  func.func @transform_5(%arg0: i32) -> (i32, i32) {
    %c0_i32 = arith.constant 0 : i32
    %c0_i32_0 = arith.constant 0 : i32
    %c0_i32_1 = arith.constant 0 : i32
    return %c0_i32, %c0_i32_0 : i32, i32
  }
  func.func @transform_6(%arg0: i32) -> (i32, i32) {
    %c0_i32 = arith.constant 0 : i32
    %c0_i32_0 = arith.constant 0 : i32
    %c0_i32_1 = arith.constant 0 : i32
    return %c0_i32, %c0_i32_0 : i32, i32
  }
  func.func @transform_7(%arg0: i32) -> (i32, i32) {
    %c0_i32 = arith.constant 0 : i32
    %c0_i32_0 = arith.constant 0 : i32
    %c0_i32_1 = arith.constant 0 : i32
    return %c0_i32, %c0_i32_0 : i32, i32
  }
  func.func @transform_8(%arg0: i32) -> (i32, i32) {
    %c0_i32 = arith.constant 0 : i32
    %c0_i32_0 = arith.constant 0 : i32
    %c0_i32_1 = arith.constant 0 : i32
    return %c0_i32, %c0_i32_0 : i32, i32
  }
  func.func @transform_9(%arg0: i32) -> (i32, i32) {
    %c0_i32 = arith.constant 0 : i32
    %c0_i32_0 = arith.constant 0 : i32
    return %arg0, %c0_i32 : i32, i32
  }
}

</mosaic_0001>

<llo_original>
// kernel: tpu_custom_call.1
$region0: #{tpu_custom_call.1}
  #allocation0 [shape = 'u32[]', space=smem, size = 0x4, offset = 0x4, fixed_abs, tag = 'smem constant byte address 0x4 - core index']
  #allocation1 [shape = 'u32[144,128]{1,0:T(1,128)}', space=vmem, size = 0x12000, scoped, tag = 'internal scratch']
  #allocation2 [shape = 'f32[8,16,128]{2,1,0:T(8,128)}', space=vmem, size = 0x10000, scoped, tag = 'scratch operand']
  #allocation3 [shape = 'f32[16,128]{1,0:T(8,128)}', space=vmem, size = 0x2000, scoped, tag = 'scratch operand']
  #allocation4 [shape = 'f32[16,32]{1,0:T(8,128)}', space=vmem, size = 0x2000, scoped, tag = 'scratch operand']
  #allocation5 [shape = 'f32[16,32]{1,0:T(8,128)}', space=vmem, size = 0x2000, scoped, tag = 'scratch operand']
  #allocation6 [shape = 'bf16[8,16,32]{2,1,0:T(16,128)(2,1)}', space=vmem, size = 0x8000, scoped, tag = 'scratch operand']
  %s0 = inlined_call_operand.hbm [shape: bf16[8,16,16], index: 0, kind: input, shape index: {}]
  %s1 = inlined_call_operand.hbm [shape: bf16[16,128], index: 1, kind: input, shape index: {}]
  %s2 = inlined_call_operand.hbm [shape: bf16[32,128], index: 2, kind: input, shape index: {}]
  %s3 = inlined_call_operand.vmem [shape: f32[1,128], index: 3, kind: input, shape index: {}]
  %s4 = inlined_call_operand.hbm [shape: bf16[32,128], index: 4, kind: input, shape index: {}]
  %s5 = inlined_call_operand.vmem [shape: bf16[32,128], index: 5, kind: input, shape index: {}]
  %s6 = inlined_call_operand.vmem [shape: f32[1,128], index: 6, kind: input, shape index: {}]
  %s7 = inlined_call_operand.hbm [shape: bf16[32,128], index: 7, kind: input, shape index: {}]
  %s8 = inlined_call_operand.vmem [shape: f32[1,128], index: 8, kind: input, shape index: {}]
  %s9 = inlined_call_operand.hbm [shape: f32[16,128], index: 9, kind: output, shape index: {}]
  %s10 = sld [smem:[#allocation0]]
  $region66: #{tpu_custom_call.1} parent=0
    _
  %s12 = ssub.s32 1, %s10
  %s13 = scalar_select 0, %s12, %s10
  $region1: #{tpu_custom_call.1} parent=0
    #allocation7 [shape = 'u8[32768]{0}', space=vmem, size = 0x8000, scoped, tag = 'input window, operand 0, single buffered']
    #allocation8 [shape = 's32[1]{0}', space=sflag, size = 0x4, scoped, tag = 'scoped memory for tpu_custom_call.1']
    #allocation9 [shape = 's32[1]{0}', space=sflag, size = 0x4, scoped, tag = 'scoped memory for tpu_custom_call.1']
    #allocation10 [shape = 'u8[4096]{0}', space=vmem, size = 0x1000, scoped, tag = 'input window, operand 1, single buffered']
    #allocation11 [shape = 's32[1]{0}', space=sflag, size = 0x4, scoped, tag = 'scoped memory for tpu_custom_call.1']
    #allocation12 [shape = 'u8[8192]{0}', space=vmem, size = 0x2000, scoped, tag = 'input window, operand 2, single buffered']
    #allocation13 [shape = 'u8[8192]{0}', space=vmem, size = 0x2000, scoped, tag = 'input window, operand 4, single buffered']
    #allocation14 [shape = 's32[1]{0}', space=sflag, size = 0x4, scoped, tag = 'scoped memory for tpu_custom_call.1']
    #allocation15 [shape = 'u8[8192]{0}', space=vmem, size = 0x2000, scoped, tag = 'input window, operand 7, single buffered']
    #allocation16 [shape = 'u8[8192]{0}', space=vmem, size = 0x2000, scoped, tag = 'output window, operand 0, single buffered']
    %14 = vsyncpa [#allocation8], 0
    %15 = vsyncpa [#allocation11], 0
    %16 = vsyncpa [#allocation14], 0
    %17 = vsyncpa [#allocation9], 0
    // Predicated region
    $region2: #{tpu_custom_call.1} parent=1 // pred_check
      _
    $region3: #{tpu_custom_call.1} parent=1 // pred_check_branch
      %19 = sbr.rel (0) target = $region5
    $region4: #{tpu_custom_call.1} parent=1 // pred_region
      %s21 = ssub.s32 1024, 1024
      %22 = vsyncadd [#allocation8], %s21
      %s23 = sshll.u32 [#allocation7], 4
      %s24 = int_to_ptr.vmem [resolvable:$true] %s23
      %29 = dma.hbm_to_vmem [thread:$0]  %s0, 1024, %s24, [#allocation8], 64, 64, 4
    $region5: #{tpu_custom_call.1} parent=1 // pred_fallthru
      _
    // Predicated region
    $region6: #{tpu_custom_call.1} parent=1 // pred_check
      _
    $region7: #{tpu_custom_call.1} parent=1 // pred_check_branch
      %31 = sbr.rel (0) target = $region9
    $region8: #{tpu_custom_call.1} parent=1 // pred_region
      %s33 = ssub.s32 128, 128
      %34 = vsyncadd [#allocation11], %s33
      %s35 = sshll.u32 [#allocation10], 4
      %s36 = int_to_ptr.vmem [resolvable:$true] %s35
      %41 = dma.hbm_to_vmem [thread:$0]  %s1, 128, %s36, [#allocation11], 64, 64, 4
    $region9: #{tpu_custom_call.1} parent=1 // pred_fallthru
      _
    // Predicated region
    $region10: #{tpu_custom_call.1} parent=1 // pred_check
      _
    $region11: #{tpu_custom_call.1} parent=1 // pred_check_branch
      %43 = sbr.rel (0) target = $region13
    $region12: #{tpu_custom_call.1} parent=1 // pred_region
      %s45 = ssub.s32 256, 256
      %46 = vsyncadd [#allocation11], %s45
      %s47 = sshll.u32 [#allocation12], 4
      %s48 = int_to_ptr.vmem [resolvable:$true] %s47
      %53 = dma.hbm_to_vmem [thread:$0]  %s2, 256, %s48, [#allocation11], 64, 64, 4
    $region13: #{tpu_custom_call.1} parent=1 // pred_fallthru
      _
    // Predicated region
    $region14: #{tpu_custom_call.1} parent=1 // pred_check
      _
    $region15: #{tpu_custom_call.1} parent=1 // pred_check_branch
      %55 = sbr.rel (0) target = $region17
    $region16: #{tpu_custom_call.1} parent=1 // pred_region
      _
    $region17: #{tpu_custom_call.1} parent=1 // pred_fallthru
      _
    // Predicated region
    $region18: #{tpu_custom_call.1} parent=1 // pred_check
      _
    $region19: #{tpu_custom_call.1} parent=1 // pred_check_branch
      %57 = sbr.rel (0) target = $region21
    $region20: #{tpu_custom_call.1} parent=1 // pred_region
      %s59 = ssub.s32 256, 256
      %60 = vsyncadd [#allocation14], %s59
      %s61 = sshll.u32 [#allocation13], 4
      %s62 = int_to_ptr.vmem [resolvable:$true] %s61
      %67 = dma.hbm_to_vmem [thread:$0]  %s4, 256, %s62, [#allocation14], 64, 64, 4
    $region21: #{tpu_custom_call.1} parent=1 // pred_fallthru
      _
    // Predicated region
    $region22: #{tpu_custom_call.1} parent=1 // pred_check
      _
    $region23: #{tpu_custom_call.1} parent=1 // pred_check_branch
      %69 = sbr.rel (0) target = $region25
    $region24: #{tpu_custom_call.1} parent=1 // pred_region
      _
    $region25: #{tpu_custom_call.1} parent=1 // pred_fallthru
      _
    // Predicated region
    $region26: #{tpu_custom_call.1} parent=1 // pred_check
      _
    $region27: #{tpu_custom_call.1} parent=1 // pred_check_branch
      %71 = sbr.rel (0) target = $region29
    $region28: #{tpu_custom_call.1} parent=1 // pred_region
      _
    $region29: #{tpu_custom_call.1} parent=1 // pred_fallthru
      _
    // Predicated region
    $region30: #{tpu_custom_call.1} parent=1 // pred_check
      _
    $region31: #{tpu_custom_call.1} parent=1 // pred_check_branch
      %73 = sbr.rel (0) target = $region33
    $region32: #{tpu_custom_call.1} parent=1 // pred_region
      %s75 = ssub.s32 256, 256
      %76 = vsyncadd [#allocation14], %s75
      %s77 = sshll.u32 [#allocation15], 4
      %s78 = int_to_ptr.vmem [resolvable:$true] %s77
      %83 = dma.hbm_to_vmem [thread:$0]  %s7, 256, %s78, [#allocation14], 64, 64, 4
    $region33: #{tpu_custom_call.1} parent=1 // pred_fallthru
      _
    // Predicated region
    $region34: #{tpu_custom_call.1} parent=1 // pred_check
      _
    $region35: #{tpu_custom_call.1} parent=1 // pred_check_branch
      %85 = sbr.rel (0) target = $region37
    $region36: #{tpu_custom_call.1} parent=1 // pred_region
      _
    $region37: #{tpu_custom_call.1} parent=1 // pred_fallthru
      _
    // Predicated region
    $region38: #{tpu_custom_call.1} parent=1 // pred_check
      _
    $region39: #{tpu_custom_call.1} parent=1 // pred_check_branch
      %87 = sbr.rel (0) target = $region41
    $region40: #{tpu_custom_call.1} parent=1 // pred_region
      %88 = dma.done [#allocation8], 1024
    $region41: #{tpu_custom_call.1} parent=1 // pred_fallthru
      _
    // Predicated region
    $region42: #{tpu_custom_call.1} parent=1 // pred_check
      _
    $region43: #{tpu_custom_call.1} parent=1 // pred_check_branch
      %90 = sbr.rel (0) target = $region45
    $region44: #{tpu_custom_call.1} parent=1 // pred_region
      %91 = dma.done [#allocation11], 128
    $region45: #{tpu_custom_call.1} parent=1 // pred_fallthru
      _
    // Predicated region
    $region46: #{tpu_custom_call.1} parent=1 // pred_check
      _
    $region47: #{tpu_custom_call.1} parent=1 // pred_check_branch
      %93 = sbr.rel (0) target = $region49
    $region48: #{tpu_custom_call.1} parent=1 // pred_region
      %94 = dma.done [#allocation11], 256
    $region49: #{tpu_custom_call.1} parent=1 // pred_fallthru
      _
    // Predicated region
    $region50: #{tpu_custom_call.1} parent=1 // pred_check
      _
    $region51: #{tpu_custom_call.1} parent=1 // pred_check_branch
      %96 = sbr.rel (0) target = $region53
    $region52: #{tpu_custom_call.1} parent=1 // pred_region
      %97 = dma.done [#allocation14], 256
    $region53: #{tpu_custom_call.1} parent=1 // pred_fallthru
      _
    // Predicated region
    $region54: #{tpu_custom_call.1} parent=1 // pred_check
      _
    $region55: #{tpu_custom_call.1} parent=1 // pred_check_branch
      %99 = sbr.rel (0) target = $region57
    $region56: #{tpu_custom_call.1} parent=1 // pred_region
      %100 = dma.done [#allocation14], 256
    $region57: #{tpu_custom_call.1} parent=1 // pred_fallthru
      _
    %vm102 = vcmask 261120
    %103 = vst.msk [vmem:[#allocation4] sm:$0xff] %vm102, 0.0
    %104 = vst.msk [vmem:[#allocation4 + $0x8] sm:$0xff] %vm102, 0.0
    %105 = vst.msk [vmem:[#allocation5] sm:$0xff] %vm102, 0.0
    %106 = vst.msk [vmem:[#allocation5 + $0x8] sm:$0xff] %vm102, 0.0
    %v107 = vld [vmem:[#allocation7] sm:$0xf]
    %v108 = vld [vmem:[#allocation7 + $0x4] sm:$0xf]
    %v109 = vld [vmem:[#allocation7 + $0x8] sm:$0xf]
    %v110 = vld [vmem:[#allocation7 + $0xc] sm:$0xf]
    %v111 = vld [vmem:[#allocation7 + $0x10] sm:$0xf]
    %v112 = vld [vmem:[#allocation7 + $0x14] sm:$0xf]
    %v113 = vld [vmem:[#allocation7 + $0x18] sm:$0xf]
    %v114 = vld [vmem:[#allocation7 + $0x1c] sm:$0xf]
    %v115 = vld [vmem:[#allocation7 + $0x20] sm:$0xf]
    %v116 = vld [vmem:[#allocation7 + $0x24] sm:$0xf]
    %v117 = vld [vmem:[#allocation7 + $0x28] sm:$0xf]
    %v118 = vld [vmem:[#allocation7 + $0x2c] sm:$0xf]
    %v119 = vld [vmem:[#allocation7 + $0x30] sm:$0xf]
    %v120 = vld [vmem:[#allocation7 + $0x34] sm:$0xf]
    %v121 = vld [vmem:[#allocation7 + $0x38] sm:$0xf]
    %v122 = vld [vmem:[#allocation7 + $0x3c] sm:$0xf]
    %v123 = vld [vmem:[#allocation10] sm:$0xf]
    %v124 = vld [vmem:[#allocation10 + $0x4] sm:$0xf]
    %v125 = vld [vmem:[%s3] sm:$0x1]
    %v127 = vlaneseq
    %v128 = vshrl.u32 %v127, 7
    %v129 = vsub.s32 0, %v128
    %v130 = vrot.slane %v125, %v129
    %v148 = vunpack.c.l.b16 %v107
    %v149 = vunpack.c.l.b16 %v108
    %v150 = vunpack.c.l.b16 %v109
    %v151 = vunpack.c.l.b16 %v110
    %v152 = vunpack.c.l.b16 %v111
    %v153 = vunpack.c.l.b16 %v112
    %v154 = vunpack.c.l.b16 %v113
    %v155 = vunpack.c.l.b16 %v114
    %v156 = vunpack.c.l.b16 %v115
    %v157 = vunpack.c.l.b16 %v116
    %v158 = vunpack.c.l.b16 %v117
    %v159 = vunpack.c.l.b16 %v118
    %v160 = vunpack.c.l.b16 %v119
    %v161 = vunpack.c.l.b16 %v120
    %v162 = vunpack.c.l.b16 %v121
    %v163 = vunpack.c.l.b16 %v122
    %v164 = vpack.c.b16 %v149, %v148
    %v165 = vpack.c.b16 %v151, %v150
    %v166 = vpack.c.b16 %v153, %v152
    %v167 = vpack.c.b16 %v155, %v154
    %v168 = vpack.c.b16 %v157, %v156
    %v169 = vpack.c.b16 %v159, %v158
    %v170 = vpack.c.b16 %v161, %v160
    %v171 = vpack.c.b16 %v163, %v162
    %v174 = vunpack.c.l.b16 %v123
    %v175 = vunpack.c.l.b16 %v124
    %v176 = vpack.c.b16 %v175, %v174
    %vm178 = vcmask 130048
    %v180 = vsel %vm178, %v164, 0
    %v183 = vsel %vm178, %v165, 0
    %v186 = vsel %vm178, %v166, 0
    %v189 = vsel %vm178, %v167, 0
    %v192 = vsel %vm178, %v168, 0
    %v195 = vsel %vm178, %v169, 0
    %v198 = vsel %vm178, %v170, 0
    %v201 = vsel %vm178, %v171, 0
    %203 = vmatprep.subr.bf16.mxu0 0
    %204 = vmatpush1.bf16.msra.mxu0 %v176
    %205 = vmatprep.subr.bf16.mxu0 0
    %206 = vmatpush1.bf16.msra.mxu0 0
    %207 = vmatprep.subr.bf16.mxu0 0
    %208 = vmatpush1.bf16.msra.mxu0 0
    %209 = vmatprep.subr.bf16.mxu0 0
    %210 = vmatpush1.bf16.msra.mxu0 0
    %211 = vmatprep.subr.bf16.mxu0 0
    %212 = vmatpush1.bf16.msra.mxu0 0
    %213 = vmatprep.subr.bf16.mxu0 0
    %214 = vmatpush1.bf16.msra.mxu0 0
    %215 = vmatprep.subr.bf16.mxu0 0
    %216 = vmatpush1.bf16.msra.mxu0 0
    %217 = vmatprep.subr.bf16.mxu0 0
    %218 = vmatpush1.bf16.msra.mxu0 0
    %219 = vmatprep.subr.bf16.mxu0 0
    %220 = vmatpush1.bf16.msra.mxu0 0
    %221 = vmatprep.subr.bf16.mxu0 0
    %222 = vmatpush1.bf16.msra.mxu0 0
    %223 = vmatprep.subr.bf16.mxu0 0
    %224 = vmatpush1.bf16.msra.mxu0 0
    %225 = vmatprep.subr.bf16.mxu0 0
    %226 = vmatpush1.bf16.msra.mxu0 0
    %227 = vmatprep.subr.bf16.mxu0 0
    %228 = vmatpush1.bf16.msra.mxu0 0
    %229 = vmatprep.subr.bf16.mxu0 0
    %230 = vmatpush1.bf16.msra.mxu0 0
    %231 = vmatprep.subr.bf16.mxu0 0
    %232 = vmatpush1.bf16.msra.mxu0 0
    %233 = vmatprep.subr.bf16.mxu0 0
    %234 = vmatpush1.bf16.msra.mxu0 0
    %235 = vmatprep.mubr.bf16.mxu0 0
    %236 = vmatmul.mubr.bf16.gmra.mrb[0].mxu0 %v180
    %v237 = vpop.f32.mrb[0].mxu0
    %v238 = vadd.f32 %v130, %v237
    %v239 = vpop.f32.mrb[0].mxu0
    %v240 = vpop.f32.mrb[0].mxu0
    %v241 = vadd.f32 %v130, %v240
    %v242 = vpop.f32.mrb[0].mxu0
    %243 = vmatprep.mubr.bf16.mxu0 0
    %244 = vmatmul.mubr.bf16.gmra.mrb[0].mxu0 %v183
    %v245 = vpop.f32.mrb[0].mxu0
    %v246 = vadd.f32 %v130, %v245
    %v247 = vpop.f32.mrb[0].mxu0
    %v248 = vpop.f32.mrb[0].mxu0
    %v249 = vadd.f32 %v130, %v248
    %v250 = vpop.f32.mrb[0].mxu0
    %251 = vmatprep.mubr.bf16.mxu0 0
    %252 = vmatmul.mubr.bf16.gmra.mrb[0].mxu0 %v186
    %v253 = vpop.f32.mrb[0].mxu0
    %v254 = vadd.f32 %v130, %v253
    %v255 = vpop.f32.mrb[0].mxu0
    %v256 = vpop.f32.mrb[0].mxu0
    %v257 = vadd.f32 %v130, %v256
    %v258 = vpop.f32.mrb[0].mxu0
    %259 = vmatprep.mubr.bf16.mxu0 0
    %260 = vmatmul.mubr.bf16.gmra.mrb[0].mxu0 %v189
    %v261 = vpop.f32.mrb[0].mxu0
    %v262 = vadd.f32 %v130, %v261
    %v263 = vpop.f32.mrb[0].mxu0
    %v264 = vpop.f32.mrb[0].mxu0
    %v265 = vadd.f32 %v130, %v264
    %v266 = vpop.f32.mrb[0].mxu0
    %267 = vmatprep.mubr.bf16.mxu0 0
    %268 = vmatmul.mubr.bf16.gmra.mrb[0].mxu0 %v192
    %v269 = vpop.f32.mrb[0].mxu0
    %v270 = vadd.f32 %v130, %v269
    %v271 = vpop.f32.mrb[0].mxu0
    %v272 = vpop.f32.mrb[0].mxu0
    %v273 = vadd.f32 %v130, %v272
    %v274 = vpop.f32.mrb[0].mxu0
    %275 = vmatprep.mubr.bf16.mxu0 0
    %276 = vmatmul.mubr.bf16.gmra.mrb[0].mxu0 %v195
    %v277 = vpop.f32.mrb[0].mxu0
    %v278 = vadd.f32 %v130, %v277
    %v279 = vpop.f32.mrb[0].mxu0
    %v280 = vpop.f32.mrb[0].mxu0
    %v281 = vadd.f32 %v130, %v280
    %v282 = vpop.f32.mrb[0].mxu0
    %283 = vmatprep.mubr.bf16.mxu0 0
    %284 = vmatmul.mubr.bf16.gmra.mrb[0].mxu0 %v198
    %v285 = vpop.f32.mrb[0].mxu0
    %v286 = vadd.f32 %v130, %v285
    %v287 = vpop.f32.mrb[0].mxu0
    %v288 = vpop.f32.mrb[0].mxu0
    %v289 = vadd.f32 %v130, %v288
    %v290 = vpop.f32.mrb[0].mxu0
    %291 = vmatprep.mubr.bf16.mxu0 0
    %292 = vmatmul.mubr.bf16.gmra.mrb[0].mxu0 %v201
    %v293 = vpop.f32.mrb[0].mxu0
    %v294 = vadd.f32 %v130, %v293
    %v295 = vpop.f32.mrb[0].mxu0
    %v296 = vpop.f32.mrb[0].mxu0
    %v297 = vadd.f32 %v130, %v296
    %v298 = vpop.f32.mrb[0].mxu0
    %299 = vdwg.mxu0
    %300 = vst [vmem:[#allocation2] sm:$0xff] %v238
    %301 = vst [vmem:[#allocation2 + $0x8] sm:$0xff] %v241
    %302 = vst [vmem:[#allocation2 + $0x10] sm:$0xff] %v246
    %303 = vst [vmem:[#allocation2 + $0x18] sm:$0xff] %v249
    %304 = vst [vmem:[#allocation2 + $0x20] sm:$0xff] %v254
    %305 = vst [vmem:[#allocation2 + $0x28] sm:$0xff] %v257
    %306 = vst [vmem:[#allocation2 + $0x30] sm:$0xff] %v262
    %307 = vst [vmem:[#allocation2 + $0x38] sm:$0xff] %v265
    %308 = vst [vmem:[#allocation2 + $0x40] sm:$0xff] %v270
    %309 = vst [vmem:[#allocation2 + $0x48] sm:$0xff] %v273
    %310 = vst [vmem:[#allocation2 + $0x50] sm:$0xff] %v278
    %311 = vst [vmem:[#allocation2 + $0x58] sm:$0xff] %v281
    %312 = vst [vmem:[#allocation2 + $0x60] sm:$0xff] %v286
    %313 = vst [vmem:[#allocation2 + $0x68] sm:$0xff] %v289
    %314 = vst [vmem:[#allocation2 + $0x70] sm:$0xff] %v294
    %315 = vst [vmem:[#allocation2 + $0x78] sm:$0xff] %v297
    %v316 = vld [vmem:[#allocation4] sm:$0xff]
    %v317 = vld [vmem:[#allocation4 + $0x8] sm:$0xff]
    %v318 = vpack.c.bf16 %v317, %v316
    %v319 = vld [vmem:[#allocation12] sm:$0xf]
    %v320 = vld [vmem:[#allocation12 + $0x4] sm:$0xf]
    %v321 = vld [vmem:[#allocation12 + $0x8] sm:$0xf]
    %v322 = vld [vmem:[#allocation12 + $0xc] sm:$0xf]
    %v323 = vld [vmem:[#allocation2] sm:$0xff]
    %v324 = vld [vmem:[#allocation2 + $0x8] sm:$0xff]
    %v329 = vunpack.c.l.b16 %v319
    %v330 = vunpack.c.l.b16 %v320
    %v331 = vunpack.c.l.b16 %v321
    %v332 = vunpack.c.l.b16 %v322
    %v333 = vpack.c.b16 %v330, %v329
    %v334 = vpack.c.b16 %v332, %v331
    %v338 = vsel %vm102, %v318, 0
    %340 = vmatprep.subr.bf16.mxu0 0
    %341 = vmatpush1.bf16.msra.mxu0 %v333
    %342 = vmatprep.subr.bf16.mxu0 0
    %343 = vmatpush1.bf16.msra.mxu0 %v334
    %344 = vmatprep.subr.bf16.mxu0 0
    %345 = vmatpush1.bf16.msra.mxu0 0
    %346 = vmatprep.subr.bf16.mxu0 0
    %347 = vmatpush1.bf16.msra.mxu0 0
    %348 = vmatprep.subr.bf16.mxu0 0
    %349 = vmatpush1.bf16.msra.mxu0 0
    %350 = vmatprep.subr.bf16.mxu0 0
    %351 = vmatpush1.bf16.msra.mxu0 0
    %352 = vmatprep.subr.bf16.mxu0 0
    %353 = vmatpush1.bf16.msra.mxu0 0
    %354 = vmatprep.subr.bf16.mxu0 0
    %355 = vmatpush1.bf16.msra.mxu0 0
    %356 = vmatprep.subr.bf16.mxu0 0
    %357 = vmatpush1.bf16.msra.mxu0 0
    %358 = vmatprep.subr.bf16.mxu0 0
    %359 = vmatpush1.bf16.msra.mxu0 0
    %360 = vmatprep.subr.bf16.mxu0 0
    %361 = vmatpush1.bf16.msra.mxu0 0
    %362 = vmatprep.subr.bf16.mxu0 0
    %363 = vmatpush1.bf16.msra.mxu0 0
    %364 = vmatprep.subr.bf16.mxu0 0
    %365 = vmatpush1.bf16.msra.mxu0 0
    %366 = vmatprep.subr.bf16.mxu0 0
    %367 = vmatpush1.bf16.msra.mxu0 0
    %368 = vmatprep.subr.bf16.mxu0 0
    %369 = vmatpush1.bf16.msra.mxu0 0
    %370 = vmatprep.subr.bf16.mxu0 0
    %371 = vmatpush1.bf16.msra.mxu0 0
    %372 = vmatprep.mubr.bf16.mxu0 0
    %373 = vmatmul.mubr.bf16.gmra.mrb[0].mxu0 %v338
    %v374 = vpop.f32.mrb[0].mxu0
    %v375 = vadd.f32 %v323, %v374
    %v376 = vpop.f32.mrb[0].mxu0
    %v377 = vpop.f32.mrb[0].mxu0
    %v378 = vadd.f32 %v324, %v377
    %v379 = vpop.f32.mrb[0].mxu0
    %380 = vdwg.mxu0
    %381 = vst [vmem:[#allocation3] sm:$0xff] %v375
    %382 = vst [vmem:[#allocation3 + $0x8] sm:$0xff] %v378
    %v383 = vld [vmem:[#allocation3] sm:$0xff]
    %v384 = vld [vmem:[#allocation3 + $0x8] sm:$0xff]
    %v385 = vmul.f32 %v383, 0.5
    %v386 = vmul.f32 %v384, 0.5
    %v387 = vtanh.pop %v385
    %v388 = vtanh.pop %v386
    %v389 = vmul.f32 %v387, 0.5
    %v390 = vmul.f32 %v388, 0.5
    %v391 = vadd.f32 %v389, 0.5
    %v392 = vadd.f32 %v390, 0.5
    %v393 = vtanh.pop %v383
    %v394 = vtanh.pop %v384
    %v395 = vld [vmem:[#allocation5] sm:$0xff]
    %v396 = vld [vmem:[#allocation5 + $0x8] sm:$0xff]
    %399 = vrot.lane.b32.xlu0 %v395, 32
    %v400 = vpop.permute.xlu0 %399
    %401 = vrot.lane.b32.xlu0 %v396, 32
    %v402 = vpop.permute.xlu0 %401
    %v405 = vmul.f32 %v391, %v400
    %v406 = vmul.f32 %v392, %v402
    %409 = vrot.lane.b32.xlu0 %v393, 64
    %v410 = vpop.permute.xlu0 %409
    %411 = vrot.lane.b32.xlu0 %v394, 64
    %v412 = vpop.permute.xlu0 %411
    %v415 = vmul.f32 %v391, %v410
    %v416 = vmul.f32 %v392, %v412
    %419 = vrot.lane.b32.xlu0 %v415, 32
    %v420 = vpop.permute.xlu0 %419
    %421 = vrot.lane.b32.xlu0 %v416, 32
    %v422 = vpop.permute.xlu0 %421
    %v425 = vadd.f32 %v405, %v420
    %v426 = vadd.f32 %v406, %v422
    %429 = vrot.lane.b32.xlu0 %v425, 96
    %v430 = vpop.permute.xlu0 %429
    %431 = vrot.lane.b32.xlu0 %v426, 96
    %v432 = vpop.permute.xlu0 %431
    %435 = vst.msk [vmem:[#allocation5] sm:$0xff] %vm102, %v430
    %436 = vst.msk [vmem:[#allocation5 + $0x8] sm:$0xff] %vm102, %v432
    %v437 = vld [vmem:[#allocation3] sm:$0xff]
    %v438 = vld [vmem:[#allocation3 + $0x8] sm:$0xff]
    %v439 = vmul.f32 %v437, 0.5
    %v440 = vmul.f32 %v438, 0.5
    %v441 = vtanh.pop %v439
    %v442 = vtanh.pop %v440
    %v443 = vmul.f32 %v441, 0.5
    %v444 = vmul.f32 %v442, 0.5
    %v445 = vadd.f32 %v443, 0.5
    %v446 = vadd.f32 %v444, 0.5
    %v447 = vtanh.pop %v425
    %v448 = vtanh.pop %v426
    %451 = vrot.lane.b32.xlu0 %v447, 64
    %v452 = vpop.permute.xlu0 %451
    %453 = vrot.lane.b32.xlu0 %v448, 64
    %v454 = vpop.permute.xlu0 %453
    %v457 = vmul.f32 %v445, %v452
    %v458 = vmul.f32 %v446, %v454
    %461 = vrot.lane.b32.xlu0 %v457, 32
    %v462 = vpop.permute.xlu0 %461
    %463 = vrot.lane.b32.xlu0 %v458, 32
    %v464 = vpop.permute.xlu0 %463
    %467 = vst.msk [vmem:[#allocation4] sm:$0xff] %vm102, %v462
    %468 = vst.msk [vmem:[#allocation4 + $0x8] sm:$0xff] %vm102, %v464
    %v469 = vpack.c.bf16 %v458, %v457
    %471 = vrot.lane.b32.xlu0 %v469, 32
    %v472 = vpop.permute.xlu0 %471
    %474 = vst.msk [vmem:[#allocation6] sm:$0xff] %vm102, %v472
    %v475 = vld [vmem:[#allocation4] sm:$0xff]
    %v476 = vld [vmem:[#allocation4 + $0x8] sm:$0xff]
    %v477 = vpack.c.bf16 %v476, %v475
    %v478 = vld [vmem:[#allocation12] sm:$0xf]
    %v479 = vld [vmem:[#allocation12 + $0x4] sm:$0xf]
    %v480 = vld [vmem:[#allocation12 + $0x8] sm:$0xf]
    %v481 = vld [vmem:[#allocation12 + $0xc] sm:$0xf]
    %s482 = scalar_lea.vmem [#allocation2], 16
    %v483 = vld [vmem:[%s482] sm:$0xff]
    %v484 = vld [vmem:[%s482 + $0x8] sm:$0xff]
    %v489 = vunpack.c.l.b16 %v478
    %v490 = vunpack.c.l.b16 %v479
    %v491 = vunpack.c.l.b16 %v480
    %v492 = vunpack.c.l.b16 %v481
    %v493 = vpack.c.b16 %v490, %v489
    %v494 = vpack.c.b16 %v492, %v491
    %v498 = vsel %vm102, %v477, 0
    %500 = vmatprep.subr.bf16.mxu0 0
    %501 = vmatpush1.bf16.msra.mxu0 %v493
    %502 = vmatprep.subr.bf16.mxu0 0
    %503 = vmatpush1.bf16.msra.mxu0 %v494
    %504 = vmatprep.subr.bf16.mxu0 0
    %505 = vmatpush1.bf16.msra.mxu0 0
    %506 = vmatprep.subr.bf16.mxu0 0
    %507 = vmatpush1.bf16.msra.mxu0 0
    %508 = vmatprep.subr.bf16.mxu0 0
    %509 = vmatpush1.bf16.msra.mxu0 0
    %510 = vmatprep.subr.bf16.mxu0 0
    %511 = vmatpush1.bf16.msra.mxu0 0
    %512 = vmatprep.subr.bf16.mxu0 0
    %513 = vmatpush1.bf16.msra.mxu0 0
    %514 = vmatprep.subr.bf16.mxu0 0
    %515 = vmatpush1.bf16.msra.mxu0 0
    %516 = vmatprep.subr.bf16.mxu0 0
    %517 = vmatpush1.bf16.msra.mxu0 0
    %518 = vmatprep.subr.bf16.mxu0 0
    %519 = vmatpush1.bf16.msra.mxu0 0
    %520 = vmatprep.subr.bf16.mxu0 0
    %521 = vmatpush1.bf16.msra.mxu0 0
    %522 = vmatprep.subr.bf16.mxu0 0
    %523 = vmatpush1.bf16.msra.mxu0 0
    %524 = vmatprep.subr.bf16.mxu0 0
    %525 = vmatpush1.bf16.msra.mxu0 0
    %526 = vmatprep.subr.bf16.mxu0 0
    %527 = vmatpush1.bf16.msra.mxu0 0
    %528 = vmatprep.subr.bf16.mxu0 0
    %529 = vmatpush1.bf16.msra.mxu0 0
    %530 = vmatprep.subr.bf16.mxu0 0
    %531 = vmatpush1.bf16.msra.mxu0 0
    %532 = vmatprep.mubr.bf16.mxu0 0
    %533 = vmatmul.mubr.bf16.gmra.mrb[0].mxu0 %v498
    %v534 = vpop.f32.mrb[0].mxu0
    %v535 = vadd.f32 %v483, %v534
    %v536 = vpop.f32.mrb[0].mxu0
    %v537 = vpop.f32.mrb[0].mxu0
    %v538 = vadd.f32 %v484, %v537
    %v539 = vpop.f32.mrb[0].mxu0
    %540 = vdwg.mxu0
    %541 = vst [vmem:[#allocation3] sm:$0xff] %v535
    %542 = vst [vmem:[#allocation3 + $0x8] sm:$0xff] %v538
    %v543 = vld [vmem:[#allocation3] sm:$0xff]
    %v544 = vld [vmem:[#allocation3 + $0x8] sm:$0xff]
    %v545 = vmul.f32 %v543, 0.5
    %v546 = vmul.f32 %v544, 0.5
    %v547 = vtanh.pop %v545
    %v548 = vtanh.pop %v546
    %v549 = vmul.f32 %v547, 0.5
    %v550 = vmul.f32 %v548, 0.5
    %v551 = vadd.f32 %v549, 0.5
    %v552 = vadd.f32 %v550, 0.5
    %v553 = vtanh.pop %v543
    %v554 = vtanh.pop %v544
    %v555 = vld [vmem:[#allocation5] sm:$0xff]
    %v556 = vld [vmem:[#allocation5 + $0x8] sm:$0xff]
    %559 = vrot.lane.b32.xlu0 %v555, 32
    %v560 = vpop.permute.xlu0 %559
    %561 = vrot.lane.b32.xlu0 %v556, 32
    %v562 = vpop.permute.xlu0 %561
    %v565 = vmul.f32 %v551, %v560
    %v566 = vmul.f32 %v552, %v562
    %569 = vrot.lane.b32.xlu0 %v553, 64
    %v570 = vpop.permute.xlu0 %569
    %571 = vrot.lane.b32.xlu0 %v554, 64
    %v572 = vpop.permute.xlu0 %571
    %v575 = vmul.f32 %v551, %v570
    %v576 = vmul.f32 %v552, %v572
    %579 = vrot.lane.b32.xlu0 %v575, 32
    %v580 = vpop.permute.xlu0 %579
    %581 = vrot.lane.b32.xlu0 %v576, 32
    %v582 = vpop.permute.xlu0 %581
    %v585 = vadd.f32 %v565, %v580
    %v586 = vadd.f32 %v566, %v582
    %589 = vrot.lane.b32.xlu0 %v585, 96
    %v590 = vpop.permute.xlu0 %589
    %591 = vrot.lane.b32.xlu0 %v586, 96
    %v592 = vpop.permute.xlu0 %591
    %595 = vst.msk [vmem:[#allocation5] sm:$0xff] %vm102, %v590
    %596 = vst.msk [vmem:[#allocation5 + $0x8] sm:$0xff] %vm102, %v592
    %v597 = vld [vmem:[#allocation3] sm:$0xff]
    %v598 = vld [vmem:[#allocation3 + $0x8] sm:$0xff]
    %v599 = vmul.f32 %v597, 0.5
    %v600 = vmul.f32 %v598, 0.5
    %v601 = vtanh.pop %v599
    %v602 = vtanh.pop %v600
    %v603 = vmul.f32 %v601, 0.5
    %v604 = vmul.f32 %v602, 0.5
    %v605 = vadd.f32 %v603, 0.5
    %v606 = vadd.f32 %v604, 0.5
    %v607 = vtanh.pop %v585
    %v608 = vtanh.pop %v586
    %611 = vrot.lane.b32.xlu0 %v607, 64
    %v612 = vpop.permute.xlu0 %611
    %613 = vrot.lane.b32.xlu0 %v608, 64
    %v614 = vpop.permute.xlu0 %613
    %v617 = vmul.f32 %v605, %v612
    %v618 = vmul.f32 %v606, %v614
    %621 = vrot.lane.b32.xlu0 %v617, 32
    %v622 = vpop.permute.xlu0 %621
    %623 = vrot.lane.b32.xlu0 %v618, 32
    %v624 = vpop.permute.xlu0 %623
    %627 = vst.msk [vmem:[#allocation4] sm:$0xff] %vm102, %v622
    %628 = vst.msk [vmem:[#allocation4 + $0x8] sm:$0xff] %vm102, %v624
    %v629 = vpack.c.bf16 %v618, %v617
    %631 = vrot.lane.b32.xlu0 %v629, 32
    %v632 = vpop.permute.xlu0 %631
    %s634 = scalar_lea.vmem [#allocation6], 8
    %635 = vst.msk [vmem:[%s634] sm:$0xff] %vm102, %v632
    %v636 = vld [vmem:[#allocation4] sm:$0xff]
    %v637 = vld [vmem:[#allocation4 + $0x8] sm:$0xff]
    %v638 = vpack.c.bf16 %v637, %v636
    %v639 = vld [vmem:[#allocation12] sm:$0xf]
    %v640 = vld [vmem:[#allocation12 + $0x4] sm:$0xf]
    %v641 = vld [vmem:[#allocation12 + $0x8] sm:$0xf]
    %v642 = vld [vmem:[#allocation12 + $0xc] sm:$0xf]
    %s643 = scalar_lea.vmem [#allocation2], 32
    %v644 = vld [vmem:[%s643] sm:$0xff]
    %v645 = vld [vmem:[%s643 + $0x8] sm:$0xff]
    %v650 = vunpack.c.l.b16 %v639
    %v651 = vunpack.c.l.b16 %v640
    %v652 = vunpack.c.l.b16 %v641
    %v653 = vunpack.c.l.b16 %v642
    %v654 = vpack.c.b16 %v651, %v650
    %v655 = vpack.c.b16 %v653, %v652
    %v659 = vsel %vm102, %v638, 0
    %661 = vmatprep.subr.bf16.mxu0 0
    %662 = vmatpush1.bf16.msra.mxu0 %v654
    %663 = vmatprep.subr.bf16.mxu0 0
    %664 = vmatpush1.bf16.msra.mxu0 %v655
    %665 = vmatprep.subr.bf16.mxu0 0
    %666 = vmatpush1.bf16.msra.mxu0 0
    %667 = vmatprep.subr.bf16.mxu0 0
    %668 = vmatpush1.bf16.msra.mxu0 0
    %669 = vmatprep.subr.bf16.mxu0 0
    %670 = vmatpush1.bf16.msra.mxu0 0
    %671 = vmatprep.subr.bf16.mxu0 0
    %672 = vmatpush1.bf16.msra.mxu0 0
    %673 = vmatprep.subr.bf16.mxu0 0
    %674 = vmatpush1.bf16.msra.mxu0 0
    %675 = vmatprep.subr.bf16.mxu0 0
    %676 = vmatpush1.bf16.msra.mxu0 0
    %677 = vmatprep.subr.bf16.mxu0 0
    %678 = vmatpush1.bf16.msra.mxu0 0
    %679 = vmatprep.subr.bf16.mxu0 0
    %680 = vmatpush1.bf16.msra.mxu0 0
    %681 = vmatprep.subr.bf16.mxu0 0
    %682 = vmatpush1.bf16.msra.mxu0 0
    %683 = vmatprep.subr.bf16.mxu0 0
    %684 = vmatpush1.bf16.msra.mxu0 0
    %685 = vmatprep.subr.bf16.mxu0 0
    %686 = vmatpush1.bf16.msra.mxu0 0
    %687 = vmatprep.subr.bf16.mxu0 0
    %688 = vmatpush1.bf16.msra.mxu0 0
    %689 = vmatprep.subr.bf16.mxu0 0
    %690 = vmatpush1.bf16.msra.mxu0 0
    %691 = vmatprep.subr.bf16.mxu0 0
    %692 = vmatpush1.bf16.msra.mxu0 0
    %693 = vmatprep.mubr.bf16.mxu0 0
    %694 = vmatmul.mubr.bf16.gmra.mrb[0].mxu0 %v659
    %v695 = vpop.f32.mrb[0].mxu0
    %v696 = vadd.f32 %v644, %v695
    %v697 = vpop.f32.mrb[0].mxu0
    %v698 = vpop.f32.mrb[0].mxu0
    %v699 = vadd.f32 %v645, %v698
    %v700 = vpop.f32.mrb[0].mxu0
    %701 = vdwg.mxu0
    %702 = vst [vmem:[#allocation3] sm:$0xff] %v696
    %703 = vst [vmem:[#allocation3 + $0x8] sm:$0xff] %v699
    %v704 = vld [vmem:[#allocation3] sm:$0xff]
    %v705 = vld [vmem:[#allocation3 + $0x8] sm:$0xff]
    %v706 = vmul.f32 %v704, 0.5
    %v707 = vmul.f32 %v705, 0.5
    %v708 = vtanh.pop %v706
    %v709 = vtanh.pop %v707
    %v710 = vmul.f32 %v708, 0.5
    %v711 = vmul.f32 %v709, 0.5
    %v712 = vadd.f32 %v710, 0.5
    %v713 = vadd.f32 %v711, 0.5
    %v714 = vtanh.pop %v704
    %v715 = vtanh.pop %v705
    %v716 = vld [vmem:[#allocation5] sm:$0xff]
    %v717 = vld [vmem:[#allocation5 + $0x8] sm:$0xff]
    %720 = vrot.lane.b32.xlu0 %v716, 32
    %v721 = vpop.permute.xlu0 %720
    %722 = vrot.lane.b32.xlu0 %v717, 32
    %v723 = vpop.permute.xlu0 %722
    %v726 = vmul.f32 %v712, %v721
    %v727 = vmul.f32 %v713, %v723
    %730 = vrot.lane.b32.xlu0 %v714, 64
    %v731 = vpop.permute.xlu0 %730
    %732 = vrot.lane.b32.xlu0 %v715, 64
    %v733 = vpop.permute.xlu0 %732
    %v736 = vmul.f32 %v712, %v731
    %v737 = vmul.f32 %v713, %v733
    %740 = vrot.lane.b32.xlu0 %v736, 32
    %v741 = vpop.permute.xlu0 %740
    %742 = vrot.lane.b32.xlu0 %v737, 32
    %v743 = vpop.permute.xlu0 %742
    %v746 = vadd.f32 %v726, %v741
    %v747 = vadd.f32 %v727, %v743
    %750 = vrot.lane.b32.xlu0 %v746, 96
    %v751 = vpop.permute.xlu0 %750
    %752 = vrot.lane.b32.xlu0 %v747, 96
    %v753 = vpop.permute.xlu0 %752
    %756 = vst.msk [vmem:[#allocation5] sm:$0xff] %vm102, %v751
    %757 = vst.msk [vmem:[#allocation5 + $0x8] sm:$0xff] %vm102, %v753
    %v758 = vld [vmem:[#allocation3] sm:$0xff]
    %v759 = vld [vmem:[#allocation3 + $0x8] sm:$0xff]
    %v760 = vmul.f32 %v758, 0.5
    %v761 = vmul.f32 %v759, 0.5
    %v762 = vtanh.pop %v760
    %v763 = vtanh.pop %v761
    %v764 = vmul.f32 %v762, 0.5
    %v765 = vmul.f32 %v763, 0.5
    %v766 = vadd.f32 %v764, 0.5
    %v767 = vadd.f32 %v765, 0.5
    %v768 = vtanh.pop %v746
    %v769 = vtanh.pop %v747
    %772 = vrot.lane.b32.xlu0 %v768, 64
    %v773 = vpop.permute.xlu0 %772
    %774 = vrot.lane.b32.xlu0 %v769, 64
    %v775 = vpop.permute.xlu0 %774
    %v778 = vmul.f32 %v766, %v773
    %v779 = vmul.f32 %v767, %v775
    %782 = vrot.lane.b32.xlu0 %v778, 32
    %v783 = vpop.permute.xlu0 %782
    %784 = vrot.lane.b32.xlu0 %v779, 32
    %v785 = vpop.permute.xlu0 %784
    %788 = vst.msk [vmem:[#allocation4] sm:$0xff] %vm102, %v783
    %789 = vst.msk [vmem:[#allocation4 + $0x8] sm:$0xff] %vm102, %v785
    %v790 = vpack.c.bf16 %v779, %v778
    %792 = vrot.lane.b32.xlu0 %v790, 32
    %v793 = vpop.permute.xlu0 %792
    %s795 = scalar_lea.vmem [#allocation6], 16
    %796 = vst.msk [vmem:[%s795] sm:$0xff] %vm102, %v793
    %v797 = vld [vmem:[#allocation4] sm:$0xff]
    %v798 = vld [vmem:[#allocation4 + $0x8] sm:$0xff]
    %v799 = vpack.c.bf16 %v798, %v797
    %v800 = vld [vmem:[#allocation12] sm:$0xf]
    %v801 = vld [vmem:[#allocation12 + $0x4] sm:$0xf]
    %v802 = vld [vmem:[#allocation12 + $0x8] sm:$0xf]
    %v803 = vld [vmem:[#allocation12 + $0xc] sm:$0xf]
    %s804 = scalar_lea.vmem [#allocation2], 48
    %v805 = vld [vmem:[%s804] sm:$0xff]
    %v806 = vld [vmem:[%s804 + $0x8] sm:$0xff]
    %v811 = vunpack.c.l.b16 %v800
    %v812 = vunpack.c.l.b16 %v801
    %v813 = vunpack.c.l.b16 %v802
    %v814 = vunpack.c.l.b16 %v803
    %v815 = vpack.c.b16 %v812, %v811
    %v816 = vpack.c.b16 %v814, %v813
    %v820 = vsel %vm102, %v799, 0
    %822 = vmatprep.subr.bf16.mxu0 0
    %823 = vmatpush1.bf16.msra.mxu0 %v815
    %824 = vmatprep.subr.bf16.mxu0 0
    %825 = vmatpush1.bf16.msra.mxu0 %v816
    %826 = vmatprep.subr.bf16.mxu0 0
    %827 = vmatpush1.bf16.msra.mxu0 0
    %828 = vmatprep.subr.bf16.mxu0 0
    %829 = vmatpush1.bf16.msra.mxu0 0
    %830 = vmatprep.subr.bf16.mxu0 0
    %831 = vmatpush1.bf16.msra.mxu0 0
    %832 = vmatprep.subr.bf16.mxu0 0
    %833 = vmatpush1.bf16.msra.mxu0 0
    %834 = vmatprep.subr.bf16.mxu0 0
    %835 = vmatpush1.bf16.msra.mxu0 0
    %836 = vmatprep.subr.bf16.mxu0 0
    %837 = vmatpush1.bf16.msra.mxu0 0
    %838 = vmatprep.subr.bf16.mxu0 0
    %839 = vmatpush1.bf16.msra.mxu0 0
    %840 = vmatprep.subr.bf16.mxu0 0
    %841 = vmatpush1.bf16.msra.mxu0 0
    %842 = vmatprep.subr.bf16.mxu0 0
    %843 = vmatpush1.bf16.msra.mxu0 0
    %844 = vmatprep.subr.bf16.mxu0 0
    %845 = vmatpush1.bf16.msra.mxu0 0
    %846 = vmatprep.subr.bf16.mxu0 0
    %847 = vmatpush1.bf16.msra.mxu0 0
    %848 = vmatprep.subr.bf16.mxu0 0
    %849 = vmatpush1.bf16.msra.mxu0 0
    %850 = vmatprep.subr.bf16.mxu0 0
    %851 = vmatpush1.bf16.msra.mxu0 0
    %852 = vmatprep.subr.bf16.mxu0 0
    %853 = vmatpush1.bf16.msra.mxu0 0
    %854 = vmatprep.mubr.bf16.mxu0 0
    %855 = vmatmul.mubr.bf16.gmra.mrb[0].mxu0 %v820
    %v856 = vpop.f32.mrb[0].mxu0
    %v857 = vadd.f32 %v805, %v856
    %v858 = vpop.f32.mrb[0].mxu0
    %v859 = vpop.f32.mrb[0].mxu0
    %v860 = vadd.f32 %v806, %v859
    %v861 = vpop.f32.mrb[0].mxu0
    %862 = vdwg.mxu0
    %863 = vst [vmem:[#allocation3] sm:$0xff] %v857
    %864 = vst [vmem:[#allocation3 + $0x8] sm:$0xff] %v860
    %v865 = vld [vmem:[#allocation3] sm:$0xff]
    %v866 = vld [vmem:[#allocation3 + $0x8] sm:$0xff]
    %v867 = vmul.f32 %v865, 0.5
    %v868 = vmul.f32 %v866, 0.5
    %v869 = vtanh.pop %v867
    %v870 = vtanh.pop %v868
    %v871 = vmul.f32 %v869, 0.5
    %v872 = vmul.f32 %v870, 0.5
    %v873 = vadd.f32 %v871, 0.5
    %v874 = vadd.f32 %v872, 0.5
    %v875 = vtanh.pop %v865
    %v876 = vtanh.pop %v866
    %v877 = vld [vmem:[#allocation5] sm:$0xff]
    %v878 = vld [vmem:[#allocation5 + $0x8] sm:$0xff]
    %881 = vrot.lane.b32.xlu0 %v877, 32
    %v882 = vpop.permute.xlu0 %881
    %883 = vrot.lane.b32.xlu0 %v878, 32
    %v884 = vpop.permute.xlu0 %883
    %v887 = vmul.f32 %v873, %v882
    %v888 = vmul.f32 %v874, %v884
    %891 = vrot.lane.b32.xlu0 %v875, 64
    %v892 = vpop.permute.xlu0 %891
    %893 = vrot.lane.b32.xlu0 %v876, 64
    %v894 = vpop.permute.xlu0 %893
    %v897 = vmul.f32 %v873, %v892
    %v898 = vmul.f32 %v874, %v894
    %901 = vrot.lane.b32.xlu0 %v897, 32
    %v902 = vpop.permute.xlu0 %901
    %903 = vrot.lane.b32.xlu0 %v898, 32
    %v904 = vpop.permute.xlu0 %903
    %v907 = vadd.f32 %v887, %v902
    %v908 = vadd.f32 %v888, %v904
    %911 = vrot.lane.b32.xlu0 %v907, 96
    %v912 = vpop.permute.xlu0 %911
    %913 = vrot.lane.b32.xlu0 %v908, 96
    %v914 = vpop.permute.xlu0 %913
    %917 = vst.msk [vmem:[#allocation5] sm:$0xff] %vm102, %v912
    %918 = vst.msk [vmem:[#allocation5 + $0x8] sm:$0xff] %vm102, %v914
    %v919 = vld [vmem:[#allocation3] sm:$0xff]
    %v920 = vld [vmem:[#allocation3 + $0x8] sm:$0xff]
    %v921 = vmul.f32 %v919, 0.5
    %v922 = vmul.f32 %v920, 0.5
    %v923 = vtanh.pop %v921
    %v924 = vtanh.pop %v922
    %v925 = vmul.f32 %v923, 0.5
    %v926 = vmul.f32 %v924, 0.5
    %v927 = vadd.f32 %v925, 0.5
    %v928 = vadd.f32 %v926, 0.5
    %v929 = vtanh.pop %v907
    %v930 = vtanh.pop %v908
    %933 = vrot.lane.b32.xlu0 %v929, 64
    %v934 = vpop.permute.xlu0 %933
    %935 = vrot.lane.b32.xlu0 %v930, 64
    %v936 = vpop.permute.xlu0 %935
    %v939 = vmul.f32 %v927, %v934
    %v940 = vmul.f32 %v928, %v936
    %943 = vrot.lane.b32.xlu0 %v939, 32
    %v944 = vpop.permute.xlu0 %943
    %945 = vrot.lane.b32.xlu0 %v940, 32
    %v946 = vpop.permute.xlu0 %945
    %949 = vst.msk [vmem:[#allocation4] sm:$0xff] %vm102, %v944
    %950 = vst.msk [vmem:[#allocation4 + $0x8] sm:$0xff] %vm102, %v946
    %v951 = vpack.c.bf16 %v940, %v939
    %953 = vrot.lane.b32.xlu0 %v951, 32
    %v954 = vpop.permute.xlu0 %953
    %s956 = scalar_lea.vmem [#allocation6], 24
    %957 = vst.msk [vmem:[%s956] sm:$0xff] %vm102, %v954
    %v958 = vld [vmem:[#allocation4] sm:$0xff]
    %v959 = vld [vmem:[#allocation4 + $0x8] sm:$0xff]
    %v960 = vpack.c.bf16 %v959, %v958
    %v961 = vld [vmem:[#allocation12] sm:$0xf]
    %v962 = vld [vmem:[#allocation12 + $0x4] sm:$0xf]
    %v963 = vld [vmem:[#allocation12 + $0x8] sm:$0xf]
    %v964 = vld [vmem:[#allocation12 + $0xc] sm:$0xf]
    %s965 = scalar_lea.vmem [#allocation2], 64
    %v966 = vld [vmem:[%s965] sm:$0xff]
    %v967 = vld [vmem:[%s965 + $0x8] sm:$0xff]
    %v972 = vunpack.c.l.b16 %v961
    %v973 = vunpack.c.l.b16 %v962
    %v974 = vunpack.c.l.b16 %v963
    %v975 = vunpack.c.l.b16 %v964
    %v976 = vpack.c.b16 %v973, %v972
    %v977 = vpack.c.b16 %v975, %v974
    %v981 = vsel %vm102, %v960, 0
    %983 = vmatprep.subr.bf16.mxu0 0
    %984 = vmatpush1.bf16.msra.mxu0 %v976
    %985 = vmatprep.subr.bf16.mxu0 0
    %986 = vmatpush1.bf16.msra.mxu0 %v977
    %987 = vmatprep.subr.bf16.mxu0 0
    %988 = vmatpush1.bf16.msra.mxu0 0
    %989 = vmatprep.subr.bf16.mxu0 0
    %990 = vmatpush1.bf16.msra.mxu0 0
    %991 = vmatprep.subr.bf16.mxu0 0
    %992 = vmatpush1.bf16.msra.mxu0 0
    %993 = vmatprep.subr.bf16.mxu0 0
    %994 = vmatpush1.bf16.msra.mxu0 0
    %995 = vmatprep.subr.bf16.mxu0 0
    %996 = vmatpush1.bf16.msra.mxu0 0
    %997 = vmatprep.subr.bf16.mxu0 0
    %998 = vmatpush1.bf16.msra.mxu0 0
    %999 = vmatprep.subr.bf16.mxu0 0
    %1000 = vmatpush1.bf16.msra.mxu0 0
    %1001 = vmatprep.subr.bf16.mxu0 0
    %1002 = vmatpush1.bf16.msra.mxu0 0
    %1003 = vmatprep.subr.bf16.mxu0 0
    %1004 = vmatpush1.bf16.msra.mxu0 0
    %1005 = vmatprep.subr.bf16.mxu0 0
    %1006 = vmatpush1.bf16.msra.mxu0 0
    %1007 = vmatprep.subr.bf16.mxu0 0
    %1008 = vmatpush1.bf16.msra.mxu0 0
    %1009 = vmatprep.subr.bf16.mxu0 0
    %1010 = vmatpush1.bf16.msra.mxu0 0
    %1011 = vmatprep.subr.bf16.mxu0 0
    %1012 = vmatpush1.bf16.msra.mxu0 0
    %1013 = vmatprep.subr.bf16.mxu0 0
    %1014 = vmatpush1.bf16.msra.mxu0 0
    %1015 = vmatprep.mubr.bf16.mxu0 0
    %1016 = vmatmul.mubr.bf16.gmra.mrb[0].mxu0 %v981
    %v1017 = vpop.f32.mrb[0].mxu0
    %v1018 = vadd.f32 %v966, %v1017
    %v1019 = vpop.f32.mrb[0].mxu0
    %v1020 = vpop.f32.mrb[0].mxu0
    %v1021 = vadd.f32 %v967, %v1020
    %v1022 = vpop.f32.mrb[0].mxu0
    %1023 = vdwg.mxu0
    %1024 = vst [vmem:[#allocation3] sm:$0xff] %v1018
    %1025 = vst [vmem:[#allocation3 + $0x8] sm:$0xff] %v1021
    %v1026 = vld [vmem:[#allocation3] sm:$0xff]
    %v1027 = vld [vmem:[#allocation3 + $0x8] sm:$0xff]
    %v1028 = vmul.f32 %v1026, 0.5
    %v1029 = vmul.f32 %v1027, 0.5
    %v1030 = vtanh.pop %v1028
    %v1031 = vtanh.pop %v1029
    %v1032 = vmul.f32 %v1030, 0.5
    %v1033 = vmul.f32 %v1031, 0.5
    %v1034 = vadd.f32 %v1032, 0.5
    %v1035 = vadd.f32 %v1033, 0.5
    %v1036 = vtanh.pop %v1026
    %v1037 = vtanh.pop %v1027
    %v1038 = vld [vmem:[#allocation5] sm:$0xff]
    %v1039 = vld [vmem:[#allocation5 + $0x8] sm:$0xff]
    %1042 = vrot.lane.b32.xlu0 %v1038, 32
    %v1043 = vpop.permute.xlu0 %1042
    %1044 = vrot.lane.b32.xlu0 %v1039, 32
    %v1045 = vpop.permute.xlu0 %1044
    %v1048 = vmul.f32 %v1034, %v1043
    %v1049 = vmul.f32 %v1035, %v1045
    %1052 = vrot.lane.b32.xlu0 %v1036, 64
    %v1053 = vpop.permute.xlu0 %1052
    %1054 = vrot.lane.b32.xlu0 %v1037, 64
    %v1055 = vpop.permute.xlu0 %1054
    %v1058 = vmul.f32 %v1034, %v1053
    %v1059 = vmul.f32 %v1035, %v1055
    %1062 = vrot.lane.b32.xlu0 %v1058, 32
    %v1063 = vpop.permute.xlu0 %1062
    %1064 = vrot.lane.b32.xlu0 %v1059, 32
    %v1065 = vpop.permute.xlu0 %1064
    %v1068 = vadd.f32 %v1048, %v1063
    %v1069 = vadd.f32 %v1049, %v1065
    %1072 = vrot.lane.b32.xlu0 %v1068, 96
    %v1073 = vpop.permute.xlu0 %1072
    %1074 = vrot.lane.b32.xlu0 %v1069, 96
    %v1075 = vpop.permute.xlu0 %1074
    %1078 = vst.msk [vmem:[#allocation5] sm:$0xff] %vm102, %v1073
    %1079 = vst.msk [vmem:[#allocation5 + $0x8] sm:$0xff] %vm102, %v1075
    %v1080 = vld [vmem:[#allocation3] sm:$0xff]
    %v1081 = vld [vmem:[#allocation3 + $0x8] sm:$0xff]
    %v1082 = vmul.f32 %v1080, 0.5
    %v1083 = vmul.f32 %v1081, 0.5
    %v1084 = vtanh.pop %v1082
    %v1085 = vtanh.pop %v1083
    %v1086 = vmul.f32 %v1084, 0.5
    %v1087 = vmul.f32 %v1085, 0.5
    %v1088 = vadd.f32 %v1086, 0.5
    %v1089 = vadd.f32 %v1087, 0.5
    %v1090 = vtanh.pop %v1068
    %v1091 = vtanh.pop %v1069
    %1094 = vrot.lane.b32.xlu0 %v1090, 64
    %v1095 = vpop.permute.xlu0 %1094
    %1096 = vrot.lane.b32.xlu0 %v1091, 64
    %v1097 = vpop.permute.xlu0 %1096
    %v1100 = vmul.f32 %v1088, %v1095
    %v1101 = vmul.f32 %v1089, %v1097
    %1104 = vrot.lane.b32.xlu0 %v1100, 32
    %v1105 = vpop.permute.xlu0 %1104
    %1106 = vrot.lane.b32.xlu0 %v1101, 32
    %v1107 = vpop.permute.xlu0 %1106
    %1110 = vst.msk [vmem:[#allocation4] sm:$0xff] %vm102, %v1105
    %1111 = vst.msk [vmem:[#allocation4 + $0x8] sm:$0xff] %vm102, %v1107
    %v1112 = vpack.c.bf16 %v1101, %v1100
    %1114 = vrot.lane.b32.xlu0 %v1112, 32
    %v1115 = vpop.permute.xlu0 %1114
    %s1117 = scalar_lea.vmem [#allocation6], 32
    %1118 = vst.msk [vmem:[%s1117] sm:$0xff] %vm102, %v1115
    %v1119 = vld [vmem:[#allocation4] sm:$0xff]
    %v1120 = vld [vmem:[#allocation4 + $0x8] sm:$0xff]
    %v1121 = vpack.c.bf16 %v1120, %v1119
    %v1122 = vld [vmem:[#allocation12] sm:$0xf]
    %v1123 = vld [vmem:[#allocation12 + $0x4] sm:$0xf]
    %v1124 = vld [vmem:[#allocation12 + $0x8] sm:$0xf]
    %v1125 = vld [vmem:[#allocation12 + $0xc] sm:$0xf]
    %s1126 = scalar_lea.vmem [#allocation2], 80
    %v1127 = vld [vmem:[%s1126] sm:$0xff]
    %v1128 = vld [vmem:[%s1126 + $0x8] sm:$0xff]
    %v1133 = vunpack.c.l.b16 %v1122
    %v1134 = vunpack.c.l.b16 %v1123
    %v1135 = vunpack.c.l.b16 %v1124
    %v1136 = vunpack.c.l.b16 %v1125
    %v1137 = vpack.c.b16 %v1134, %v1133
    %v1138 = vpack.c.b16 %v1136, %v1135
    %v1142 = vsel %vm102, %v1121, 0
    %1144 = vmatprep.subr.bf16.mxu0 0
    %1145 = vmatpush1.bf16.msra.mxu0 %v1137
    %1146 = vmatprep.subr.bf16.mxu0 0
    %1147 = vmatpush1.bf16.msra.mxu0 %v1138
    %1148 = vmatprep.subr.bf16.mxu0 0
    %1149 = vmatpush1.bf16.msra.mxu0 0
    %1150 = vmatprep.subr.bf16.mxu0 0
    %1151 = vmatpush1.bf16.msra.mxu0 0
    %1152 = vmatprep.subr.bf16.mxu0 0
    %1153 = vmatpush1.bf16.msra.mxu0 0
    %1154 = vmatprep.subr.bf16.mxu0 0
    %1155 = vmatpush1.bf16.msra.mxu0 0
    %1156 = vmatprep.subr.bf16.mxu0 0
    %1157 = vmatpush1.bf16.msra.mxu0 0
    %1158 = vmatprep.subr.bf16.mxu0 0
    %1159 = vmatpush1.bf16.msra.mxu0 0
    %1160 = vmatprep.subr.bf16.mxu0 0
    %1161 = vmatpush1.bf16.msra.mxu0 0
    %1162 = vmatprep.subr.bf16.mxu0 0
    %1163 = vmatpush1.bf16.msra.mxu0 0
    %1164 = vmatprep.subr.bf16.mxu0 0
    %1165 = vmatpush1.bf16.msra.mxu0 0
    %1166 = vmatprep.subr.bf16.mxu0 0
    %1167 = vmatpush1.bf16.msra.mxu0 0
    %1168 = vmatprep.subr.bf16.mxu0 0
    %1169 = vmatpush1.bf16.msra.mxu0 0
    %1170 = vmatprep.subr.bf16.mxu0 0
    %1171 = vmatpush1.bf16.msra.mxu0 0
    %1172 = vmatprep.subr.bf16.mxu0 0
    %1173 = vmatpush1.bf16.msra.mxu0 0
    %1174 = vmatprep.subr.bf16.mxu0 0
    %1175 = vmatpush1.bf16.msra.mxu0 0
    %1176 = vmatprep.mubr.bf16.mxu0 0
    %1177 = vmatmul.mubr.bf16.gmra.mrb[0].mxu0 %v1142
    %v1178 = vpop.f32.mrb[0].mxu0
    %v1179 = vadd.f32 %v1127, %v1178
    %v1180 = vpop.f32.mrb[0].mxu0
    %v1181 = vpop.f32.mrb[0].mxu0
    %v1182 = vadd.f32 %v1128, %v1181
    %v1183 = vpop.f32.mrb[0].mxu0
    %1184 = vdwg.mxu0
    %1185 = vst [vmem:[#allocation3] sm:$0xff] %v1179
    %1186 = vst [vmem:[#allocation3 + $0x8] sm:$0xff] %v1182
    %v1187 = vld [vmem:[#allocation3] sm:$0xff]
    %v1188 = vld [vmem:[#allocation3 + $0x8] sm:$0xff]
    %v1189 = vmul.f32 %v1187, 0.5
    %v1190 = vmul.f32 %v1188, 0.5
    %v1191 = vtanh.pop %v1189
    %v1192 = vtanh.pop %v1190
    %v1193 = vmul.f32 %v1191, 0.5
    %v1194 = vmul.f32 %v1192, 0.5
    %v1195 = vadd.f32 %v1193, 0.5
    %v1196 = vadd.f32 %v1194, 0.5
    %v1197 = vtanh.pop %v1187
    %v1198 = vtanh.pop %v1188
    %v1199 = vld [vmem:[#allocation5] sm:$0xff]
    %v1200 = vld [vmem:[#allocation5 + $0x8] sm:$0xff]
    %1203 = vrot.lane.b32.xlu0 %v1199, 32
    %v1204 = vpop.permute.xlu0 %1203
    %1205 = vrot.lane.b32.xlu0 %v1200, 32
    %v1206 = vpop.permute.xlu0 %1205
    %v1209 = vmul.f32 %v1195, %v1204
    %v1210 = vmul.f32 %v1196, %v1206
    %1213 = vrot.lane.b32.xlu0 %v1197, 64
    %v1214 = vpop.permute.xlu0 %1213
    %1215 = vrot.lane.b32.xlu0 %v1198, 64
    %v1216 = vpop.permute.xlu0 %1215
    %v1219 = vmul.f32 %v1195, %v1214
    %v1220 = vmul.f32 %v1196, %v1216
    %1223 = vrot.lane.b32.xlu0 %v1219, 32
    %v1224 = vpop.permute.xlu0 %1223
    %1225 = vrot.lane.b32.xlu0 %v1220, 32
    %v1226 = vpop.permute.xlu0 %1225
    %v1229 = vadd.f32 %v1209, %v1224
    %v1230 = vadd.f32 %v1210, %v1226
    %1233 = vrot.lane.b32.xlu0 %v1229, 96
    %v1234 = vpop.permute.xlu0 %1233
    %1235 = vrot.lane.b32.xlu0 %v1230, 96
    %v1236 = vpop.permute.xlu0 %1235
    %1239 = vst.msk [vmem:[#allocation5] sm:$0xff] %vm102, %v1234
    %1240 = vst.msk [vmem:[#allocation5 + $0x8] sm:$0xff] %vm102, %v1236
    %v1241 = vld [vmem:[#allocation3] sm:$0xff]
    %v1242 = vld [vmem:[#allocation3 + $0x8] sm:$0xff]
    %v1243 = vmul.f32 %v1241, 0.5
    %v1244 = vmul.f32 %v1242, 0.5
    %v1245 = vtanh.pop %v1243
    %v1246 = vtanh.pop %v1244
    %v1247 = vmul.f32 %v1245, 0.5
    %v1248 = vmul.f32 %v1246, 0.5
    %v1249 = vadd.f32 %v1247, 0.5
    %v1250 = vadd.f32 %v1248, 0.5
    %v1251 = vtanh.pop %v1229
    %v1252 = vtanh.pop %v1230
    %1255 = vrot.lane.b32.xlu0 %v1251, 64
    %v1256 = vpop.permute.xlu0 %1255
    %1257 = vrot.lane.b32.xlu0 %v1252, 64
    %v1258 = vpop.permute.xlu0 %1257
    %v1261 = vmul.f32 %v1249, %v1256
    %v1262 = vmul.f32 %v1250, %v1258
    %1265 = vrot.lane.b32.xlu0 %v1261, 32
    %v1266 = vpop.permute.xlu0 %1265
    %1267 = vrot.lane.b32.xlu0 %v1262, 32
    %v1268 = vpop.permute.xlu0 %1267
    %1271 = vst.msk [vmem:[#allocation4] sm:$0xff] %vm102, %v1266
    %1272 = vst.msk [vmem:[#allocation4 + $0x8] sm:$0xff] %vm102, %v1268
    %v1273 = vpack.c.bf16 %v1262, %v1261
    %1275 = vrot.lane.b32.xlu0 %v1273, 32
    %v1276 = vpop.permute.xlu0 %1275
    %s1278 = scalar_lea.vmem [#allocation6], 40
    %1279 = vst.msk [vmem:[%s1278] sm:$0xff] %vm102, %v1276
    %v1280 = vld [vmem:[#allocation4] sm:$0xff]
    %v1281 = vld [vmem:[#allocation4 + $0x8] sm:$0xff]
    %v1282 = vpack.c.bf16 %v1281, %v1280
    %v1283 = vld [vmem:[#allocation12] sm:$0xf]
    %v1284 = vld [vmem:[#allocation12 + $0x4] sm:$0xf]
    %v1285 = vld [vmem:[#allocation12 + $0x8] sm:$0xf]
    %v1286 = vld [vmem:[#allocation12 + $0xc] sm:$0xf]
    %s1287 = scalar_lea.vmem [#allocation2], 96
    %v1288 = vld [vmem:[%s1287] sm:$0xff]
    %v1289 = vld [vmem:[%s1287 + $0x8] sm:$0xff]
    %v1294 = vunpack.c.l.b16 %v1283
    %v1295 = vunpack.c.l.b16 %v1284
    %v1296 = vunpack.c.l.b16 %v1285
    %v1297 = vunpack.c.l.b16 %v1286
    %v1298 = vpack.c.b16 %v1295, %v1294
    %v1299 = vpack.c.b16 %v1297, %v1296
    %v1303 = vsel %vm102, %v1282, 0
    %1305 = vmatprep.subr.bf16.mxu0 0
    %1306 = vmatpush1.bf16.msra.mxu0 %v1298
    %1307 = vmatprep.subr.bf16.mxu0 0
    %1308 = vmatpush1.bf16.msra.mxu0 %v1299
    %1309 = vmatprep.subr.bf16.mxu0 0
    %1310 = vmatpush1.bf16.msra.mxu0 0
    %1311 = vmatprep.subr.bf16.mxu0 0
    %1312 = vmatpush1.bf16.msra.mxu0 0
    %1313 = vmatprep.subr.bf16.mxu0 0
    %1314 = vmatpush1.bf16.msra.mxu0 0
    %1315 = vmatprep.subr.bf16.mxu0 0
    %1316 = vmatpush1.bf16.msra.mxu0 0
    %1317 = vmatprep.subr.bf16.mxu0 0
    %1318 = vmatpush1.bf16.msra.mxu0 0
    %1319 = vmatprep.subr.bf16.mxu0 0
    %1320 = vmatpush1.bf16.msra.mxu0 0
    %1321 = vmatprep.subr.bf16.mxu0 0
    %1322 = vmatpush1.bf16.msra.mxu0 0
    %1323 = vmatprep.subr.bf16.mxu0 0
    %1324 = vmatpush1.bf16.msra.mxu0 0
    %1325 = vmatprep.subr.bf16.mxu0 0
    %1326 = vmatpush1.bf16.msra.mxu0 0
    %1327 = vmatprep.subr.bf16.mxu0 0
    %1328 = vmatpush1.bf16.msra.mxu0 0
    %1329 = vmatprep.subr.bf16.mxu0 0
    %1330 = vmatpush1.bf16.msra.mxu0 0
    %1331 = vmatprep.subr.bf16.mxu0 0
    %1332 = vmatpush1.bf16.msra.mxu0 0
    %1333 = vmatprep.subr.bf16.mxu0 0
    %1334 = vmatpush1.bf16.msra.mxu0 0
    %1335 = vmatprep.subr.bf16.mxu0 0
    %1336 = vmatpush1.bf16.msra.mxu0 0
    %1337 = vmatprep.mubr.bf16.mxu0 0
    %1338 = vmatmul.mubr.bf16.gmra.mrb[0].mxu0 %v1303
    %v1339 = vpop.f32.mrb[0].mxu0
    %v1340 = vadd.f32 %v1288, %v1339
    %v1341 = vpop.f32.mrb[0].mxu0
    %v1342 = vpop.f32.mrb[0].mxu0
    %v1343 = vadd.f32 %v1289, %v1342
    %v1344 = vpop.f32.mrb[0].mxu0
    %1345 = vdwg.mxu0
    %1346 = vst [vmem:[#allocation3] sm:$0xff] %v1340
    %1347 = vst [vmem:[#allocation3 + $0x8] sm:$0xff] %v1343
    %v1348 = vld [vmem:[#allocation3] sm:$0xff]
    %v1349 = vld [vmem:[#allocation3 + $0x8] sm:$0xff]
    %v1350 = vmul.f32 %v1348, 0.5
    %v1351 = vmul.f32 %v1349, 0.5
    %v1352 = vtanh.pop %v1350
    %v1353 = vtanh.pop %v1351
    %v1354 = vmul.f32 %v1352, 0.5
    %v1355 = vmul.f32 %v1353, 0.5
    %v1356 = vadd.f32 %v1354, 0.5
    %v1357 = vadd.f32 %v1355, 0.5
    %v1358 = vtanh.pop %v1348
    %v1359 = vtanh.pop %v1349
    %v1360 = vld [vmem:[#allocation5] sm:$0xff]
    %v1361 = vld [vmem:[#allocation5 + $0x8] sm:$0xff]
    %1364 = vrot.lane.b32.xlu0 %v1360, 32
    %v1365 = vpop.permute.xlu0 %1364
    %1366 = vrot.lane.b32.xlu0 %v1361, 32
    %v1367 = vpop.permute.xlu0 %1366
    %v1370 = vmul.f32 %v1356, %v1365
    %v1371 = vmul.f32 %v1357, %v1367
    %1374 = vrot.lane.b32.xlu0 %v1358, 64
    %v1375 = vpop.permute.xlu0 %1374
    %1376 = vrot.lane.b32.xlu0 %v1359, 64
    %v1377 = vpop.permute.xlu0 %1376
    %v1380 = vmul.f32 %v1356, %v1375
    %v1381 = vmul.f32 %v1357, %v1377
    %1384 = vrot.lane.b32.xlu0 %v1380, 32
    %v1385 = vpop.permute.xlu0 %1384
    %1386 = vrot.lane.b32.xlu0 %v1381, 32
    %v1387 = vpop.permute.xlu0 %1386
    %v1390 = vadd.f32 %v1370, %v1385
    %v1391 = vadd.f32 %v1371, %v1387
    %1394 = vrot.lane.b32.xlu0 %v1390, 96
    %v1395 = vpop.permute.xlu0 %1394
    %1396 = vrot.lane.b32.xlu0 %v1391, 96
    %v1397 = vpop.permute.xlu0 %1396
    %1400 = vst.msk [vmem:[#allocation5] sm:$0xff] %vm102, %v1395
    %1401 = vst.msk [vmem:[#allocation5 + $0x8] sm:$0xff] %vm102, %v1397
    %v1402 = vld [vmem:[#allocation3] sm:$0xff]
    %v1403 = vld [vmem:[#allocation3 + $0x8] sm:$0xff]
    %v1404 = vmul.f32 %v1402, 0.5
    %v1405 = vmul.f32 %v1403, 0.5
    %v1406 = vtanh.pop %v1404
    %v1407 = vtanh.pop %v1405
    %v1408 = vmul.f32 %v1406, 0.5
    %v1409 = vmul.f32 %v1407, 0.5
    %v1410 = vadd.f32 %v1408, 0.5
    %v1411 = vadd.f32 %v1409, 0.5
    %v1412 = vtanh.pop %v1390
    %v1413 = vtanh.pop %v1391
    %1416 = vrot.lane.b32.xlu0 %v1412, 64
    %v1417 = vpop.permute.xlu0 %1416
    %1418 = vrot.lane.b32.xlu0 %v1413, 64
    %v1419 = vpop.permute.xlu0 %1418
    %v1422 = vmul.f32 %v1410, %v1417
    %v1423 = vmul.f32 %v1411, %v1419
    %1426 = vrot.lane.b32.xlu0 %v1422, 32
    %v1427 = vpop.permute.xlu0 %1426
    %1428 = vrot.lane.b32.xlu0 %v1423, 32
    %v1429 = vpop.permute.xlu0 %1428
    %1432 = vst.msk [vmem:[#allocation4] sm:$0xff] %vm102, %v1427
    %1433 = vst.msk [vmem:[#allocation4 + $0x8] sm:$0xff] %vm102, %v1429
    %v1434 = vpack.c.bf16 %v1423, %v1422
    %1436 = vrot.lane.b32.xlu0 %v1434, 32
    %v1437 = vpop.permute.xlu0 %1436
    %s1439 = scalar_lea.vmem [#allocation6], 48
    %1440 = vst.msk [vmem:[%s1439] sm:$0xff] %vm102, %v1437
    %v1441 = vld [vmem:[#allocation4] sm:$0xff]
    %v1442 = vld [vmem:[#allocation4 + $0x8] sm:$0xff]
    %v1443 = vpack.c.bf16 %v1442, %v1441
    %v1444 = vld [vmem:[#allocation12] sm:$0xf]
    %v1445 = vld [vmem:[#allocation12 + $0x4] sm:$0xf]
    %v1446 = vld [vmem:[#allocation12 + $0x8] sm:$0xf]
    %v1447 = vld [vmem:[#allocation12 + $0xc] sm:$0xf]
    %s1448 = scalar_lea.vmem [#allocation2], 112
    %v1449 = vld [vmem:[%s1448] sm:$0xff]
    %v1450 = vld [vmem:[%s1448 + $0x8] sm:$0xff]
    %v1455 = vunpack.c.l.b16 %v1444
    %v1456 = vunpack.c.l.b16 %v1445
    %v1457 = vunpack.c.l.b16 %v1446
    %v1458 = vunpack.c.l.b16 %v1447
    %v1459 = vpack.c.b16 %v1456, %v1455
    %v1460 = vpack.c.b16 %v1458, %v1457
    %v1464 = vsel %vm102, %v1443, 0
    %1466 = vmatprep.subr.bf16.mxu0 0
    %1467 = vmatpush1.bf16.msra.mxu0 %v1459
    %1468 = vmatprep.subr.bf16.mxu0 0
    %1469 = vmatpush1.bf16.msra.mxu0 %v1460
    %1470 = vmatprep.subr.bf16.mxu0 0
    %1471 = vmatpush1.bf16.msra.mxu0 0
    %1472 = vmatprep.subr.bf16.mxu0 0
    %1473 = vmatpush1.bf16.msra.mxu0 0
    %1474 = vmatprep.subr.bf16.mxu0 0
    %1475 = vmatpush1.bf16.msra.mxu0 0
    %1476 = vmatprep.subr.bf16.mxu0 0
    %1477 = vmatpush1.bf16.msra.mxu0 0
    %1478 = vmatprep.subr.bf16.mxu0 0
    %1479 = vmatpush1.bf16.msra.mxu0 0
    %1480 = vmatprep.subr.bf16.mxu0 0
    %1481 = vmatpush1.bf16.msra.mxu0 0
    %1482 = vmatprep.subr.bf16.mxu0 0
    %1483 = vmatpush1.bf16.msra.mxu0 0
    %1484 = vmatprep.subr.bf16.mxu0 0
    %1485 = vmatpush1.bf16.msra.mxu0 0
    %1486 = vmatprep.subr.bf16.mxu0 0
    %1487 = vmatpush1.bf16.msra.mxu0 0
    %1488 = vmatprep.subr.bf16.mxu0 0
    %1489 = vmatpush1.bf16.msra.mxu0 0
    %1490 = vmatprep.subr.bf16.mxu0 0
    %1491 = vmatpush1.bf16.msra.mxu0 0
    %1492 = vmatprep.subr.bf16.mxu0 0
    %1493 = vmatpush1.bf16.msra.mxu0 0
    %1494 = vmatprep.subr.bf16.mxu0 0
    %1495 = vmatpush1.bf16.msra.mxu0 0
    %1496 = vmatprep.subr.bf16.mxu0 0
    %1497 = vmatpush1.bf16.msra.mxu0 0
    %1498 = vmatprep.mubr.bf16.mxu0 0
    %1499 = vmatmul.mubr.bf16.gmra.mrb[0].mxu0 %v1464
    %v1500 = vpop.f32.mrb[0].mxu0
    %v1501 = vadd.f32 %v1449, %v1500
    %v1502 = vpop.f32.mrb[0].mxu0
    %v1503 = vpop.f32.mrb[0].mxu0
    %v1504 = vadd.f32 %v1450, %v1503
    %v1505 = vpop.f32.mrb[0].mxu0
    %1506 = vdwg.mxu0
    %1507 = vst [vmem:[#allocation3] sm:$0xff] %v1501
    %1508 = vst [vmem:[#allocation3 + $0x8] sm:$0xff] %v1504
    %v1509 = vld [vmem:[#allocation3] sm:$0xff]
    %v1510 = vld [vmem:[#allocation3 + $0x8] sm:$0xff]
    %v1511 = vmul.f32 %v1509, 0.5
    %v1512 = vmul.f32 %v1510, 0.5
    %v1513 = vtanh.pop %v1511
    %v1514 = vtanh.pop %v1512
    %v1515 = vmul.f32 %v1513, 0.5
    %v1516 = vmul.f32 %v1514, 0.5
    %v1517 = vadd.f32 %v1515, 0.5
    %v1518 = vadd.f32 %v1516, 0.5
    %v1519 = vtanh.pop %v1509
    %v1520 = vtanh.pop %v1510
    %v1521 = vld [vmem:[#allocation5] sm:$0xff]
    %v1522 = vld [vmem:[#allocation5 + $0x8] sm:$0xff]
    %1525 = vrot.lane.b32.xlu0 %v1521, 32
    %v1526 = vpop.permute.xlu0 %1525
    %1527 = vrot.lane.b32.xlu0 %v1522, 32
    %v1528 = vpop.permute.xlu0 %1527
    %v1531 = vmul.f32 %v1517, %v1526
    %v1532 = vmul.f32 %v1518, %v1528
    %1535 = vrot.lane.b32.xlu0 %v1519, 64
    %v1536 = vpop.permute.xlu0 %1535
    %1537 = vrot.lane.b32.xlu0 %v1520, 64
    %v1538 = vpop.permute.xlu0 %1537
    %v1541 = vmul.f32 %v1517, %v1536
    %v1542 = vmul.f32 %v1518, %v1538
    %1545 = vrot.lane.b32.xlu0 %v1541, 32
    %v1546 = vpop.permute.xlu0 %1545
    %1547 = vrot.lane.b32.xlu0 %v1542, 32
    %v1548 = vpop.permute.xlu0 %1547
    %v1551 = vadd.f32 %v1531, %v1546
    %v1552 = vadd.f32 %v1532, %v1548
    %1555 = vrot.lane.b32.xlu0 %v1551, 96
    %v1556 = vpop.permute.xlu0 %1555
    %1557 = vrot.lane.b32.xlu0 %v1552, 96
    %v1558 = vpop.permute.xlu0 %1557
    %1561 = vst.msk [vmem:[#allocation5] sm:$0xff] %vm102, %v1556
    %1562 = vst.msk [vmem:[#allocation5 + $0x8] sm:$0xff] %vm102, %v1558
    %v1563 = vld [vmem:[#allocation3] sm:$0xff]
    %v1564 = vld [vmem:[#allocation3 + $0x8] sm:$0xff]
    %v1565 = vmul.f32 %v1563, 0.5
    %v1566 = vmul.f32 %v1564, 0.5
    %v1567 = vtanh.pop %v1565
    %v1568 = vtanh.pop %v1566
    %v1569 = vmul.f32 %v1567, 0.5
    %v1570 = vmul.f32 %v1568, 0.5
    %v1571 = vadd.f32 %v1569, 0.5
    %v1572 = vadd.f32 %v1570, 0.5
    %v1573 = vtanh.pop %v1551
    %v1574 = vtanh.pop %v1552
    %1577 = vrot.lane.b32.xlu0 %v1573, 64
    %v1578 = vpop.permute.xlu0 %1577
    %1579 = vrot.lane.b32.xlu0 %v1574, 64
    %v1580 = vpop.permute.xlu0 %1579
    %v1583 = vmul.f32 %v1571, %v1578
    %v1584 = vmul.f32 %v1572, %v1580
    %1587 = vrot.lane.b32.xlu0 %v1583, 32
    %v1588 = vpop.permute.xlu0 %1587
    %1589 = vrot.lane.b32.xlu0 %v1584, 32
    %v1590 = vpop.permute.xlu0 %1589
    %1593 = vst.msk [vmem:[#allocation4] sm:$0xff] %vm102, %v1588
    %1594 = vst.msk [vmem:[#allocation4 + $0x8] sm:$0xff] %vm102, %v1590
    %v1595 = vpack.c.bf16 %v1584, %v1583
    %1597 = vrot.lane.b32.xlu0 %v1595, 32
    %v1598 = vpop.permute.xlu0 %1597
    %s1600 = scalar_lea.vmem [#allocation6], 56
    %1601 = vst.msk [vmem:[%s1600] sm:$0xff] %vm102, %v1598
    %1602 = vst.msk [vmem:[#allocation4] sm:$0xff] %vm102, 0.0
    %1603 = vst.msk [vmem:[#allocation4 + $0x8] sm:$0xff] %vm102, 0.0
    %1604 = vst.msk [vmem:[#allocation5] sm:$0xff] %vm102, 0.0
    %1605 = vst.msk [vmem:[#allocation5 + $0x8] sm:$0xff] %vm102, 0.0
    %v1606 = vld [vmem:[#allocation6] sm:$0xff]
    %v1607 = vld [vmem:[#allocation6 + $0x8] sm:$0xff]
    %v1608 = vld [vmem:[#allocation6 + $0x10] sm:$0xff]
    %v1609 = vld [vmem:[#allocation6 + $0x18] sm:$0xff]
    %v1610 = vld [vmem:[#allocation6 + $0x20] sm:$0xff]
    %v1611 = vld [vmem:[#allocation6 + $0x28] sm:$0xff]
    %v1612 = vld [vmem:[#allocation6 + $0x30] sm:$0xff]
    %v1613 = vld [vmem:[#allocation6 + $0x38] sm:$0xff]
    %v1614 = vld [vmem:[#allocation13] sm:$0xf]
    %v1615 = vld [vmem:[#allocation13 + $0x4] sm:$0xf]
    %v1616 = vld [vmem:[#allocation13 + $0x8] sm:$0xf]
    %v1617 = vld [vmem:[#allocation13 + $0xc] sm:$0xf]
    %v1618 = vld [vmem:[%s6] sm:$0x1]
    %v1620 = vlaneseq
    %v1621 = vshrl.u32 %v1620, 7
    %v1622 = vsub.s32 0, %v1621
    %v1623 = vrot.slane %v1618, %v1622
    %v1629 = vunpack.c.l.b16 %v1614
    %v1630 = vunpack.c.l.b16 %v1615
    %v1631 = vunpack.c.l.b16 %v1616
    %v1632 = vunpack.c.l.b16 %v1617
    %v1633 = vpack.c.b16 %v1630, %v1629
    %v1634 = vpack.c.b16 %v1632, %v1631
    %v1638 = vsel %vm102, %v1606, 0
    %v1641 = vsel %vm102, %v1607, 0
    %v1644 = vsel %vm102, %v1608, 0
    %v1647 = vsel %vm102, %v1609, 0
    %v1650 = vsel %vm102, %v1610, 0
    %v1653 = vsel %vm102, %v1611, 0
    %v1656 = vsel %vm102, %v1612, 0
    %v1659 = vsel %vm102, %v1613, 0
    %1661 = vmatprep.subr.bf16.mxu0 0
    %1662 = vmatpush1.bf16.msra.mxu0 %v1633
    %1663 = vmatprep.subr.bf16.mxu0 0
    %1664 = vmatpush1.bf16.msra.mxu0 %v1634
    %1665 = vmatprep.subr.bf16.mxu0 0
    %1666 = vmatpush1.bf16.msra.mxu0 0
    %1667 = vmatprep.subr.bf16.mxu0 0
    %1668 = vmatpush1.bf16.msra.mxu0 0
    %1669 = vmatprep.subr.bf16.mxu0 0
    %1670 = vmatpush1.bf16.msra.mxu0 0
    %1671 = vmatprep.subr.bf16.mxu0 0
    %1672 = vmatpush1.bf16.msra.mxu0 0
    %1673 = vmatprep.subr.bf16.mxu0 0
    %1674 = vmatpush1.bf16.msra.mxu0 0
    %1675 = vmatprep.subr.bf16.mxu0 0
    %1676 = vmatpush1.bf16.msra.mxu0 0
    %1677 = vmatprep.subr.bf16.mxu0 0
    %1678 = vmatpush1.bf16.msra.mxu0 0
    %1679 = vmatprep.subr.bf16.mxu0 0
    %1680 = vmatpush1.bf16.msra.mxu0 0
    %1681 = vmatprep.subr.bf16.mxu0 0
    %1682 = vmatpush1.bf16.msra.mxu0 0
    %1683 = vmatprep.subr.bf16.mxu0 0
    %1684 = vmatpush1.bf16.msra.mxu0 0
    %1685 = vmatprep.subr.bf16.mxu0 0
    %1686 = vmatpush1.bf16.msra.mxu0 0
    %1687 = vmatprep.subr.bf16.mxu0 0
    %1688 = vmatpush1.bf16.msra.mxu0 0
    %1689 = vmatprep.subr.bf16.mxu0 0
    %1690 = vmatpush1.bf16.msra.mxu0 0
    %1691 = vmatprep.subr.bf16.mxu0 0
    %1692 = vmatpush1.bf16.msra.mxu0 0
    %1693 = vmatprep.mubr.bf16.mxu0 0
    %1694 = vmatmul.mubr.bf16.gmra.mrb[0].mxu0 %v1638
    %v1695 = vpop.f32.mrb[0].mxu0
    %v1696 = vadd.f32 %v1623, %v1695
    %v1697 = vpop.f32.mrb[0].mxu0
    %v1698 = vpop.f32.mrb[0].mxu0
    %v1699 = vadd.f32 %v1623, %v1698
    %v1700 = vpop.f32.mrb[0].mxu0
    %1701 = vmatprep.mubr.bf16.mxu0 0
    %1702 = vmatmul.mubr.bf16.gmra.mrb[0].mxu0 %v1641
    %v1703 = vpop.f32.mrb[0].mxu0
    %v1704 = vadd.f32 %v1623, %v1703
    %v1705 = vpop.f32.mrb[0].mxu0
    %v1706 = vpop.f32.mrb[0].mxu0
    %v1707 = vadd.f32 %v1623, %v1706
    %v1708 = vpop.f32.mrb[0].mxu0
    %1709 = vmatprep.mubr.bf16.mxu0 0
    %1710 = vmatmul.mubr.bf16.gmra.mrb[0].mxu0 %v1644
    %v1711 = vpop.f32.mrb[0].mxu0
    %v1712 = vadd.f32 %v1623, %v1711
    %v1713 = vpop.f32.mrb[0].mxu0
    %v1714 = vpop.f32.mrb[0].mxu0
    %v1715 = vadd.f32 %v1623, %v1714
    %v1716 = vpop.f32.mrb[0].mxu0
    %1717 = vmatprep.mubr.bf16.mxu0 0
    %1718 = vmatmul.mubr.bf16.gmra.mrb[0].mxu0 %v1647
    %v1719 = vpop.f32.mrb[0].mxu0
    %v1720 = vadd.f32 %v1623, %v1719
    %v1721 = vpop.f32.mrb[0].mxu0
    %v1722 = vpop.f32.mrb[0].mxu0
    %v1723 = vadd.f32 %v1623, %v1722
    %v1724 = vpop.f32.mrb[0].mxu0
    %1725 = vmatprep.mubr.bf16.mxu0 0
    %1726 = vmatmul.mubr.bf16.gmra.mrb[0].mxu0 %v1650
    %v1727 = vpop.f32.mrb[0].mxu0
    %v1728 = vadd.f32 %v1623, %v1727
    %v1729 = vpop.f32.mrb[0].mxu0
    %v1730 = vpop.f32.mrb[0].mxu0
    %v1731 = vadd.f32 %v1623, %v1730
    %v1732 = vpop.f32.mrb[0].mxu0
    %1733 = vmatprep.mubr.bf16.mxu0 0
    %1734 = vmatmul.mubr.bf16.gmra.mrb[0].mxu0 %v1653
    %v1735 = vpop.f32.mrb[0].mxu0
    %v1736 = vadd.f32 %v1623, %v1735
    %v1737 = vpop.f32.mrb[0].mxu0
    %v1738 = vpop.f32.mrb[0].mxu0
    %v1739 = vadd.f32 %v1623, %v1738
    %v1740 = vpop.f32.mrb[0].mxu0
    %1741 = vmatprep.mubr.bf16.mxu0 0
    %1742 = vmatmul.mubr.bf16.gmra.mrb[0].mxu0 %v1656
    %v1743 = vpop.f32.mrb[0].mxu0
    %v1744 = vadd.f32 %v1623, %v1743
    %v1745 = vpop.f32.mrb[0].mxu0
    %v1746 = vpop.f32.mrb[0].mxu0
    %v1747 = vadd.f32 %v1623, %v1746
    %v1748 = vpop.f32.mrb[0].mxu0
    %1749 = vmatprep.mubr.bf16.mxu0 0
    %1750 = vmatmul.mubr.bf16.gmra.mrb[0].mxu0 %v1659
    %v1751 = vpop.f32.mrb[0].mxu0
    %v1752 = vadd.f32 %v1623, %v1751
    %v1753 = vpop.f32.mrb[0].mxu0
    %v1754 = vpop.f32.mrb[0].mxu0
    %v1755 = vadd.f32 %v1623, %v1754
    %v1756 = vpop.f32.mrb[0].mxu0
    %1757 = vdwg.mxu0
    %1758 = vst [vmem:[#allocation2] sm:$0xff] %v1696
    %1759 = vst [vmem:[#allocation2 + $0x8] sm:$0xff] %v1699
    %1760 = vst [vmem:[#allocation2 + $0x10] sm:$0xff] %v1704
    %1761 = vst [vmem:[#allocation2 + $0x18] sm:$0xff] %v1707
    %1762 = vst [vmem:[#allocation2 + $0x20] sm:$0xff] %v1712
    %1763 = vst [vmem:[#allocation2 + $0x28] sm:$0xff] %v1715
    %1764 = vst [vmem:[#allocation2 + $0x30] sm:$0xff] %v1720
    %1765 = vst [vmem:[#allocation2 + $0x38] sm:$0xff] %v1723
    %1766 = vst [vmem:[#allocation2 + $0x40] sm:$0xff] %v1728
    %1767 = vst [vmem:[#allocation2 + $0x48] sm:$0xff] %v1731
    %1768 = vst [vmem:[#allocation2 + $0x50] sm:$0xff] %v1736
    %1769 = vst [vmem:[#allocation2 + $0x58] sm:$0xff] %v1739
    %1770 = vst [vmem:[#allocation2 + $0x60] sm:$0xff] %v1744
    %1771 = vst [vmem:[#allocation2 + $0x68] sm:$0xff] %v1747
    %1772 = vst [vmem:[#allocation2 + $0x70] sm:$0xff] %v1752
    %1773 = vst [vmem:[#allocation2 + $0x78] sm:$0xff] %v1755
    %v1774 = vld [vmem:[#allocation4] sm:$0xff]
    %v1775 = vld [vmem:[#allocation4 + $0x8] sm:$0xff]
    %v1776 = vpack.c.bf16 %v1775, %v1774
    %v1777 = vld [vmem:[%s5] sm:$0xf]
    %v1778 = vld [vmem:[%s5 + $0x4] sm:$0xf]
    %v1779 = vld [vmem:[%s5 + $0x8] sm:$0xf]
    %v1780 = vld [vmem:[%s5 + $0xc] sm:$0xf]
    %v1781 = vld [vmem:[#allocation2] sm:$0xff]
    %v1782 = vld [vmem:[#allocation2 + $0x8] sm:$0xff]
    %v1787 = vunpack.c.l.b16 %v1777
    %v1788 = vunpack.c.l.b16 %v1778
    %v1789 = vunpack.c.l.b16 %v1779
    %v1790 = vunpack.c.l.b16 %v1780
    %v1791 = vpack.c.b16 %v1788, %v1787
    %v1792 = vpack.c.b16 %v1790, %v1789
    %v1796 = vsel %vm102, %v1776, 0
    %1798 = vmatprep.subr.bf16.mxu0 0
    %1799 = vmatpush1.bf16.msra.mxu0 %v1791
    %1800 = vmatprep.subr.bf16.mxu0 0
    %1801 = vmatpush1.bf16.msra.mxu0 %v1792
    %1802 = vmatprep.subr.bf16.mxu0 0
    %1803 = vmatpush1.bf16.msra.mxu0 0
    %1804 = vmatprep.subr.bf16.mxu0 0
    %1805 = vmatpush1.bf16.msra.mxu0 0
    %1806 = vmatprep.subr.bf16.mxu0 0
    %1807 = vmatpush1.bf16.msra.mxu0 0
    %1808 = vmatprep.subr.bf16.mxu0 0
    %1809 = vmatpush1.bf16.msra.mxu0 0
    %1810 = vmatprep.subr.bf16.mxu0 0
    %1811 = vmatpush1.bf16.msra.mxu0 0
    %1812 = vmatprep.subr.bf16.mxu0 0
    %1813 = vmatpush1.bf16.msra.mxu0 0
    %1814 = vmatprep.subr.bf16.mxu0 0
    %1815 = vmatpush1.bf16.msra.mxu0 0
    %1816 = vmatprep.subr.bf16.mxu0 0
    %1817 = vmatpush1.bf16.msra.mxu0 0
    %1818 = vmatprep.subr.bf16.mxu0 0
    %1819 = vmatpush1.bf16.msra.mxu0 0
    %1820 = vmatprep.subr.bf16.mxu0 0
    %1821 = vmatpush1.bf16.msra.mxu0 0
    %1822 = vmatprep.subr.bf16.mxu0 0
    %1823 = vmatpush1.bf16.msra.mxu0 0
    %1824 = vmatprep.subr.bf16.mxu0 0
    %1825 = vmatpush1.bf16.msra.mxu0 0
    %1826 = vmatprep.subr.bf16.mxu0 0
    %1827 = vmatpush1.bf16.msra.mxu0 0
    %1828 = vmatprep.subr.bf16.mxu0 0
    %1829 = vmatpush1.bf16.msra.mxu0 0
    %1830 = vmatprep.mubr.bf16.mxu0 0
    %1831 = vmatmul.mubr.bf16.gmra.mrb[0].mxu0 %v1796
    %v1832 = vpop.f32.mrb[0].mxu0
    %v1833 = vadd.f32 %v1781, %v1832
    %v1834 = vpop.f32.mrb[0].mxu0
    %v1835 = vpop.f32.mrb[0].mxu0
    %v1836 = vadd.f32 %v1782, %v1835
    %v1837 = vpop.f32.mrb[0].mxu0
    %1838 = vdwg.mxu0
    %1839 = vst [vmem:[#allocation3] sm:$0xff] %v1833
    %1840 = vst [vmem:[#allocation3 + $0x8] sm:$0xff] %v1836
    %v1841 = vld [vmem:[#allocation3] sm:$0xff]
    %v1842 = vld [vmem:[#allocation3 + $0x8] sm:$0xff]
    %v1843 = vmul.f32 %v1841, 0.5
    %v1844 = vmul.f32 %v1842, 0.5
    %v1845 = vtanh.pop %v1843
    %v1846 = vtanh.pop %v1844
    %v1847 = vmul.f32 %v1845, 0.5
    %v1848 = vmul.f32 %v1846, 0.5
    %v1849 = vadd.f32 %v1847, 0.5
    %v1850 = vadd.f32 %v1848, 0.5
    %v1851 = vtanh.pop %v1841
    %v1852 = vtanh.pop %v1842
    %v1853 = vld [vmem:[#allocation5] sm:$0xff]
    %v1854 = vld [vmem:[#allocation5 + $0x8] sm:$0xff]
    %1857 = vrot.lane.b32.xlu0 %v1853, 32
    %v1858 = vpop.permute.xlu0 %1857
    %1859 = vrot.lane.b32.xlu0 %v1854, 32
    %v1860 = vpop.permute.xlu0 %1859
    %v1863 = vmul.f32 %v1849, %v1858
    %v1864 = vmul.f32 %v1850, %v1860
    %1867 = vrot.lane.b32.xlu0 %v1851, 64
    %v1868 = vpop.permute.xlu0 %1867
    %1869 = vrot.lane.b32.xlu0 %v1852, 64
    %v1870 = vpop.permute.xlu0 %1869
    %v1873 = vmul.f32 %v1849, %v1868
    %v1874 = vmul.f32 %v1850, %v1870
    %1877 = vrot.lane.b32.xlu0 %v1873, 32
    %v1878 = vpop.permute.xlu0 %1877
    %1879 = vrot.lane.b32.xlu0 %v1874, 32
    %v1880 = vpop.permute.xlu0 %1879
    %v1883 = vadd.f32 %v1863, %v1878
    %v1884 = vadd.f32 %v1864, %v1880
    %1887 = vrot.lane.b32.xlu0 %v1883, 96
    %v1888 = vpop.permute.xlu0 %1887
    %1889 = vrot.lane.b32.xlu0 %v1884, 96
    %v1890 = vpop.permute.xlu0 %1889
    %1893 = vst.msk [vmem:[#allocation5] sm:$0xff] %vm102, %v1888
    %1894 = vst.msk [vmem:[#allocation5 + $0x8] sm:$0xff] %vm102, %v1890
    %v1895 = vld [vmem:[#allocation3] sm:$0xff]
    %v1896 = vld [vmem:[#allocation3 + $0x8] sm:$0xff]
    %v1897 = vmul.f32 %v1895, 0.5
    %v1898 = vmul.f32 %v1896, 0.5
    %v1899 = vtanh.pop %v1897
    %v1900 = vtanh.pop %v1898
    %v1901 = vmul.f32 %v1899, 0.5
    %v1902 = vmul.f32 %v1900, 0.5
    %v1903 = vadd.f32 %v1901, 0.5
    %v1904 = vadd.f32 %v1902, 0.5
    %v1905 = vtanh.pop %v1883
    %v1906 = vtanh.pop %v1884
    %1909 = vrot.lane.b32.xlu0 %v1905, 64
    %v1910 = vpop.permute.xlu0 %1909
    %1911 = vrot.lane.b32.xlu0 %v1906, 64
    %v1912 = vpop.permute.xlu0 %1911
    %v1915 = vmul.f32 %v1903, %v1910
    %v1916 = vmul.f32 %v1904, %v1912
    %1919 = vrot.lane.b32.xlu0 %v1915, 32
    %v1920 = vpop.permute.xlu0 %1919
    %1921 = vrot.lane.b32.xlu0 %v1916, 32
    %v1922 = vpop.permute.xlu0 %1921
    %1925 = vst.msk [vmem:[#allocation4] sm:$0xff] %vm102, %v1920
    %1926 = vst.msk [vmem:[#allocation4 + $0x8] sm:$0xff] %vm102, %v1922
    %v1927 = vld [vmem:[#allocation4] sm:$0xff]
    %v1928 = vld [vmem:[#allocation4 + $0x8] sm:$0xff]
    %v1929 = vpack.c.bf16 %v1928, %v1927
    %v1930 = vld [vmem:[%s5] sm:$0xf]
    %v1931 = vld [vmem:[%s5 + $0x4] sm:$0xf]
    %v1932 = vld [vmem:[%s5 + $0x8] sm:$0xf]
    %v1933 = vld [vmem:[%s5 + $0xc] sm:$0xf]
    %v1934 = vld [vmem:[%s482] sm:$0xff]
    %v1935 = vld [vmem:[%s482 + $0x8] sm:$0xff]
    %v1940 = vunpack.c.l.b16 %v1930
    %v1941 = vunpack.c.l.b16 %v1931
    %v1942 = vunpack.c.l.b16 %v1932
    %v1943 = vunpack.c.l.b16 %v1933
    %v1944 = vpack.c.b16 %v1941, %v1940
    %v1945 = vpack.c.b16 %v1943, %v1942
    %v1949 = vsel %vm102, %v1929, 0
    %1951 = vmatprep.subr.bf16.mxu0 0
    %1952 = vmatpush1.bf16.msra.mxu0 %v1944
    %1953 = vmatprep.subr.bf16.mxu0 0
    %1954 = vmatpush1.bf16.msra.mxu0 %v1945
    %1955 = vmatprep.subr.bf16.mxu0 0
    %1956 = vmatpush1.bf16.msra.mxu0 0
    %1957 = vmatprep.subr.bf16.mxu0 0
    %1958 = vmatpush1.bf16.msra.mxu0 0
    %1959 = vmatprep.subr.bf16.mxu0 0
    %1960 = vmatpush1.bf16.msra.mxu0 0
    %1961 = vmatprep.subr.bf16.mxu0 0
    %1962 = vmatpush1.bf16.msra.mxu0 0
    %1963 = vmatprep.subr.bf16.mxu0 0
    %1964 = vmatpush1.bf16.msra.mxu0 0
    %1965 = vmatprep.subr.bf16.mxu0 0
    %1966 = vmatpush1.bf16.msra.mxu0 0
    %1967 = vmatprep.subr.bf16.mxu0 0
    %1968 = vmatpush1.bf16.msra.mxu0 0
    %1969 = vmatprep.subr.bf16.mxu0 0
    %1970 = vmatpush1.bf16.msra.mxu0 0
    %1971 = vmatprep.subr.bf16.mxu0 0
    %1972 = vmatpush1.bf16.msra.mxu0 0
    %1973 = vmatprep.subr.bf16.mxu0 0
    %1974 = vmatpush1.bf16.msra.mxu0 0
    %1975 = vmatprep.subr.bf16.mxu0 0
    %1976 = vmatpush1.bf16.msra.mxu0 0
    %1977 = vmatprep.subr.bf16.mxu0 0
    %1978 = vmatpush1.bf16.msra.mxu0 0
    %1979 = vmatprep.subr.bf16.mxu0 0
    %1980 = vmatpush1.bf16.msra.mxu0 0
    %1981 = vmatprep.subr.bf16.mxu0 0
    %1982 = vmatpush1.bf16.msra.mxu0 0
    %1983 = vmatprep.mubr.bf16.mxu0 0
    %1984 = vmatmul.mubr.bf16.gmra.mrb[0].mxu0 %v1949
    %v1985 = vpop.f32.mrb[0].mxu0
    %v1986 = vadd.f32 %v1934, %v1985
    %v1987 = vpop.f32.mrb[0].mxu0
    %v1988 = vpop.f32.mrb[0].mxu0
    %v1989 = vadd.f32 %v1935, %v1988
    %v1990 = vpop.f32.mrb[0].mxu0
    %1991 = vdwg.mxu0
    %1992 = vst [vmem:[#allocation3] sm:$0xff] %v1986
    %1993 = vst [vmem:[#allocation3 + $0x8] sm:$0xff] %v1989
    %v1994 = vld [vmem:[#allocation3] sm:$0xff]
    %v1995 = vld [vmem:[#allocation3 + $0x8] sm:$0xff]
    %v1996 = vmul.f32 %v1994, 0.5
    %v1997 = vmul.f32 %v1995, 0.5
    %v1998 = vtanh.pop %v1996
    %v1999 = vtanh.pop %v1997
    %v2000 = vmul.f32 %v1998, 0.5
    %v2001 = vmul.f32 %v1999, 0.5
    %v2002 = vadd.f32 %v2000, 0.5
    %v2003 = vadd.f32 %v2001, 0.5
    %v2004 = vtanh.pop %v1994
    %v2005 = vtanh.pop %v1995
    %v2006 = vld [vmem:[#allocation5] sm:$0xff]
    %v2007 = vld [vmem:[#allocation5 + $0x8] sm:$0xff]
    %2010 = vrot.lane.b32.xlu0 %v2006, 32
    %v2011 = vpop.permute.xlu0 %2010
    %2012 = vrot.lane.b32.xlu0 %v2007, 32
    %v2013 = vpop.permute.xlu0 %2012
    %v2016 = vmul.f32 %v2002, %v2011
    %v2017 = vmul.f32 %v2003, %v2013
    %2020 = vrot.lane.b32.xlu0 %v2004, 64
    %v2021 = vpop.permute.xlu0 %2020
    %2022 = vrot.lane.b32.xlu0 %v2005, 64
    %v2023 = vpop.permute.xlu0 %2022
    %v2026 = vmul.f32 %v2002, %v2021
    %v2027 = vmul.f32 %v2003, %v2023
    %2030 = vrot.lane.b32.xlu0 %v2026, 32
    %v2031 = vpop.permute.xlu0 %2030
    %2032 = vrot.lane.b32.xlu0 %v2027, 32
    %v2033 = vpop.permute.xlu0 %2032
    %v2036 = vadd.f32 %v2016, %v2031
    %v2037 = vadd.f32 %v2017, %v2033
    %2040 = vrot.lane.b32.xlu0 %v2036, 96
    %v2041 = vpop.permute.xlu0 %2040
    %2042 = vrot.lane.b32.xlu0 %v2037, 96
    %v2043 = vpop.permute.xlu0 %2042
    %2046 = vst.msk [vmem:[#allocation5] sm:$0xff] %vm102, %v2041
    %2047 = vst.msk [vmem:[#allocation5 + $0x8] sm:$0xff] %vm102, %v2043
    %v2048 = vld [vmem:[#allocation3] sm:$0xff]
    %v2049 = vld [vmem:[#allocation3 + $0x8] sm:$0xff]
    %v2050 = vmul.f32 %v2048, 0.5
    %v2051 = vmul.f32 %v2049, 0.5
    %v2052 = vtanh.pop %v2050
    %v2053 = vtanh.pop %v2051
    %v2054 = vmul.f32 %v2052, 0.5
    %v2055 = vmul.f32 %v2053, 0.5
    %v2056 = vadd.f32 %v2054, 0.5
    %v2057 = vadd.f32 %v2055, 0.5
    %v2058 = vtanh.pop %v2036
    %v2059 = vtanh.pop %v2037
    %2062 = vrot.lane.b32.xlu0 %v2058, 64
    %v2063 = vpop.permute.xlu0 %2062
    %2064 = vrot.lane.b32.xlu0 %v2059, 64
    %v2065 = vpop.permute.xlu0 %2064
    %v2068 = vmul.f32 %v2056, %v2063
    %v2069 = vmul.f32 %v2057, %v2065
    %2072 = vrot.lane.b32.xlu0 %v2068, 32
    %v2073 = vpop.permute.xlu0 %2072
    %2074 = vrot.lane.b32.xlu0 %v2069, 32
    %v2075 = vpop.permute.xlu0 %2074
    %2078 = vst.msk [vmem:[#allocation4] sm:$0xff] %vm102, %v2073
    %2079 = vst.msk [vmem:[#allocation4 + $0x8] sm:$0xff] %vm102, %v2075
    %v2080 = vld [vmem:[#allocation4] sm:$0xff]
    %v2081 = vld [vmem:[#allocation4 + $0x8] sm:$0xff]
    %v2082 = vpack.c.bf16 %v2081, %v2080
    %v2083 = vld [vmem:[%s5] sm:$0xf]
    %v2084 = vld [vmem:[%s5 + $0x4] sm:$0xf]
    %v2085 = vld [vmem:[%s5 + $0x8] sm:$0xf]
    %v2086 = vld [vmem:[%s5 + $0xc] sm:$0xf]
    %v2087 = vld [vmem:[%s643] sm:$0xff]
    %v2088 = vld [vmem:[%s643 + $0x8] sm:$0xff]
    %v2093 = vunpack.c.l.b16 %v2083
    %v2094 = vunpack.c.l.b16 %v2084
    %v2095 = vunpack.c.l.b16 %v2085
    %v2096 = vunpack.c.l.b16 %v2086
    %v2097 = vpack.c.b16 %v2094, %v2093
    %v2098 = vpack.c.b16 %v2096, %v2095
    %v2102 = vsel %vm102, %v2082, 0
    %2104 = vmatprep.subr.bf16.mxu0 0
    %2105 = vmatpush1.bf16.msra.mxu0 %v2097
    %2106 = vmatprep.subr.bf16.mxu0 0
    %2107 = vmatpush1.bf16.msra.mxu0 %v2098
    %2108 = vmatprep.subr.bf16.mxu0 0
    %2109 = vmatpush1.bf16.msra.mxu0 0
    %2110 = vmatprep.subr.bf16.mxu0 0
    %2111 = vmatpush1.bf16.msra.mxu0 0
    %2112 = vmatprep.subr.bf16.mxu0 0
    %2113 = vmatpush1.bf16.msra.mxu0 0
    %2114 = vmatprep.subr.bf16.mxu0 0
    %2115 = vmatpush1.bf16.msra.mxu0 0
    %2116 = vmatprep.subr.bf16.mxu0 0
    %2117 = vmatpush1.bf16.msra.mxu0 0
    %2118 = vmatprep.subr.bf16.mxu0 0
    %2119 = vmatpush1.bf16.msra.mxu0 0
    %2120 = vmatprep.subr.bf16.mxu0 0
    %2121 = vmatpush1.bf16.msra.mxu0 0
    %2122 = vmatprep.subr.bf16.mxu0 0
    %2123 = vmatpush1.bf16.msra.mxu0 0
    %2124 = vmatprep.subr.bf16.mxu0 0
    %2125 = vmatpush1.bf16.msra.mxu0 0
    %2126 = vmatprep.subr.bf16.mxu0 0
    %2127 = vmatpush1.bf16.msra.mxu0 0
    %2128 = vmatprep.subr.bf16.mxu0 0
    %2129 = vmatpush1.bf16.msra.mxu0 0
    %2130 = vmatprep.subr.bf16.mxu0 0
    %2131 = vmatpush1.bf16.msra.mxu0 0
    %2132 = vmatprep.subr.bf16.mxu0 0
    %2133 = vmatpush1.bf16.msra.mxu0 0
    %2134 = vmatprep.subr.bf16.mxu0 0
    %2135 = vmatpush1.bf16.msra.mxu0 0
    %2136 = vmatprep.mubr.bf16.mxu0 0
    %2137 = vmatmul.mubr.bf16.gmra.mrb[0].mxu0 %v2102
    %v2138 = vpop.f32.mrb[0].mxu0
    %v2139 = vadd.f32 %v2087, %v2138
    %v2140 = vpop.f32.mrb[0].mxu0
    %v2141 = vpop.f32.mrb[0].mxu0
    %v2142 = vadd.f32 %v2088, %v2141
    %v2143 = vpop.f32.mrb[0].mxu0
    %2144 = vdwg.mxu0
    %2145 = vst [vmem:[#allocation3] sm:$0xff] %v2139
    %2146 = vst [vmem:[#allocation3 + $0x8] sm:$0xff] %v2142
    %v2147 = vld [vmem:[#allocation3] sm:$0xff]
    %v2148 = vld [vmem:[#allocation3 + $0x8] sm:$0xff]
    %v2149 = vmul.f32 %v2147, 0.5
    %v2150 = vmul.f32 %v2148, 0.5
    %v2151 = vtanh.pop %v2149
    %v2152 = vtanh.pop %v2150
    %v2153 = vmul.f32 %v2151, 0.5
    %v2154 = vmul.f32 %v2152, 0.5
    %v2155 = vadd.f32 %v2153, 0.5
    %v2156 = vadd.f32 %v2154, 0.5
    %v2157 = vtanh.pop %v2147
    %v2158 = vtanh.pop %v2148
    %v2159 = vld [vmem:[#allocation5] sm:$0xff]
    %v2160 = vld [vmem:[#allocation5 + $0x8] sm:$0xff]
    %2163 = vrot.lane.b32.xlu0 %v2159, 32
    %v2164 = vpop.permute.xlu0 %2163
    %2165 = vrot.lane.b32.xlu0 %v2160, 32
    %v2166 = vpop.permute.xlu0 %2165
    %v2169 = vmul.f32 %v2155, %v2164
    %v2170 = vmul.f32 %v2156, %v2166
    %2173 = vrot.lane.b32.xlu0 %v2157, 64
    %v2174 = vpop.permute.xlu0 %2173
    %2175 = vrot.lane.b32.xlu0 %v2158, 64
    %v2176 = vpop.permute.xlu0 %2175
    %v2179 = vmul.f32 %v2155, %v2174
    %v2180 = vmul.f32 %v2156, %v2176
    %2183 = vrot.lane.b32.xlu0 %v2179, 32
    %v2184 = vpop.permute.xlu0 %2183
    %2185 = vrot.lane.b32.xlu0 %v2180, 32
    %v2186 = vpop.permute.xlu0 %2185
    %v2189 = vadd.f32 %v2169, %v2184
    %v2190 = vadd.f32 %v2170, %v2186
    %2193 = vrot.lane.b32.xlu0 %v2189, 96
    %v2194 = vpop.permute.xlu0 %2193
    %2195 = vrot.lane.b32.xlu0 %v2190, 96
    %v2196 = vpop.permute.xlu0 %2195
    %2199 = vst.msk [vmem:[#allocation5] sm:$0xff] %vm102, %v2194
    %2200 = vst.msk [vmem:[#allocation5 + $0x8] sm:$0xff] %vm102, %v2196
    %v2201 = vld [vmem:[#allocation3] sm:$0xff]
    %v2202 = vld [vmem:[#allocation3 + $0x8] sm:$0xff]
    %v2203 = vmul.f32 %v2201, 0.5
    %v2204 = vmul.f32 %v2202, 0.5
    %v2205 = vtanh.pop %v2203
    %v2206 = vtanh.pop %v2204
    %v2207 = vmul.f32 %v2205, 0.5
    %v2208 = vmul.f32 %v2206, 0.5
    %v2209 = vadd.f32 %v2207, 0.5
    %v2210 = vadd.f32 %v2208, 0.5
    %v2211 = vtanh.pop %v2189
    %v2212 = vtanh.pop %v2190
    %2215 = vrot.lane.b32.xlu0 %v2211, 64
    %v2216 = vpop.permute.xlu0 %2215
    %2217 = vrot.lane.b32.xlu0 %v2212, 64
    %v2218 = vpop.permute.xlu0 %2217
    %v2221 = vmul.f32 %v2209, %v2216
    %v2222 = vmul.f32 %v2210, %v2218
    %2225 = vrot.lane.b32.xlu0 %v2221, 32
    %v2226 = vpop.permute.xlu0 %2225
    %2227 = vrot.lane.b32.xlu0 %v2222, 32
    %v2228 = vpop.permute.xlu0 %2227
    %2231 = vst.msk [vmem:[#allocation4] sm:$0xff] %vm102, %v2226
    %2232 = vst.msk [vmem:[#allocation4 + $0x8] sm:$0xff] %vm102, %v2228
    %v2233 = vld [vmem:[#allocation4] sm:$0xff]
    %v2234 = vld [vmem:[#allocation4 + $0x8] sm:$0xff]
    %v2235 = vpack.c.bf16 %v2234, %v2233
    %v2236 = vld [vmem:[%s5] sm:$0xf]
    %v2237 = vld [vmem:[%s5 + $0x4] sm:$0xf]
    %v2238 = vld [vmem:[%s5 + $0x8] sm:$0xf]
    %v2239 = vld [vmem:[%s5 + $0xc] sm:$0xf]
    %v2240 = vld [vmem:[%s804] sm:$0xff]
    %v2241 = vld [vmem:[%s804 + $0x8] sm:$0xff]
    %v2246 = vunpack.c.l.b16 %v2236
    %v2247 = vunpack.c.l.b16 %v2237
    %v2248 = vunpack.c.l.b16 %v2238
    %v2249 = vunpack.c.l.b16 %v2239
    %v2250 = vpack.c.b16 %v2247, %v2246
    %v2251 = vpack.c.b16 %v2249, %v2248
    %v2255 = vsel %vm102, %v2235, 0
    %2257 = vmatprep.subr.bf16.mxu0 0
    %2258 = vmatpush1.bf16.msra.mxu0 %v2250
    %2259 = vmatprep.subr.bf16.mxu0 0
    %2260 = vmatpush1.bf16.msra.mxu0 %v2251
    %2261 = vmatprep.subr.bf16.mxu0 0
    %2262 = vmatpush1.bf16.msra.mxu0 0
    %2263 = vmatprep.subr.bf16.mxu0 0
    %2264 = vmatpush1.bf16.msra.mxu0 0
    %2265 = vmatprep.subr.bf16.mxu0 0
    %2266 = vmatpush1.bf16.msra.mxu0 0
    %2267 = vmatprep.subr.bf16.mxu0 0
    %2268 = vmatpush1.bf16.msra.mxu0 0
    %2269 = vmatprep.subr.bf16.mxu0 0
    %2270 = vmatpush1.bf16.msra.mxu0 0
    %2271 = vmatprep.subr.bf16.mxu0 0
    %2272 = vmatpush1.bf16.msra.mxu0 0
    %2273 = vmatprep.subr.bf16.mxu0 0
    %2274 = vmatpush1.bf16.msra.mxu0 0
    %2275 = vmatprep.subr.bf16.mxu0 0
    %2276 = vmatpush1.bf16.msra.mxu0 0
    %2277 = vmatprep.subr.bf16.mxu0 0
    %2278 = vmatpush1.bf16.msra.mxu0 0
    %2279 = vmatprep.subr.bf16.mxu0 0
    %2280 = vmatpush1.bf16.msra.mxu0 0
    %2281 = vmatprep.subr.bf16.mxu0 0
    %2282 = vmatpush1.bf16.msra.mxu0 0
    %2283 = vmatprep.subr.bf16.mxu0 0
    %2284 = vmatpush1.bf16.msra.mxu0 0
    %2285 = vmatprep.subr.bf16.mxu0 0
    %2286 = vmatpush1.bf16.msra.mxu0 0
    %2287 = vmatprep.subr.bf16.mxu0 0
    %2288 = vmatpush1.bf16.msra.mxu0 0
    %2289 = vmatprep.mubr.bf16.mxu0 0
    %2290 = vmatmul.mubr.bf16.gmra.mrb[0].mxu0 %v2255
    %v2291 = vpop.f32.mrb[0].mxu0
    %v2292 = vadd.f32 %v2240, %v2291
    %v2293 = vpop.f32.mrb[0].mxu0
    %v2294 = vpop.f32.mrb[0].mxu0
    %v2295 = vadd.f32 %v2241, %v2294
    %v2296 = vpop.f32.mrb[0].mxu0
    %2297 = vdwg.mxu0
    %2298 = vst [vmem:[#allocation3] sm:$0xff] %v2292
    %2299 = vst [vmem:[#allocation3 + $0x8] sm:$0xff] %v2295
    %v2300 = vld [vmem:[#allocation3] sm:$0xff]
    %v2301 = vld [vmem:[#allocation3 + $0x8] sm:$0xff]
    %v2302 = vmul.f32 %v2300, 0.5
    %v2303 = vmul.f32 %v2301, 0.5
    %v2304 = vtanh.pop %v2302
    %v2305 = vtanh.pop %v2303
    %v2306 = vmul.f32 %v2304, 0.5
    %v2307 = vmul.f32 %v2305, 0.5
    %v2308 = vadd.f32 %v2306, 0.5
    %v2309 = vadd.f32 %v2307, 0.5
    %v2310 = vtanh.pop %v2300
    %v2311 = vtanh.pop %v2301
    %v2312 = vld [vmem:[#allocation5] sm:$0xff]
    %v2313 = vld [vmem:[#allocation5 + $0x8] sm:$0xff]
    %2316 = vrot.lane.b32.xlu0 %v2312, 32
    %v2317 = vpop.permute.xlu0 %2316
    %2318 = vrot.lane.b32.xlu0 %v2313, 32
    %v2319 = vpop.permute.xlu0 %2318
    %v2322 = vmul.f32 %v2308, %v2317
    %v2323 = vmul.f32 %v2309, %v2319
    %2326 = vrot.lane.b32.xlu0 %v2310, 64
    %v2327 = vpop.permute.xlu0 %2326
    %2328 = vrot.lane.b32.xlu0 %v2311, 64
    %v2329 = vpop.permute.xlu0 %2328
    %v2332 = vmul.f32 %v2308, %v2327
    %v2333 = vmul.f32 %v2309, %v2329
    %2336 = vrot.lane.b32.xlu0 %v2332, 32
    %v2337 = vpop.permute.xlu0 %2336
    %2338 = vrot.lane.b32.xlu0 %v2333, 32
    %v2339 = vpop.permute.xlu0 %2338
    %v2342 = vadd.f32 %v2322, %v2337
    %v2343 = vadd.f32 %v2323, %v2339
    %2346 = vrot.lane.b32.xlu0 %v2342, 96
    %v2347 = vpop.permute.xlu0 %2346
    %2348 = vrot.lane.b32.xlu0 %v2343, 96
    %v2349 = vpop.permute.xlu0 %2348
    %2352 = vst.msk [vmem:[#allocation5] sm:$0xff] %vm102, %v2347
    %2353 = vst.msk [vmem:[#allocation5 + $0x8] sm:$0xff] %vm102, %v2349
    %v2354 = vld [vmem:[#allocation3] sm:$0xff]
    %v2355 = vld [vmem:[#allocation3 + $0x8] sm:$0xff]
    %v2356 = vmul.f32 %v2354, 0.5
    %v2357 = vmul.f32 %v2355, 0.5
    %v2358 = vtanh.pop %v2356
    %v2359 = vtanh.pop %v2357
    %v2360 = vmul.f32 %v2358, 0.5
    %v2361 = vmul.f32 %v2359, 0.5
    %v2362 = vadd.f32 %v2360, 0.5
    %v2363 = vadd.f32 %v2361, 0.5
    %v2364 = vtanh.pop %v2342
    %v2365 = vtanh.pop %v2343
    %2368 = vrot.lane.b32.xlu0 %v2364, 64
    %v2369 = vpop.permute.xlu0 %2368
    %2370 = vrot.lane.b32.xlu0 %v2365, 64
    %v2371 = vpop.permute.xlu0 %2370
    %v2374 = vmul.f32 %v2362, %v2369
    %v2375 = vmul.f32 %v2363, %v2371
    %2378 = vrot.lane.b32.xlu0 %v2374, 32
    %v2379 = vpop.permute.xlu0 %2378
    %2380 = vrot.lane.b32.xlu0 %v2375, 32
    %v2381 = vpop.permute.xlu0 %2380
    %2384 = vst.msk [vmem:[#allocation4] sm:$0xff] %vm102, %v2379
    %2385 = vst.msk [vmem:[#allocation4 + $0x8] sm:$0xff] %vm102, %v2381
    %v2386 = vld [vmem:[#allocation4] sm:$0xff]
    %v2387 = vld [vmem:[#allocation4 + $0x8] sm:$0xff]
    %v2388 = vpack.c.bf16 %v2387, %v2386
    %v2389 = vld [vmem:[%s5] sm:$0xf]
    %v2390 = vld [vmem:[%s5 + $0x4] sm:$0xf]
    %v2391 = vld [vmem:[%s5 + $0x8] sm:$0xf]
    %v2392 = vld [vmem:[%s5 + $0xc] sm:$0xf]
    %v2393 = vld [vmem:[%s965] sm:$0xff]
    %v2394 = vld [vmem:[%s965 + $0x8] sm:$0xff]
    %v2399 = vunpack.c.l.b16 %v2389
    %v2400 = vunpack.c.l.b16 %v2390
    %v2401 = vunpack.c.l.b16 %v2391
    %v2402 = vunpack.c.l.b16 %v2392
    %v2403 = vpack.c.b16 %v2400, %v2399
    %v2404 = vpack.c.b16 %v2402, %v2401
    %v2408 = vsel %vm102, %v2388, 0
    %2410 = vmatprep.subr.bf16.mxu0 0
    %2411 = vmatpush1.bf16.msra.mxu0 %v2403
    %2412 = vmatprep.subr.bf16.mxu0 0
    %2413 = vmatpush1.bf16.msra.mxu0 %v2404
    %2414 = vmatprep.subr.bf16.mxu0 0
    %2415 = vmatpush1.bf16.msra.mxu0 0
    %2416 = vmatprep.subr.bf16.mxu0 0
    %2417 = vmatpush1.bf16.msra.mxu0 0
    %2418 = vmatprep.subr.bf16.mxu0 0
    %2419 = vmatpush1.bf16.msra.mxu0 0
    %2420 = vmatprep.subr.bf16.mxu0 0
    %2421 = vmatpush1.bf16.msra.mxu0 0
    %2422 = vmatprep.subr.bf16.mxu0 0
    %2423 = vmatpush1.bf16.msra.mxu0 0
    %2424 = vmatprep.subr.bf16.mxu0 0
    %2425 = vmatpush1.bf16.msra.mxu0 0
    %2426 = vmatprep.subr.bf16.mxu0 0
    %2427 = vmatpush1.bf16.msra.mxu0 0
    %2428 = vmatprep.subr.bf16.mxu0 0
    %2429 = vmatpush1.bf16.msra.mxu0 0
    %2430 = vmatprep.subr.bf16.mxu0 0
    %2431 = vmatpush1.bf16.msra.mxu0 0
    %2432 = vmatprep.subr.bf16.mxu0 0
    %2433 = vmatpush1.bf16.msra.mxu0 0
    %2434 = vmatprep.subr.bf16.mxu0 0
    %2435 = vmatpush1.bf16.msra.mxu0 0
    %2436 = vmatprep.subr.bf16.mxu0 0
    %2437 = vmatpush1.bf16.msra.mxu0 0
    %2438 = vmatprep.subr.bf16.mxu0 0
    %2439 = vmatpush1.bf16.msra.mxu0 0
    %2440 = vmatprep.subr.bf16.mxu0 0
    %2441 = vmatpush1.bf16.msra.mxu0 0
    %2442 = vmatprep.mubr.bf16.mxu0 0
    %2443 = vmatmul.mubr.bf16.gmra.mrb[0].mxu0 %v2408
    %v2444 = vpop.f32.mrb[0].mxu0
    %v2445 = vadd.f32 %v2393, %v2444
    %v2446 = vpop.f32.mrb[0].mxu0
    %v2447 = vpop.f32.mrb[0].mxu0
    %v2448 = vadd.f32 %v2394, %v2447
    %v2449 = vpop.f32.mrb[0].mxu0
    %2450 = vdwg.mxu0
    %2451 = vst [vmem:[#allocation3] sm:$0xff] %v2445
    %2452 = vst [vmem:[#allocation3 + $0x8] sm:$0xff] %v2448
    %v2453 = vld [vmem:[#allocation3] sm:$0xff]
    %v2454 = vld [vmem:[#allocation3 + $0x8] sm:$0xff]
    %v2455 = vmul.f32 %v2453, 0.5
    %v2456 = vmul.f32 %v2454, 0.5
    %v2457 = vtanh.pop %v2455
    %v2458 = vtanh.pop %v2456
    %v2459 = vmul.f32 %v2457, 0.5
    %v2460 = vmul.f32 %v2458, 0.5
    %v2461 = vadd.f32 %v2459, 0.5
    %v2462 = vadd.f32 %v2460, 0.5
    %v2463 = vtanh.pop %v2453
    %v2464 = vtanh.pop %v2454
    %v2465 = vld [vmem:[#allocation5] sm:$0xff]
    %v2466 = vld [vmem:[#allocation5 + $0x8] sm:$0xff]
    %2469 = vrot.lane.b32.xlu0 %v2465, 32
    %v2470 = vpop.permute.xlu0 %2469
    %2471 = vrot.lane.b32.xlu0 %v2466, 32
    %v2472 = vpop.permute.xlu0 %2471
    %v2475 = vmul.f32 %v2461, %v2470
    %v2476 = vmul.f32 %v2462, %v2472
    %2479 = vrot.lane.b32.xlu0 %v2463, 64
    %v2480 = vpop.permute.xlu0 %2479
    %2481 = vrot.lane.b32.xlu0 %v2464, 64
    %v2482 = vpop.permute.xlu0 %2481
    %v2485 = vmul.f32 %v2461, %v2480
    %v2486 = vmul.f32 %v2462, %v2482
    %2489 = vrot.lane.b32.xlu0 %v2485, 32
    %v2490 = vpop.permute.xlu0 %2489
    %2491 = vrot.lane.b32.xlu0 %v2486, 32
    %v2492 = vpop.permute.xlu0 %2491
    %v2495 = vadd.f32 %v2475, %v2490
    %v2496 = vadd.f32 %v2476, %v2492
    %2499 = vrot.lane.b32.xlu0 %v2495, 96
    %v2500 = vpop.permute.xlu0 %2499
    %2501 = vrot.lane.b32.xlu0 %v2496, 96
    %v2502 = vpop.permute.xlu0 %2501
    %2505 = vst.msk [vmem:[#allocation5] sm:$0xff] %vm102, %v2500
    %2506 = vst.msk [vmem:[#allocation5 + $0x8] sm:$0xff] %vm102, %v2502
    %v2507 = vld [vmem:[#allocation3] sm:$0xff]
    %v2508 = vld [vmem:[#allocation3 + $0x8] sm:$0xff]
    %v2509 = vmul.f32 %v2507, 0.5
    %v2510 = vmul.f32 %v2508, 0.5
    %v2511 = vtanh.pop %v2509
    %v2512 = vtanh.pop %v2510
    %v2513 = vmul.f32 %v2511, 0.5
    %v2514 = vmul.f32 %v2512, 0.5
    %v2515 = vadd.f32 %v2513, 0.5
    %v2516 = vadd.f32 %v2514, 0.5
    %v2517 = vtanh.pop %v2495
    %v2518 = vtanh.pop %v2496
    %2521 = vrot.lane.b32.xlu0 %v2517, 64
    %v2522 = vpop.permute.xlu0 %2521
    %2523 = vrot.lane.b32.xlu0 %v2518, 64
    %v2524 = vpop.permute.xlu0 %2523
    %v2527 = vmul.f32 %v2515, %v2522
    %v2528 = vmul.f32 %v2516, %v2524
    %2531 = vrot.lane.b32.xlu0 %v2527, 32
    %v2532 = vpop.permute.xlu0 %2531
    %2533 = vrot.lane.b32.xlu0 %v2528, 32
    %v2534 = vpop.permute.xlu0 %2533
    %2537 = vst.msk [vmem:[#allocation4] sm:$0xff] %vm102, %v2532
    %2538 = vst.msk [vmem:[#allocation4 + $0x8] sm:$0xff] %vm102, %v2534
    %v2539 = vld [vmem:[#allocation4] sm:$0xff]
    %v2540 = vld [vmem:[#allocation4 + $0x8] sm:$0xff]
    %v2541 = vpack.c.bf16 %v2540, %v2539
    %v2542 = vld [vmem:[%s5] sm:$0xf]
    %v2543 = vld [vmem:[%s5 + $0x4] sm:$0xf]
    %v2544 = vld [vmem:[%s5 + $0x8] sm:$0xf]
    %v2545 = vld [vmem:[%s5 + $0xc] sm:$0xf]
    %v2546 = vld [vmem:[%s1126] sm:$0xff]
    %v2547 = vld [vmem:[%s1126 + $0x8] sm:$0xff]
    %v2552 = vunpack.c.l.b16 %v2542
    %v2553 = vunpack.c.l.b16 %v2543
    %v2554 = vunpack.c.l.b16 %v2544
    %v2555 = vunpack.c.l.b16 %v2545
    %v2556 = vpack.c.b16 %v2553, %v2552
    %v2557 = vpack.c.b16 %v2555, %v2554
    %v2561 = vsel %vm102, %v2541, 0
    %2563 = vmatprep.subr.bf16.mxu0 0
    %2564 = vmatpush1.bf16.msra.mxu0 %v2556
    %2565 = vmatprep.subr.bf16.mxu0 0
    %2566 = vmatpush1.bf16.msra.mxu0 %v2557
    %2567 = vmatprep.subr.bf16.mxu0 0
    %2568 = vmatpush1.bf16.msra.mxu0 0
    %2569 = vmatprep.subr.bf16.mxu0 0
    %2570 = vmatpush1.bf16.msra.mxu0 0
    %2571 = vmatprep.subr.bf16.mxu0 0
    %2572 = vmatpush1.bf16.msra.mxu0 0
    %2573 = vmatprep.subr.bf16.mxu0 0
    %2574 = vmatpush1.bf16.msra.mxu0 0
    %2575 = vmatprep.subr.bf16.mxu0 0
    %2576 = vmatpush1.bf16.msra.mxu0 0
    %2577 = vmatprep.subr.bf16.mxu0 0
    %2578 = vmatpush1.bf16.msra.mxu0 0
    %2579 = vmatprep.subr.bf16.mxu0 0
    %2580 = vmatpush1.bf16.msra.mxu0 0
    %2581 = vmatprep.subr.bf16.mxu0 0
    %2582 = vmatpush1.bf16.msra.mxu0 0
    %2583 = vmatprep.subr.bf16.mxu0 0
    %2584 = vmatpush1.bf16.msra.mxu0 0
    %2585 = vmatprep.subr.bf16.mxu0 0
    %2586 = vmatpush1.bf16.msra.mxu0 0
    %2587 = vmatprep.subr.bf16.mxu0 0
    %2588 = vmatpush1.bf16.msra.mxu0 0
    %2589 = vmatprep.subr.bf16.mxu0 0
    %2590 = vmatpush1.bf16.msra.mxu0 0
    %2591 = vmatprep.subr.bf16.mxu0 0
    %2592 = vmatpush1.bf16.msra.mxu0 0
    %2593 = vmatprep.subr.bf16.mxu0 0
    %2594 = vmatpush1.bf16.msra.mxu0 0
    %2595 = vmatprep.mubr.bf16.mxu0 0
    %2596 = vmatmul.mubr.bf16.gmra.mrb[0].mxu0 %v2561
    %v2597 = vpop.f32.mrb[0].mxu0
    %v2598 = vadd.f32 %v2546, %v2597
    %v2599 = vpop.f32.mrb[0].mxu0
    %v2600 = vpop.f32.mrb[0].mxu0
    %v2601 = vadd.f32 %v2547, %v2600
    %v2602 = vpop.f32.mrb[0].mxu0
    %2603 = vdwg.mxu0
    %2604 = vst [vmem:[#allocation3] sm:$0xff] %v2598
    %2605 = vst [vmem:[#allocation3 + $0x8] sm:$0xff] %v2601
    %v2606 = vld [vmem:[#allocation3] sm:$0xff]
    %v2607 = vld [vmem:[#allocation3 + $0x8] sm:$0xff]
    %v2608 = vmul.f32 %v2606, 0.5
    %v2609 = vmul.f32 %v2607, 0.5
    %v2610 = vtanh.pop %v2608
    %v2611 = vtanh.pop %v2609
    %v2612 = vmul.f32 %v2610, 0.5
    %v2613 = vmul.f32 %v2611, 0.5
    %v2614 = vadd.f32 %v2612, 0.5
    %v2615 = vadd.f32 %v2613, 0.5
    %v2616 = vtanh.pop %v2606
    %v2617 = vtanh.pop %v2607
    %v2618 = vld [vmem:[#allocation5] sm:$0xff]
    %v2619 = vld [vmem:[#allocation5 + $0x8] sm:$0xff]
    %2622 = vrot.lane.b32.xlu0 %v2618, 32
    %v2623 = vpop.permute.xlu0 %2622
    %2624 = vrot.lane.b32.xlu0 %v2619, 32
    %v2625 = vpop.permute.xlu0 %2624
    %v2628 = vmul.f32 %v2614, %v2623
    %v2629 = vmul.f32 %v2615, %v2625
    %2632 = vrot.lane.b32.xlu0 %v2616, 64
    %v2633 = vpop.permute.xlu0 %2632
    %2634 = vrot.lane.b32.xlu0 %v2617, 64
    %v2635 = vpop.permute.xlu0 %2634
    %v2638 = vmul.f32 %v2614, %v2633
    %v2639 = vmul.f32 %v2615, %v2635
    %2642 = vrot.lane.b32.xlu0 %v2638, 32
    %v2643 = vpop.permute.xlu0 %2642
    %2644 = vrot.lane.b32.xlu0 %v2639, 32
    %v2645 = vpop.permute.xlu0 %2644
    %v2648 = vadd.f32 %v2628, %v2643
    %v2649 = vadd.f32 %v2629, %v2645
    %2652 = vrot.lane.b32.xlu0 %v2648, 96
    %v2653 = vpop.permute.xlu0 %2652
    %2654 = vrot.lane.b32.xlu0 %v2649, 96
    %v2655 = vpop.permute.xlu0 %2654
    %2658 = vst.msk [vmem:[#allocation5] sm:$0xff] %vm102, %v2653
    %2659 = vst.msk [vmem:[#allocation5 + $0x8] sm:$0xff] %vm102, %v2655
    %v2660 = vld [vmem:[#allocation3] sm:$0xff]
    %v2661 = vld [vmem:[#allocation3 + $0x8] sm:$0xff]
    %v2662 = vmul.f32 %v2660, 0.5
    %v2663 = vmul.f32 %v2661, 0.5
    %v2664 = vtanh.pop %v2662
    %v2665 = vtanh.pop %v2663
    %v2666 = vmul.f32 %v2664, 0.5
    %v2667 = vmul.f32 %v2665, 0.5
    %v2668 = vadd.f32 %v2666, 0.5
    %v2669 = vadd.f32 %v2667, 0.5
    %v2670 = vtanh.pop %v2648
    %v2671 = vtanh.pop %v2649
    %2674 = vrot.lane.b32.xlu0 %v2670, 64
    %v2675 = vpop.permute.xlu0 %2674
    %2676 = vrot.lane.b32.xlu0 %v2671, 64
    %v2677 = vpop.permute.xlu0 %2676
    %v2680 = vmul.f32 %v2668, %v2675
    %v2681 = vmul.f32 %v2669, %v2677
    %2684 = vrot.lane.b32.xlu0 %v2680, 32
    %v2685 = vpop.permute.xlu0 %2684
    %2686 = vrot.lane.b32.xlu0 %v2681, 32
    %v2687 = vpop.permute.xlu0 %2686
    %2690 = vst.msk [vmem:[#allocation4] sm:$0xff] %vm102, %v2685
    %2691 = vst.msk [vmem:[#allocation4 + $0x8] sm:$0xff] %vm102, %v2687
    %v2692 = vld [vmem:[#allocation4] sm:$0xff]
    %v2693 = vld [vmem:[#allocation4 + $0x8] sm:$0xff]
    %v2694 = vpack.c.bf16 %v2693, %v2692
    %v2695 = vld [vmem:[%s5] sm:$0xf]
    %v2696 = vld [vmem:[%s5 + $0x4] sm:$0xf]
    %v2697 = vld [vmem:[%s5 + $0x8] sm:$0xf]
    %v2698 = vld [vmem:[%s5 + $0xc] sm:$0xf]
    %v2699 = vld [vmem:[%s1287] sm:$0xff]
    %v2700 = vld [vmem:[%s1287 + $0x8] sm:$0xff]
    %v2705 = vunpack.c.l.b16 %v2695
    %v2706 = vunpack.c.l.b16 %v2696
    %v2707 = vunpack.c.l.b16 %v2697
    %v2708 = vunpack.c.l.b16 %v2698
    %v2709 = vpack.c.b16 %v2706, %v2705
    %v2710 = vpack.c.b16 %v2708, %v2707
    %v2714 = vsel %vm102, %v2694, 0
    %2716 = vmatprep.subr.bf16.mxu0 0
    %2717 = vmatpush1.bf16.msra.mxu0 %v2709
    %2718 = vmatprep.subr.bf16.mxu0 0
    %2719 = vmatpush1.bf16.msra.mxu0 %v2710
    %2720 = vmatprep.subr.bf16.mxu0 0
    %2721 = vmatpush1.bf16.msra.mxu0 0
    %2722 = vmatprep.subr.bf16.mxu0 0
    %2723 = vmatpush1.bf16.msra.mxu0 0
    %2724 = vmatprep.subr.bf16.mxu0 0
    %2725 = vmatpush1.bf16.msra.mxu0 0
    %2726 = vmatprep.subr.bf16.mxu0 0
    %2727 = vmatpush1.bf16.msra.mxu0 0
    %2728 = vmatprep.subr.bf16.mxu0 0
    %2729 = vmatpush1.bf16.msra.mxu0 0
    %2730 = vmatprep.subr.bf16.mxu0 0
    %2731 = vmatpush1.bf16.msra.mxu0 0
    %2732 = vmatprep.subr.bf16.mxu0 0
    %2733 = vmatpush1.bf16.msra.mxu0 0
    %2734 = vmatprep.subr.bf16.mxu0 0
    %2735 = vmatpush1.bf16.msra.mxu0 0
    %2736 = vmatprep.subr.bf16.mxu0 0
    %2737 = vmatpush1.bf16.msra.mxu0 0
    %2738 = vmatprep.subr.bf16.mxu0 0
    %2739 = vmatpush1.bf16.msra.mxu0 0
    %2740 = vmatprep.subr.bf16.mxu0 0
    %2741 = vmatpush1.bf16.msra.mxu0 0
    %2742 = vmatprep.subr.bf16.mxu0 0
    %2743 = vmatpush1.bf16.msra.mxu0 0
    %2744 = vmatprep.subr.bf16.mxu0 0
    %2745 = vmatpush1.bf16.msra.mxu0 0
    %2746 = vmatprep.subr.bf16.mxu0 0
    %2747 = vmatpush1.bf16.msra.mxu0 0
    %2748 = vmatprep.mubr.bf16.mxu0 0
    %2749 = vmatmul.mubr.bf16.gmra.mrb[0].mxu0 %v2714
    %v2750 = vpop.f32.mrb[0].mxu0
    %v2751 = vadd.f32 %v2699, %v2750
    %v2752 = vpop.f32.mrb[0].mxu0
    %v2753 = vpop.f32.mrb[0].mxu0
    %v2754 = vadd.f32 %v2700, %v2753
    %v2755 = vpop.f32.mrb[0].mxu0
    %2756 = vdwg.mxu0
    %2757 = vst [vmem:[#allocation3] sm:$0xff] %v2751
    %2758 = vst [vmem:[#allocation3 + $0x8] sm:$0xff] %v2754
    %v2759 = vld [vmem:[#allocation3] sm:$0xff]
    %v2760 = vld [vmem:[#allocation3 + $0x8] sm:$0xff]
    %v2761 = vmul.f32 %v2759, 0.5
    %v2762 = vmul.f32 %v2760, 0.5
    %v2763 = vtanh.pop %v2761
    %v2764 = vtanh.pop %v2762
    %v2765 = vmul.f32 %v2763, 0.5
    %v2766 = vmul.f32 %v2764, 0.5
    %v2767 = vadd.f32 %v2765, 0.5
    %v2768 = vadd.f32 %v2766, 0.5
    %v2769 = vtanh.pop %v2759
    %v2770 = vtanh.pop %v2760
    %v2771 = vld [vmem:[#allocation5] sm:$0xff]
    %v2772 = vld [vmem:[#allocation5 + $0x8] sm:$0xff]
    %2775 = vrot.lane.b32.xlu0 %v2771, 32
    %v2776 = vpop.permute.xlu0 %2775
    %2777 = vrot.lane.b32.xlu0 %v2772, 32
    %v2778 = vpop.permute.xlu0 %2777
    %v2781 = vmul.f32 %v2767, %v2776
    %v2782 = vmul.f32 %v2768, %v2778
    %2785 = vrot.lane.b32.xlu0 %v2769, 64
    %v2786 = vpop.permute.xlu0 %2785
    %2787 = vrot.lane.b32.xlu0 %v2770, 64
    %v2788 = vpop.permute.xlu0 %2787
    %v2791 = vmul.f32 %v2767, %v2786
    %v2792 = vmul.f32 %v2768, %v2788
    %2795 = vrot.lane.b32.xlu0 %v2791, 32
    %v2796 = vpop.permute.xlu0 %2795
    %2797 = vrot.lane.b32.xlu0 %v2792, 32
    %v2798 = vpop.permute.xlu0 %2797
    %v2801 = vadd.f32 %v2781, %v2796
    %v2802 = vadd.f32 %v2782, %v2798
    %2805 = vrot.lane.b32.xlu0 %v2801, 96
    %v2806 = vpop.permute.xlu0 %2805
    %2807 = vrot.lane.b32.xlu0 %v2802, 96
    %v2808 = vpop.permute.xlu0 %2807
    %2811 = vst.msk [vmem:[#allocation5] sm:$0xff] %vm102, %v2806
    %2812 = vst.msk [vmem:[#allocation5 + $0x8] sm:$0xff] %vm102, %v2808
    %v2813 = vld [vmem:[#allocation3] sm:$0xff]
    %v2814 = vld [vmem:[#allocation3 + $0x8] sm:$0xff]
    %v2815 = vmul.f32 %v2813, 0.5
    %v2816 = vmul.f32 %v2814, 0.5
    %v2817 = vtanh.pop %v2815
    %v2818 = vtanh.pop %v2816
    %v2819 = vmul.f32 %v2817, 0.5
    %v2820 = vmul.f32 %v2818, 0.5
    %v2821 = vadd.f32 %v2819, 0.5
    %v2822 = vadd.f32 %v2820, 0.5
    %v2823 = vtanh.pop %v2801
    %v2824 = vtanh.pop %v2802
    %2827 = vrot.lane.b32.xlu0 %v2823, 64
    %v2828 = vpop.permute.xlu0 %2827
    %2829 = vrot.lane.b32.xlu0 %v2824, 64
    %v2830 = vpop.permute.xlu0 %2829
    %v2833 = vmul.f32 %v2821, %v2828
    %v2834 = vmul.f32 %v2822, %v2830
    %2837 = vrot.lane.b32.xlu0 %v2833, 32
    %v2838 = vpop.permute.xlu0 %2837
    %2839 = vrot.lane.b32.xlu0 %v2834, 32
    %v2840 = vpop.permute.xlu0 %2839
    %2843 = vst.msk [vmem:[#allocation4] sm:$0xff] %vm102, %v2838
    %2844 = vst.msk [vmem:[#allocation4 + $0x8] sm:$0xff] %vm102, %v2840
    %v2845 = vld [vmem:[#allocation4] sm:$0xff]
    %v2846 = vld [vmem:[#allocation4 + $0x8] sm:$0xff]
    %v2847 = vpack.c.bf16 %v2846, %v2845
    %v2848 = vld [vmem:[%s5] sm:$0xf]
    %v2849 = vld [vmem:[%s5 + $0x4] sm:$0xf]
    %v2850 = vld [vmem:[%s5 + $0x8] sm:$0xf]
    %v2851 = vld [vmem:[%s5 + $0xc] sm:$0xf]
    %v2852 = vld [vmem:[%s1448] sm:$0xff]
    %v2853 = vld [vmem:[%s1448 + $0x8] sm:$0xff]
    %v2858 = vunpack.c.l.b16 %v2848
    %v2859 = vunpack.c.l.b16 %v2849
    %v2860 = vunpack.c.l.b16 %v2850
    %v2861 = vunpack.c.l.b16 %v2851
    %v2862 = vpack.c.b16 %v2859, %v2858
    %v2863 = vpack.c.b16 %v2861, %v2860
    %v2867 = vsel %vm102, %v2847, 0
    %2869 = vmatprep.subr.bf16.mxu0 0
    %2870 = vmatpush1.bf16.msra.mxu0 %v2862
    %2871 = vmatprep.subr.bf16.mxu0 0
    %2872 = vmatpush1.bf16.msra.mxu0 %v2863
    %2873 = vmatprep.subr.bf16.mxu0 0
    %2874 = vmatpush1.bf16.msra.mxu0 0
    %2875 = vmatprep.subr.bf16.mxu0 0
    %2876 = vmatpush1.bf16.msra.mxu0 0
    %2877 = vmatprep.subr.bf16.mxu0 0
    %2878 = vmatpush1.bf16.msra.mxu0 0
    %2879 = vmatprep.subr.bf16.mxu0 0
    %2880 = vmatpush1.bf16.msra.mxu0 0
    %2881 = vmatprep.subr.bf16.mxu0 0
    %2882 = vmatpush1.bf16.msra.mxu0 0
    %2883 = vmatprep.subr.bf16.mxu0 0
    %2884 = vmatpush1.bf16.msra.mxu0 0
    %2885 = vmatprep.subr.bf16.mxu0 0
    %2886 = vmatpush1.bf16.msra.mxu0 0
    %2887 = vmatprep.subr.bf16.mxu0 0
    %2888 = vmatpush1.bf16.msra.mxu0 0
    %2889 = vmatprep.subr.bf16.mxu0 0
    %2890 = vmatpush1.bf16.msra.mxu0 0
    %2891 = vmatprep.subr.bf16.mxu0 0
    %2892 = vmatpush1.bf16.msra.mxu0 0
    %2893 = vmatprep.subr.bf16.mxu0 0
    %2894 = vmatpush1.bf16.msra.mxu0 0
    %2895 = vmatprep.subr.bf16.mxu0 0
    %2896 = vmatpush1.bf16.msra.mxu0 0
    %2897 = vmatprep.subr.bf16.mxu0 0
    %2898 = vmatpush1.bf16.msra.mxu0 0
    %2899 = vmatprep.subr.bf16.mxu0 0
    %2900 = vmatpush1.bf16.msra.mxu0 0
    %2901 = vmatprep.mubr.bf16.mxu0 0
    %2902 = vmatmul.mubr.bf16.gmra.mrb[0].mxu0 %v2867
    %v2903 = vpop.f32.mrb[0].mxu0
    %v2904 = vadd.f32 %v2852, %v2903
    %v2905 = vpop.f32.mrb[0].mxu0
    %v2906 = vpop.f32.mrb[0].mxu0
    %v2907 = vadd.f32 %v2853, %v2906
    %v2908 = vpop.f32.mrb[0].mxu0
    %2909 = vdwg.mxu0
    %2910 = vst [vmem:[#allocation3] sm:$0xff] %v2904
    %2911 = vst [vmem:[#allocation3 + $0x8] sm:$0xff] %v2907
    %v2912 = vld [vmem:[#allocation3] sm:$0xff]
    %v2913 = vld [vmem:[#allocation3 + $0x8] sm:$0xff]
    %v2914 = vmul.f32 %v2912, 0.5
    %v2915 = vmul.f32 %v2913, 0.5
    %v2916 = vtanh.pop %v2914
    %v2917 = vtanh.pop %v2915
    %v2918 = vmul.f32 %v2916, 0.5
    %v2919 = vmul.f32 %v2917, 0.5
    %v2920 = vadd.f32 %v2918, 0.5
    %v2921 = vadd.f32 %v2919, 0.5
    %v2922 = vtanh.pop %v2912
    %v2923 = vtanh.pop %v2913
    %v2924 = vld [vmem:[#allocation5] sm:$0xff]
    %v2925 = vld [vmem:[#allocation5 + $0x8] sm:$0xff]
    %2928 = vrot.lane.b32.xlu0 %v2924, 32
    %v2929 = vpop.permute.xlu0 %2928
    %2930 = vrot.lane.b32.xlu0 %v2925, 32
    %v2931 = vpop.permute.xlu0 %2930
    %v2934 = vmul.f32 %v2920, %v2929
    %v2935 = vmul.f32 %v2921, %v2931
    %2938 = vrot.lane.b32.xlu0 %v2922, 64
    %v2939 = vpop.permute.xlu0 %2938
    %2940 = vrot.lane.b32.xlu0 %v2923, 64
    %v2941 = vpop.permute.xlu0 %2940
    %v2944 = vmul.f32 %v2920, %v2939
    %v2945 = vmul.f32 %v2921, %v2941
    %2948 = vrot.lane.b32.xlu0 %v2944, 32
    %v2949 = vpop.permute.xlu0 %2948
    %2950 = vrot.lane.b32.xlu0 %v2945, 32
    %v2951 = vpop.permute.xlu0 %2950
    %v2954 = vadd.f32 %v2934, %v2949
    %v2955 = vadd.f32 %v2935, %v2951
    %2958 = vrot.lane.b32.xlu0 %v2954, 96
    %v2959 = vpop.permute.xlu0 %2958
    %2960 = vrot.lane.b32.xlu0 %v2955, 96
    %v2961 = vpop.permute.xlu0 %2960
    %2964 = vst.msk [vmem:[#allocation5] sm:$0xff] %vm102, %v2959
    %2965 = vst.msk [vmem:[#allocation5 + $0x8] sm:$0xff] %vm102, %v2961
    %v2966 = vld [vmem:[#allocation3] sm:$0xff]
    %v2967 = vld [vmem:[#allocation3 + $0x8] sm:$0xff]
    %v2968 = vmul.f32 %v2966, 0.5
    %v2969 = vmul.f32 %v2967, 0.5
    %v2970 = vtanh.pop %v2968
    %v2971 = vtanh.pop %v2969
    %v2972 = vmul.f32 %v2970, 0.5
    %v2973 = vmul.f32 %v2971, 0.5
    %v2974 = vadd.f32 %v2972, 0.5
    %v2975 = vadd.f32 %v2973, 0.5
    %v2976 = vtanh.pop %v2954
    %v2977 = vtanh.pop %v2955
    %2980 = vrot.lane.b32.xlu0 %v2976, 64
    %v2981 = vpop.permute.xlu0 %2980
    %2982 = vrot.lane.b32.xlu0 %v2977, 64
    %v2983 = vpop.permute.xlu0 %2982
    %v2986 = vmul.f32 %v2974, %v2981
    %v2987 = vmul.f32 %v2975, %v2983
    %2990 = vrot.lane.b32.xlu0 %v2986, 32
    %v2991 = vpop.permute.xlu0 %2990
    %2992 = vrot.lane.b32.xlu0 %v2987, 32
    %v2993 = vpop.permute.xlu0 %2992
    %2996 = vst.msk [vmem:[#allocation4] sm:$0xff] %vm102, %v2991
    %2997 = vst.msk [vmem:[#allocation4 + $0x8] sm:$0xff] %vm102, %v2993
    %v2998 = vld [vmem:[#allocation4] sm:$0xff]
    %v2999 = vld [vmem:[#allocation4 + $0x8] sm:$0xff]
    %v3000 = vpack.c.bf16 %v2999, %v2998
    %v3001 = vld [vmem:[#allocation15] sm:$0xf]
    %v3002 = vld [vmem:[#allocation15 + $0x4] sm:$0xf]
    %v3003 = vld [vmem:[#allocation15 + $0x8] sm:$0xf]
    %v3004 = vld [vmem:[#allocation15 + $0xc] sm:$0xf]
    %v3005 = vld [vmem:[%s8] sm:$0x1]
    %v3007 = vlaneseq
    %v3008 = vshrl.u32 %v3007, 7
    %v3009 = vsub.s32 0, %v3008
    %v3010 = vrot.slane %v3005, %v3009
    %v3016 = vunpack.c.l.b16 %v3001
    %v3017 = vunpack.c.l.b16 %v3002
    %v3018 = vunpack.c.l.b16 %v3003
    %v3019 = vunpack.c.l.b16 %v3004
    %v3020 = vpack.c.b16 %v3017, %v3016
    %v3021 = vpack.c.b16 %v3019, %v3018
    %v3025 = vsel %vm102, %v3000, 0
    %3027 = vmatprep.subr.bf16.mxu0 0
    %3028 = vmatpush1.bf16.msra.mxu0 %v3020
    %3029 = vmatprep.subr.bf16.mxu0 0
    %3030 = vmatpush1.bf16.msra.mxu0 %v3021
    %3031 = vmatprep.subr.bf16.mxu0 0
    %3032 = vmatpush1.bf16.msra.mxu0 0
    %3033 = vmatprep.subr.bf16.mxu0 0
    %3034 = vmatpush1.bf16.msra.mxu0 0
    %3035 = vmatprep.subr.bf16.mxu0 0
    %3036 = vmatpush1.bf16.msra.mxu0 0
    %3037 = vmatprep.subr.bf16.mxu0 0
    %3038 = vmatpush1.bf16.msra.mxu0 0
    %3039 = vmatprep.subr.bf16.mxu0 0
    %3040 = vmatpush1.bf16.msra.mxu0 0
    %3041 = vmatprep.subr.bf16.mxu0 0
    %3042 = vmatpush1.bf16.msra.mxu0 0
    %3043 = vmatprep.subr.bf16.mxu0 0
    %3044 = vmatpush1.bf16.msra.mxu0 0
    %3045 = vmatprep.subr.bf16.mxu0 0
    %3046 = vmatpush1.bf16.msra.mxu0 0
    %3047 = vmatprep.subr.bf16.mxu0 0
    %3048 = vmatpush1.bf16.msra.mxu0 0
    %3049 = vmatprep.subr.bf16.mxu0 0
    %3050 = vmatpush1.bf16.msra.mxu0 0
    %3051 = vmatprep.subr.bf16.mxu0 0
    %3052 = vmatpush1.bf16.msra.mxu0 0
    %3053 = vmatprep.subr.bf16.mxu0 0
    %3054 = vmatpush1.bf16.msra.mxu0 0
    %3055 = vmatprep.subr.bf16.mxu0 0
    %3056 = vmatpush1.bf16.msra.mxu0 0
    %3057 = vmatprep.subr.bf16.mxu0 0
    %3058 = vmatpush1.bf16.msra.mxu0 0
    %3059 = vmatprep.mubr.bf16.mxu0 0
    %3060 = vmatmul.mubr.bf16.gmra.mrb[0].mxu0 %v3025
    %v3061 = vpop.f32.mrb[0].mxu0
    %v3062 = vadd.f32 %v3010, %v3061
    %v3063 = vpop.f32.mrb[0].mxu0
    %v3064 = vpop.f32.mrb[0].mxu0
    %v3065 = vadd.f32 %v3010, %v3064
    %v3066 = vpop.f32.mrb[0].mxu0
    %3067 = vdwg.mxu0
    %3068 = vst [vmem:[#allocation16] sm:$0xff] %v3062
    %3069 = vst [vmem:[#allocation16 + $0x8] sm:$0xff] %v3065
    // Predicated region
    $region58: #{tpu_custom_call.1} parent=1 // pred_check
      _
    $region59: #{tpu_custom_call.1} parent=1 // pred_check_branch
      %3071 = sbr.rel (0) target = $region61
    $region60: #{tpu_custom_call.1} parent=1 // pred_region
      %s3073 = ssub.s32 256, 256
      %3074 = vsyncadd [#allocation9], %s3073
      %s3075 = sshll.u32 [#allocation16], 4
      %s3076 = int_to_ptr.vmem [resolvable:$true] %s3075
      %3081 = dma.vmem_to_hbm [thread:$0]  %s3076, 256, %s9, [#allocation9], 128, 128, 8
    $region61: #{tpu_custom_call.1} parent=1 // pred_fallthru
      _
    // Predicated region
    $region62: #{tpu_custom_call.1} parent=1 // pred_check
      _
    $region63: #{tpu_custom_call.1} parent=1 // pred_check_branch
      %3083 = sbr.rel (0) target = $region65
    $region64: #{tpu_custom_call.1} parent=1 // pred_region
      %3084 = dma.done [#allocation9], 256
    $region65: #{tpu_custom_call.1} parent=1 // pred_fallthru
      _
    %3085 = vsyncpa [#allocation8], 1
    %3086 = vsyncpa [#allocation11], 1
    %3087 = vsyncpa [#allocation14], 1
    %3088 = vsyncpa [#allocation9], 1

</llo_original>
